<compile_context>
chip_gen: v7x
topology: tpu7x:2x2x1
jax: 0.10.0
libtpu: 0.0.40
codegen_flags: <defaults>
</compile_context>

<pallas_src>
import functools

import jax
import jax.numpy as jnp
from jax.experimental import pallas as pl
from jax.experimental.pallas import tpu as pltpu


def _round_up(v, m):
    return ((v + m - 1) // m) * m


def _tensorcores_per_chip():
    """2 TensorCores on v7x, 1 on v5e/v6e (best-effort detection)."""
    try:
        kind = (getattr(jax.devices()[0], "device_kind", "") or "").lower()
        if "v7" in kind:
            return 2
    except Exception:
        pass
    return 1


def _default_batch_tile(batch, cap=1024):
    """Whole padded batch per step on 1-TC chips; split in 2 on v7x; cap for huge B."""
    n_cores = _tensorcores_per_chip()
    bp = _round_up(max(batch, 8), 8)
    tb = _round_up((bp + n_cores - 1) // n_cores, 8)
    return min(tb, cap)


def activation_lists(layers):
    n = len(layers)
    # encoder: [Linear, LeakyReLU, Dropout]*(n-1) + [Linear]   (tail stripped)
    enc_acts = ["leaky"] * (n - 1) + ["none"]
    # decoder: [Linear, ReLU, Dropout]*(n-1) + [Linear]
    dec_acts = ["relu"] * (n - 1) + ["none"]
    trans_acts = ["relu", "none"]
    return enc_acts, dec_acts, trans_acts


# ----------------------------------------------------------------------------
# Weight/bias packing: one zero-padded slab per kind
# ----------------------------------------------------------------------------
def pack_params(params, maxd, matmul_dtype):
    """Stack every Linear's (w, b) into (L, maxd, maxd) / (L, 1, maxd), zero-padded."""
    wb = []
    for blk in params["blocks"]:
        wb += list(blk["enc"]) + list(blk["dec"])
    wb += list(params["trans"])
    L = len(wb)
    w_slab = jnp.zeros((L, maxd, maxd), matmul_dtype)
    b_slab = jnp.zeros((L, 1, maxd), jnp.float32)
    for l, (w, b) in enumerate(wb):
        fi, fo = w.shape
        w_slab = w_slab.at[l, :fi, :fo].set(w.astype(matmul_dtype))
        b_slab = b_slab.at[l, 0, :fo].set(b.reshape(-1).astype(jnp.float32))
    return w_slab, b_slab, L


# ----------------------------------------------------------------------------
# Fused forward kernel: all blocks + transition in one pallas_call
# ----------------------------------------------------------------------------
def make_fused_kernel(n_blocks, enc_acts, dec_acts, trans_acts,
                      input_dim, latent_dim, maxd, pad_width, matmul_dtype):
    total_latent = n_blocks * latent_dim

    def kernel(x_ref, w_ref, b_ref, out_ref):
        def layer(h, l, act):
            # weights/bias already in their compute dtypes (slab is pre-cast)
            h = jnp.dot(h.astype(matmul_dtype), w_ref[l],
                        preferred_element_type=jnp.float32) + b_ref[l]
            if act == "relu":
                h = jnp.maximum(h, 0.0)
            elif act == "leaky":
                h = jnp.maximum(h, 0.01 * h)   # LeakyReLU (slope 0.01), mul+max form
            return h

        tb = out_ref.shape[0]
        s = x_ref[...]
        if s.dtype != jnp.float32:
            s = s.astype(jnp.float32)

        x_out = None
        latents = []
        l = 0
        for blk in range(n_blocks):
            if blk > 0:
                s = s + x_out              # x_in(k) = x_in(k-1) + x_out(k-1)
            h = s
            for act in enc_acts:           # encoder MLP
                h = layer(h, l, act)
                l += 1
            latents.append(h if latent_dim == maxd else h[:, :latent_dim])
            for act in dec_acts:           # decoder MLP
                h = layer(h, l, act)
                l += 1
            x_out = h

        t = s + x_out                      # transition on (x_in + x_out)
        for act in trans_acts:
            t = layer(t, l, act)
            l += 1

        # Assemble the whole (tb, pad_width) packed row in registers and issue ONE
        # full-width unmasked store:  [transition | latent_0..latent_{n-1} | zeros].
        pieces = [t if input_dim == maxd else t[:, :input_dim]] + latents
        pieces = [p.astype(out_ref.dtype) for p in pieces]
        pad = pad_width - (input_dim + total_latent)
        if pad > 0:
            pieces.append(jnp.zeros((tb, pad), out_ref.dtype))
        out_ref[...] = jnp.concatenate(pieces, axis=-1)

    return kernel


# ----------------------------------------------------------------------------
# pallas_call wrappers (whole forward in one launch)
# ----------------------------------------------------------------------------
def residual_ae_forward_packed(x, params, layers, *, tb=None,
                               matmul_dtype=jnp.bfloat16):
    """Returns the packed (Bp, pad_width) slab:
       lanes [0:D) = transition output, [D:D+n_blocks*latent) = latents, rest zero."""
    enc_acts, dec_acts, trans_acts = activation_lists(layers)
    n_blocks = len(params["blocks"])
    B, D = x.shape
    latent_dim = layers[-1]
    total_latent = n_blocks * latent_dim
    pad_width = _round_up(D + total_latent, 128)     # lane-dense packed output
    maxd = max([D] + list(layers))                   # uniform padded feature width

    if tb is None:
        tb = _default_batch_tile(B)
    Bp = _round_up(max(B, tb), tb)

    x_p = x
    if Bp != B or maxd != D:
        x_p = jnp.pad(x, ((0, Bp - B), (0, maxd - D)))

    w_slab, b_slab, L = pack_params(params, maxd, matmul_dtype)

    kernel = make_fused_kernel(n_blocks, tuple(enc_acts), tuple(dec_acts),
                               tuple(trans_acts), D, latent_dim, maxd,
                               pad_width, matmul_dtype)

    # Advisory cost: tiny kernel, let XLA schedule it tightly.
    enc_dims = [D] + list(layers)
    dec_dims = list(reversed(layers)) + [D]
    macs = n_blocks * (sum(a * b for a, b in zip(enc_dims[:-1], enc_dims[1:]))
                       + sum(a * b for a, b in zip(dec_dims[:-1], dec_dims[1:]))) \
        + 2 * D * D
    itemsize = jnp.dtype(x.dtype).itemsize
    bytes_accessed = (Bp * maxd + Bp * pad_width) * itemsize \
        + w_slab.size * jnp.dtype(matmul_dtype).itemsize + b_slab.size * 4

    packed = pl.pallas_call(
        kernel,
        out_shape=jax.ShapeDtypeStruct((Bp, pad_width), x.dtype),
        grid=(Bp // tb,),
        in_specs=[
            pl.BlockSpec((tb, maxd), lambda i: (i, 0)),          # x tile
            pl.BlockSpec((L, maxd, maxd), lambda i: (0, 0, 0)),  # weight slab (resident)
            pl.BlockSpec((L, 1, maxd), lambda i: (0, 0, 0)),     # bias slab   (resident)
        ],
        out_specs=pl.BlockSpec((tb, pad_width), lambda i: (i, 0)),
        compiler_params=pltpu.CompilerParams(
            dimension_semantics=("parallel",),
            vmem_limit_bytes=16 * 1024 * 1024),
        cost_estimate=pl.CostEstimate(flops=2 * Bp * macs,
                                      transcendentals=0,
                                      bytes_accessed=int(bytes_accessed)),
    )(x_p, w_slab, b_slab)
    return packed, D, total_latent, B


def residual_ae_forward(x, params, layers, *, tb=None, matmul_dtype=jnp.bfloat16):
    """Convenience wrapper returning (transition_out, latents).  For production,
    prefer residual_ae_forward_packed and consume the slab directly (avoids the
    extra HBM slice copies)."""
    packed, D, total_latent, B = residual_ae_forward_packed(
        x, params, layers, tb=tb, matmul_dtype=matmul_dtype)
    if packed.shape[0] != B:
        packed = packed[:B]
    return packed[:, :D], packed[:, D:D + total_latent]


# ----------------------------------------------------------------------------
# Parameter construction (deterministic, PyTorch-Linear-style uniform init)
# ----------------------------------------------------------------------------
def init_linear(key, fan_in, fan_out):
    kw, kb = jax.random.split(key)
    bound = 1.0 / float(fan_in) ** 0.5
    w = jax.random.uniform(kw, (fan_in, fan_out), jnp.float32, -bound, bound)
    b = jax.random.uniform(kb, (1, fan_out), jnp.float32, -bound, bound)
    return w, b


def init_residual_ae(key, layers, n_blocks, input_dim):
    enc_dims = [input_dim] + list(layers)
    dec_dims = list(reversed(layers)) + [input_dim]

    params = {"blocks": [], "trans": []}
    for _ in range(n_blocks):
        enc, dec = [], []
        for i in range(len(enc_dims) - 1):
            key, sub = jax.random.split(key)
            enc.append(init_linear(sub, enc_dims[i], enc_dims[i + 1]))
        for i in range(len(dec_dims) - 1):
            key, sub = jax.random.split(key)
            dec.append(init_linear(sub, dec_dims[i], dec_dims[i + 1]))
        params["blocks"].append({"enc": enc, "dec": dec})
    for _ in range(2):  # transition: Linear -> ReLU -> Linear
        key, sub = jax.random.split(key)
        params["trans"].append(init_linear(sub, input_dim, input_dim))
    return params


# ----------------------------------------------------------------------------
# Pure-JAX reference (for correctness check)
# ----------------------------------------------------------------------------
def _ref_mlp(h, wbs, acts, matmul_dtype):
    for (w, b), act in zip(wbs, acts):
        h = jnp.dot(h.astype(matmul_dtype), w.astype(matmul_dtype),
                    preferred_element_type=jnp.float32) + b
        if act == "relu":
            h = jnp.maximum(h, 0.0)
        elif act == "leaky":
            h = jnp.maximum(h, 0.01 * h)
    return h


def residual_ae_reference(x, params, layers, matmul_dtype=jnp.float32):
    enc_acts, dec_acts, trans_acts = activation_lists(layers)
    x_in = x
    x_out = jnp.zeros_like(x)
    latents = []
    for blk in params["blocks"]:
        x_in = x_in + x_out
        latent = _ref_mlp(x_in, blk["enc"], enc_acts, matmul_dtype)
        x_out = _ref_mlp(latent, blk["dec"], dec_acts, matmul_dtype)
        latents.append(latent)
    latents = jnp.concatenate(latents, axis=-1)
    out = _ref_mlp(x_in + x_out, params["trans"], trans_acts, matmul_dtype)
    return out, latents


# ----------------------------------------------------------------------------
if __name__ == "__main__":
    # Config consistent with the module: layers=[24,16], n_blocks=3, input_dim=32.
    # batch=256: one grid step on v5e/v6e (single TC), two parallel 128-row tiles on v7x.
    layers = [24, 16]
    n_blocks = 3
    input_dim = 32
    batch = 256

    key = jax.random.PRNGKey(0)
    key, pkey, xkey = jax.random.split(key, 3)
    params = init_residual_ae(pkey, layers, n_blocks, input_dim)
    x = jax.random.normal(xkey, (batch, input_dim), jnp.float32)

    # ---- strict-correctness config: f32 MXU inputs ----
    fwd_f32 = jax.jit(functools.partial(residual_ae_forward, params=params,
                                        layers=layers, matmul_dtype=jnp.float32))
    out32, lat32 = jax.block_until_ready(fwd_f32(x))
    ref_out, ref_lat = residual_ae_reference(x, params, layers, jnp.float32)
    assert out32.shape == (batch, input_dim)
    assert lat32.shape == (batch, layers[-1] * n_blocks)
    assert jnp.allclose(out32, ref_out, atol=1e-5, rtol=1e-5)
    assert jnp.allclose(lat32, ref_lat, atol=1e-5, rtol=1e-5)

    # ---- default perf config: bf16 MXU inputs, f32 accumulation ----
    fwd_bf16 = jax.jit(functools.partial(residual_ae_forward, params=params,
                                         layers=layers))
    out_b, lat_b = jax.block_until_ready(fwd_bf16(x))
    ref_out_b, ref_lat_b = residual_ae_reference(x, params, layers, jnp.bfloat16)
    # tight vs a bf16-input reference, loose sanity vs the pure-f32 reference
    assert jnp.allclose(out_b, ref_out_b, atol=2e-3, rtol=2e-3)
    assert jnp.allclose(lat_b, ref_lat_b, atol=2e-3, rtol=2e-3)
    assert jnp.allclose(out_b, ref_out, atol=1e-1, rtol=1e-1)

    print("KERNEL_OK")
</pallas_src>

<mosaic_0001>
module attributes {stable_mosaic.version = 11 : i64} {
  func.func @kernel(%arg0: i32, %arg1: memref<256x32xf32, #tpu.memory_space<vmem>>, %arg2: memref<14x32x32xf32, #tpu.memory_space<vmem>>, %arg3: memref<14x1x32xf32, #tpu.memory_space<vmem>>, %arg4: memref<256x128xf32, #tpu.memory_space<vmem>>) attributes {dimension_semantics = [#tpu.dimension_semantics<parallel>], iteration_bounds = array<i64: 1>, scalar_prefetch = 0 : i64, scratch_operands = 0 : i64, tpu.core_type = #tpu.core_type<tc>, window_params = [{transform_indices = @transform_0, window_bounds = array<i64: 256, 32>}, {pipeline_mode = #tpu.pipeline_mode<synchronous>, transform_indices = @transform_1, window_bounds = array<i64: 14, 32, 32>}, {pipeline_mode = #tpu.pipeline_mode<synchronous>, transform_indices = @transform_2, window_bounds = array<i64: 14, 1, 32>}, {transform_indices = @transform_3, window_bounds = array<i64: 256, 128>}]} {
    %c0 = arith.constant 0 : index
    %c0_0 = arith.constant 0 : index
    %0 = vector.load %arg1[%c0, %c0_0] : memref<256x32xf32, #tpu.memory_space<vmem>>, vector<256x32xf32>
    %c0_1 = arith.constant 0 : index
    %c0_2 = arith.constant 0 : index
    %c0_3 = arith.constant 0 : index
    %1 = vector.load %arg2[%c0_1, %c0_2, %c0_3] : memref<14x32x32xf32, #tpu.memory_space<vmem>>, vector<1x32x32xf32>
    %2 = vector.shape_cast %1 : vector<1x32x32xf32> to vector<32x32xf32>
    %cst = arith.constant dense<0.000000e+00> : vector<256x32xf32>
    %3 = tpu.matmul %0, %2, %cst {dimension_numbers = #tpu.dot_dimension_numbers<[1], [0], [0], [1], [0, 0, 1, 1], [], []>} : vector<256x32xf32>, vector<32x32xf32>, vector<256x32xf32> -> vector<256x32xf32>
    %c0_4 = arith.constant 0 : index
    %c0_5 = arith.constant 0 : index
    %c0_6 = arith.constant 0 : index
    %4 = vector.load %arg3[%c0_4, %c0_5, %c0_6] : memref<14x1x32xf32, #tpu.memory_space<vmem>>, vector<1x1x32xf32>
    %5 = vector.shape_cast %4 : vector<1x1x32xf32> to vector<1x32xf32>
    %6 = vector.broadcast %5 : vector<1x32xf32> to vector<256x32xf32>
    %7 = arith.addf %3, %6 : vector<256x32xf32>
    %cst_7 = arith.constant 0.00999999977 : f32
    %8 = vector.broadcast %cst_7 : f32 to vector<256x32xf32>
    %9 = arith.mulf %8, %7 : vector<256x32xf32>
    %10 = arith.maximumf %7, %9 : vector<256x32xf32>
    %c1 = arith.constant 1 : index
    %c0_8 = arith.constant 0 : index
    %c0_9 = arith.constant 0 : index
    %11 = vector.load %arg2[%c1, %c0_8, %c0_9] : memref<14x32x32xf32, #tpu.memory_space<vmem>>, vector<1x32x32xf32>
    %12 = vector.shape_cast %11 : vector<1x32x32xf32> to vector<32x32xf32>
    %cst_10 = arith.constant dense<0.000000e+00> : vector<256x32xf32>
    %13 = tpu.matmul %10, %12, %cst_10 {dimension_numbers = #tpu.dot_dimension_numbers<[1], [0], [0], [1], [0, 0, 1, 1], [], []>} : vector<256x32xf32>, vector<32x32xf32>, vector<256x32xf32> -> vector<256x32xf32>
    %c1_11 = arith.constant 1 : index
    %c0_12 = arith.constant 0 : index
    %c0_13 = arith.constant 0 : index
    %14 = vector.load %arg3[%c1_11, %c0_12, %c0_13] : memref<14x1x32xf32, #tpu.memory_space<vmem>>, vector<1x1x32xf32>
    %15 = vector.shape_cast %14 : vector<1x1x32xf32> to vector<1x32xf32>
    %16 = vector.broadcast %15 : vector<1x32xf32> to vector<256x32xf32>
    %17 = arith.addf %13, %16 : vector<256x32xf32>
    %18 = vector.extract_strided_slice %17 {offsets = [0, 0], sizes = [256, 16], strides = [1, 1]} : vector<256x32xf32> to vector<256x16xf32>
    %c2 = arith.constant 2 : index
    %c0_14 = arith.constant 0 : index
    %c0_15 = arith.constant 0 : index
    %19 = vector.load %arg2[%c2, %c0_14, %c0_15] : memref<14x32x32xf32, #tpu.memory_space<vmem>>, vector<1x32x32xf32>
    %20 = vector.shape_cast %19 : vector<1x32x32xf32> to vector<32x32xf32>
    %cst_16 = arith.constant dense<0.000000e+00> : vector<256x32xf32>
    %21 = tpu.matmul %17, %20, %cst_16 {dimension_numbers = #tpu.dot_dimension_numbers<[1], [0], [0], [1], [0, 0, 1, 1], [], []>} : vector<256x32xf32>, vector<32x32xf32>, vector<256x32xf32> -> vector<256x32xf32>
    %c2_17 = arith.constant 2 : index
    %c0_18 = arith.constant 0 : index
    %c0_19 = arith.constant 0 : index
    %22 = vector.load %arg3[%c2_17, %c0_18, %c0_19] : memref<14x1x32xf32, #tpu.memory_space<vmem>>, vector<1x1x32xf32>
    %23 = vector.shape_cast %22 : vector<1x1x32xf32> to vector<1x32xf32>
    %24 = vector.broadcast %23 : vector<1x32xf32> to vector<256x32xf32>
    %25 = arith.addf %21, %24 : vector<256x32xf32>
    %cst_20 = arith.constant 0.000000e+00 : f32
    %26 = vector.broadcast %cst_20 : f32 to vector<256x32xf32>
    %27 = arith.maximumf %25, %26 : vector<256x32xf32>
    %c3 = arith.constant 3 : index
    %c0_21 = arith.constant 0 : index
    %c0_22 = arith.constant 0 : index
    %28 = vector.load %arg2[%c3, %c0_21, %c0_22] : memref<14x32x32xf32, #tpu.memory_space<vmem>>, vector<1x32x32xf32>
    %29 = vector.shape_cast %28 : vector<1x32x32xf32> to vector<32x32xf32>
    %cst_23 = arith.constant dense<0.000000e+00> : vector<256x32xf32>
    %30 = tpu.matmul %27, %29, %cst_23 {dimension_numbers = #tpu.dot_dimension_numbers<[1], [0], [0], [1], [0, 0, 1, 1], [], []>} : vector<256x32xf32>, vector<32x32xf32>, vector<256x32xf32> -> vector<256x32xf32>
    %c3_24 = arith.constant 3 : index
    %c0_25 = arith.constant 0 : index
    %c0_26 = arith.constant 0 : index
    %31 = vector.load %arg3[%c3_24, %c0_25, %c0_26] : memref<14x1x32xf32, #tpu.memory_space<vmem>>, vector<1x1x32xf32>
    %32 = vector.shape_cast %31 : vector<1x1x32xf32> to vector<1x32xf32>
    %33 = vector.broadcast %32 : vector<1x32xf32> to vector<256x32xf32>
    %34 = arith.addf %30, %33 : vector<256x32xf32>
    %35 = arith.addf %0, %34 : vector<256x32xf32>
    %c4 = arith.constant 4 : index
    %c0_27 = arith.constant 0 : index
    %c0_28 = arith.constant 0 : index
    %36 = vector.load %arg2[%c4, %c0_27, %c0_28] : memref<14x32x32xf32, #tpu.memory_space<vmem>>, vector<1x32x32xf32>
    %37 = vector.shape_cast %36 : vector<1x32x32xf32> to vector<32x32xf32>
    %cst_29 = arith.constant dense<0.000000e+00> : vector<256x32xf32>
    %38 = tpu.matmul %35, %37, %cst_29 {dimension_numbers = #tpu.dot_dimension_numbers<[1], [0], [0], [1], [0, 0, 1, 1], [], []>} : vector<256x32xf32>, vector<32x32xf32>, vector<256x32xf32> -> vector<256x32xf32>
    %c4_30 = arith.constant 4 : index
    %c0_31 = arith.constant 0 : index
    %c0_32 = arith.constant 0 : index
    %39 = vector.load %arg3[%c4_30, %c0_31, %c0_32] : memref<14x1x32xf32, #tpu.memory_space<vmem>>, vector<1x1x32xf32>
    %40 = vector.shape_cast %39 : vector<1x1x32xf32> to vector<1x32xf32>
    %41 = vector.broadcast %40 : vector<1x32xf32> to vector<256x32xf32>
    %42 = arith.addf %38, %41 : vector<256x32xf32>
    %cst_33 = arith.constant 0.00999999977 : f32
    %43 = vector.broadcast %cst_33 : f32 to vector<256x32xf32>
    %44 = arith.mulf %43, %42 : vector<256x32xf32>
    %45 = arith.maximumf %42, %44 : vector<256x32xf32>
    %c5 = arith.constant 5 : index
    %c0_34 = arith.constant 0 : index
    %c0_35 = arith.constant 0 : index
    %46 = vector.load %arg2[%c5, %c0_34, %c0_35] : memref<14x32x32xf32, #tpu.memory_space<vmem>>, vector<1x32x32xf32>
    %47 = vector.shape_cast %46 : vector<1x32x32xf32> to vector<32x32xf32>
    %cst_36 = arith.constant dense<0.000000e+00> : vector<256x32xf32>
    %48 = tpu.matmul %45, %47, %cst_36 {dimension_numbers = #tpu.dot_dimension_numbers<[1], [0], [0], [1], [0, 0, 1, 1], [], []>} : vector<256x32xf32>, vector<32x32xf32>, vector<256x32xf32> -> vector<256x32xf32>
    %c5_37 = arith.constant 5 : index
    %c0_38 = arith.constant 0 : index
    %c0_39 = arith.constant 0 : index
    %49 = vector.load %arg3[%c5_37, %c0_38, %c0_39] : memref<14x1x32xf32, #tpu.memory_space<vmem>>, vector<1x1x32xf32>
    %50 = vector.shape_cast %49 : vector<1x1x32xf32> to vector<1x32xf32>
    %51 = vector.broadcast %50 : vector<1x32xf32> to vector<256x32xf32>
    %52 = arith.addf %48, %51 : vector<256x32xf32>
    %53 = vector.extract_strided_slice %52 {offsets = [0, 0], sizes = [256, 16], strides = [1, 1]} : vector<256x32xf32> to vector<256x16xf32>
    %c6 = arith.constant 6 : index
    %c0_40 = arith.constant 0 : index
    %c0_41 = arith.constant 0 : index
    %54 = vector.load %arg2[%c6, %c0_40, %c0_41] : memref<14x32x32xf32, #tpu.memory_space<vmem>>, vector<1x32x32xf32>
    %55 = vector.shape_cast %54 : vector<1x32x32xf32> to vector<32x32xf32>
    %cst_42 = arith.constant dense<0.000000e+00> : vector<256x32xf32>
    %56 = tpu.matmul %52, %55, %cst_42 {dimension_numbers = #tpu.dot_dimension_numbers<[1], [0], [0], [1], [0, 0, 1, 1], [], []>} : vector<256x32xf32>, vector<32x32xf32>, vector<256x32xf32> -> vector<256x32xf32>
    %c6_43 = arith.constant 6 : index
    %c0_44 = arith.constant 0 : index
    %c0_45 = arith.constant 0 : index
    %57 = vector.load %arg3[%c6_43, %c0_44, %c0_45] : memref<14x1x32xf32, #tpu.memory_space<vmem>>, vector<1x1x32xf32>
    %58 = vector.shape_cast %57 : vector<1x1x32xf32> to vector<1x32xf32>
    %59 = vector.broadcast %58 : vector<1x32xf32> to vector<256x32xf32>
    %60 = arith.addf %56, %59 : vector<256x32xf32>
    %cst_46 = arith.constant 0.000000e+00 : f32
    %61 = vector.broadcast %cst_46 : f32 to vector<256x32xf32>
    %62 = arith.maximumf %60, %61 : vector<256x32xf32>
    %c7 = arith.constant 7 : index
    %c0_47 = arith.constant 0 : index
    %c0_48 = arith.constant 0 : index
    %63 = vector.load %arg2[%c7, %c0_47, %c0_48] : memref<14x32x32xf32, #tpu.memory_space<vmem>>, vector<1x32x32xf32>
    %64 = vector.shape_cast %63 : vector<1x32x32xf32> to vector<32x32xf32>
    %cst_49 = arith.constant dense<0.000000e+00> : vector<256x32xf32>
    %65 = tpu.matmul %62, %64, %cst_49 {dimension_numbers = #tpu.dot_dimension_numbers<[1], [0], [0], [1], [0, 0, 1, 1], [], []>} : vector<256x32xf32>, vector<32x32xf32>, vector<256x32xf32> -> vector<256x32xf32>
    %c7_50 = arith.constant 7 : index
    %c0_51 = arith.constant 0 : index
    %c0_52 = arith.constant 0 : index
    %66 = vector.load %arg3[%c7_50, %c0_51, %c0_52] : memref<14x1x32xf32, #tpu.memory_space<vmem>>, vector<1x1x32xf32>
    %67 = vector.shape_cast %66 : vector<1x1x32xf32> to vector<1x32xf32>
    %68 = vector.broadcast %67 : vector<1x32xf32> to vector<256x32xf32>
    %69 = arith.addf %65, %68 : vector<256x32xf32>
    %70 = arith.addf %35, %69 : vector<256x32xf32>
    %c8 = arith.constant 8 : index
    %c0_53 = arith.constant 0 : index
    %c0_54 = arith.constant 0 : index
    %71 = vector.load %arg2[%c8, %c0_53, %c0_54] : memref<14x32x32xf32, #tpu.memory_space<vmem>>, vector<1x32x32xf32>
    %72 = vector.shape_cast %71 : vector<1x32x32xf32> to vector<32x32xf32>
    %cst_55 = arith.constant dense<0.000000e+00> : vector<256x32xf32>
    %73 = tpu.matmul %70, %72, %cst_55 {dimension_numbers = #tpu.dot_dimension_numbers<[1], [0], [0], [1], [0, 0, 1, 1], [], []>} : vector<256x32xf32>, vector<32x32xf32>, vector<256x32xf32> -> vector<256x32xf32>
    %c8_56 = arith.constant 8 : index
    %c0_57 = arith.constant 0 : index
    %c0_58 = arith.constant 0 : index
    %74 = vector.load %arg3[%c8_56, %c0_57, %c0_58] : memref<14x1x32xf32, #tpu.memory_space<vmem>>, vector<1x1x32xf32>
    %75 = vector.shape_cast %74 : vector<1x1x32xf32> to vector<1x32xf32>
    %76 = vector.broadcast %75 : vector<1x32xf32> to vector<256x32xf32>
    %77 = arith.addf %73, %76 : vector<256x32xf32>
    %cst_59 = arith.constant 0.00999999977 : f32
    %78 = vector.broadcast %cst_59 : f32 to vector<256x32xf32>
    %79 = arith.mulf %78, %77 : vector<256x32xf32>
    %80 = arith.maximumf %77, %79 : vector<256x32xf32>
    %c9 = arith.constant 9 : index
    %c0_60 = arith.constant 0 : index
    %c0_61 = arith.constant 0 : index
    %81 = vector.load %arg2[%c9, %c0_60, %c0_61] : memref<14x32x32xf32, #tpu.memory_space<vmem>>, vector<1x32x32xf32>
    %82 = vector.shape_cast %81 : vector<1x32x32xf32> to vector<32x32xf32>
    %cst_62 = arith.constant dense<0.000000e+00> : vector<256x32xf32>
    %83 = tpu.matmul %80, %82, %cst_62 {dimension_numbers = #tpu.dot_dimension_numbers<[1], [0], [0], [1], [0, 0, 1, 1], [], []>} : vector<256x32xf32>, vector<32x32xf32>, vector<256x32xf32> -> vector<256x32xf32>
    %c9_63 = arith.constant 9 : index
    %c0_64 = arith.constant 0 : index
    %c0_65 = arith.constant 0 : index
    %84 = vector.load %arg3[%c9_63, %c0_64, %c0_65] : memref<14x1x32xf32, #tpu.memory_space<vmem>>, vector<1x1x32xf32>
    %85 = vector.shape_cast %84 : vector<1x1x32xf32> to vector<1x32xf32>
    %86 = vector.broadcast %85 : vector<1x32xf32> to vector<256x32xf32>
    %87 = arith.addf %83, %86 : vector<256x32xf32>
    %88 = vector.extract_strided_slice %87 {offsets = [0, 0], sizes = [256, 16], strides = [1, 1]} : vector<256x32xf32> to vector<256x16xf32>
    %c10 = arith.constant 10 : index
    %c0_66 = arith.constant 0 : index
    %c0_67 = arith.constant 0 : index
    %89 = vector.load %arg2[%c10, %c0_66, %c0_67] : memref<14x32x32xf32, #tpu.memory_space<vmem>>, vector<1x32x32xf32>
    %90 = vector.shape_cast %89 : vector<1x32x32xf32> to vector<32x32xf32>
    %cst_68 = arith.constant dense<0.000000e+00> : vector<256x32xf32>
    %91 = tpu.matmul %87, %90, %cst_68 {dimension_numbers = #tpu.dot_dimension_numbers<[1], [0], [0], [1], [0, 0, 1, 1], [], []>} : vector<256x32xf32>, vector<32x32xf32>, vector<256x32xf32> -> vector<256x32xf32>
    %c10_69 = arith.constant 10 : index
    %c0_70 = arith.constant 0 : index
    %c0_71 = arith.constant 0 : index
    %92 = vector.load %arg3[%c10_69, %c0_70, %c0_71] : memref<14x1x32xf32, #tpu.memory_space<vmem>>, vector<1x1x32xf32>
    %93 = vector.shape_cast %92 : vector<1x1x32xf32> to vector<1x32xf32>
    %94 = vector.broadcast %93 : vector<1x32xf32> to vector<256x32xf32>
    %95 = arith.addf %91, %94 : vector<256x32xf32>
    %cst_72 = arith.constant 0.000000e+00 : f32
    %96 = vector.broadcast %cst_72 : f32 to vector<256x32xf32>
    %97 = arith.maximumf %95, %96 : vector<256x32xf32>
    %c11 = arith.constant 11 : index
    %c0_73 = arith.constant 0 : index
    %c0_74 = arith.constant 0 : index
    %98 = vector.load %arg2[%c11, %c0_73, %c0_74] : memref<14x32x32xf32, #tpu.memory_space<vmem>>, vector<1x32x32xf32>
    %99 = vector.shape_cast %98 : vector<1x32x32xf32> to vector<32x32xf32>
    %cst_75 = arith.constant dense<0.000000e+00> : vector<256x32xf32>
    %100 = tpu.matmul %97, %99, %cst_75 {dimension_numbers = #tpu.dot_dimension_numbers<[1], [0], [0], [1], [0, 0, 1, 1], [], []>} : vector<256x32xf32>, vector<32x32xf32>, vector<256x32xf32> -> vector<256x32xf32>
    %c11_76 = arith.constant 11 : index
    %c0_77 = arith.constant 0 : index
    %c0_78 = arith.constant 0 : index
    %101 = vector.load %arg3[%c11_76, %c0_77, %c0_78] : memref<14x1x32xf32, #tpu.memory_space<vmem>>, vector<1x1x32xf32>
    %102 = vector.shape_cast %101 : vector<1x1x32xf32> to vector<1x32xf32>
    %103 = vector.broadcast %102 : vector<1x32xf32> to vector<256x32xf32>
    %104 = arith.addf %100, %103 : vector<256x32xf32>
    %105 = arith.addf %70, %104 : vector<256x32xf32>
    %c12 = arith.constant 12 : index
    %c0_79 = arith.constant 0 : index
    %c0_80 = arith.constant 0 : index
    %106 = vector.load %arg2[%c12, %c0_79, %c0_80] : memref<14x32x32xf32, #tpu.memory_space<vmem>>, vector<1x32x32xf32>
    %107 = vector.shape_cast %106 : vector<1x32x32xf32> to vector<32x32xf32>
    %cst_81 = arith.constant dense<0.000000e+00> : vector<256x32xf32>
    %108 = tpu.matmul %105, %107, %cst_81 {dimension_numbers = #tpu.dot_dimension_numbers<[1], [0], [0], [1], [0, 0, 1, 1], [], []>} : vector<256x32xf32>, vector<32x32xf32>, vector<256x32xf32> -> vector<256x32xf32>
    %c12_82 = arith.constant 12 : index
    %c0_83 = arith.constant 0 : index
    %c0_84 = arith.constant 0 : index
    %109 = vector.load %arg3[%c12_82, %c0_83, %c0_84] : memref<14x1x32xf32, #tpu.memory_space<vmem>>, vector<1x1x32xf32>
    %110 = vector.shape_cast %109 : vector<1x1x32xf32> to vector<1x32xf32>
    %111 = vector.broadcast %110 : vector<1x32xf32> to vector<256x32xf32>
    %112 = arith.addf %108, %111 : vector<256x32xf32>
    %cst_85 = arith.constant 0.000000e+00 : f32
    %113 = vector.broadcast %cst_85 : f32 to vector<256x32xf32>
    %114 = arith.maximumf %112, %113 : vector<256x32xf32>
    %c13 = arith.constant 13 : index
    %c0_86 = arith.constant 0 : index
    %c0_87 = arith.constant 0 : index
    %115 = vector.load %arg2[%c13, %c0_86, %c0_87] : memref<14x32x32xf32, #tpu.memory_space<vmem>>, vector<1x32x32xf32>
    %116 = vector.shape_cast %115 : vector<1x32x32xf32> to vector<32x32xf32>
    %cst_88 = arith.constant dense<0.000000e+00> : vector<256x32xf32>
    %117 = tpu.matmul %114, %116, %cst_88 {dimension_numbers = #tpu.dot_dimension_numbers<[1], [0], [0], [1], [0, 0, 1, 1], [], []>} : vector<256x32xf32>, vector<32x32xf32>, vector<256x32xf32> -> vector<256x32xf32>
    %c13_89 = arith.constant 13 : index
    %c0_90 = arith.constant 0 : index
    %c0_91 = arith.constant 0 : index
    %118 = vector.load %arg3[%c13_89, %c0_90, %c0_91] : memref<14x1x32xf32, #tpu.memory_space<vmem>>, vector<1x1x32xf32>
    %119 = vector.shape_cast %118 : vector<1x1x32xf32> to vector<1x32xf32>
    %120 = vector.broadcast %119 : vector<1x32xf32> to vector<256x32xf32>
    %121 = arith.addf %117, %120 : vector<256x32xf32>
    %cst_92 = arith.constant 0.000000e+00 : f32
    %122 = vector.broadcast %cst_92 : f32 to vector<256x48xf32>
    %123 = tpu.concatenate %121, %18, %53, %88, %122 in 1 : vector<256x32xf32>, vector<256x16xf32>, vector<256x16xf32>, vector<256x16xf32>, vector<256x48xf32> -> vector<256x128xf32>
    %c0_93 = arith.constant 0 : index
    %c0_94 = arith.constant 0 : index
    %124 = vector.load %arg4[%c0_93, %c0_94] : memref<256x128xf32, #tpu.memory_space<vmem>>, vector<256x128xf32>
    tpu.vector_store %arg4[%c0_93, %c0_94], %123 {strides = array<i32>} : memref<256x128xf32, #tpu.memory_space<vmem>>, vector<256x128xf32>,
    return
  }
  func.func @transform_0(%arg0: i32) -> (i32, i32) {
    %c0_i32 = arith.constant 0 : i32
    %c0_i32_0 = arith.constant 0 : i32
    return %arg0, %c0_i32 : i32, i32
  }
  func.func @transform_1(%arg0: i32) -> (i32, i32, i32) {
    %c0_i32 = arith.constant 0 : i32
    %c0_i32_0 = arith.constant 0 : i32
    %c0_i32_1 = arith.constant 0 : i32
    %c0_i32_2 = arith.constant 0 : i32
    return %c0_i32, %c0_i32_0, %c0_i32_1 : i32, i32, i32
  }
  func.func @transform_2(%arg0: i32) -> (i32, i32, i32) {
    %c0_i32 = arith.constant 0 : i32
    %c0_i32_0 = arith.constant 0 : i32
    %c0_i32_1 = arith.constant 0 : i32
    %c0_i32_2 = arith.constant 0 : i32
    return %c0_i32, %c0_i32_0, %c0_i32_1 : i32, i32, i32
  }
  func.func @transform_3(%arg0: i32) -> (i32, i32) {
    %c0_i32 = arith.constant 0 : i32
    %c0_i32_0 = arith.constant 0 : i32
    return %arg0, %c0_i32 : i32, i32
  }
}

</mosaic_0001>

<llo_original>
// kernel: residual_ae_forward.1
$region0: #{residual_ae_forward.1}
  #allocation0 [shape = 'u32[]', space=smem, size = 0x4, offset = 0x4, fixed_abs, tag = 'smem constant byte address 0x4 - core index']
  #allocation1 [shape = 'u32[144,128]{1,0:T(1,128)}', space=vmem, size = 0x12000, scoped, tag = 'internal scratch']
  %s0 = inlined_call_operand.vmem [shape: f32[256,32], index: 0, kind: input, shape index: {}]
  %s1 = inlined_call_operand.hbm [shape: f32[14,32,32], index: 1, kind: input, shape index: {}]
  %s2 = inlined_call_operand.vmem [shape: f32[14,1,32], index: 2, kind: input, shape index: {}]
  %s3 = inlined_call_operand.vmem [shape: f32[256,128], index: 3, kind: output, shape index: {}]
  %s4 = sld [smem:[#allocation0]]
  $region26: #{residual_ae_forward.1} parent=0
    _
  %s6 = ssub.s32 1, %s4
  %s7 = scalar_select 0, %s6, %s4
  $region1: #{residual_ae_forward.1} parent=0
    #allocation2 [shape = 'u8[229376]{0}', space=vmem, size = 0x38000, scoped, tag = 'input window, operand 1, single buffered']
    #allocation3 [shape = 's32[1]{0}', space=sflag, size = 0x4, scoped, tag = 'scoped memory for residual_ae_forward.1']
    %8 = vsyncpa [#allocation3], 0
    // Predicated region
    $region2: #{residual_ae_forward.1} parent=1 // pred_check
      _
    $region3: #{residual_ae_forward.1} parent=1 // pred_check_branch
      %10 = sbr.rel (0) target = $region5
    $region4: #{residual_ae_forward.1} parent=1 // pred_region
      _
    $region5: #{residual_ae_forward.1} parent=1 // pred_fallthru
      _
    // Predicated region
    $region6: #{residual_ae_forward.1} parent=1 // pred_check
      _
    $region7: #{residual_ae_forward.1} parent=1 // pred_check_branch
      %12 = sbr.rel (0) target = $region9
    $region8: #{residual_ae_forward.1} parent=1 // pred_region
      %s14 = ssub.s32 7168, 7168
      %15 = vsyncadd [#allocation3], %s14
      %s16 = sshll.u32 [#allocation2], 4
      %s17 = int_to_ptr.vmem [resolvable:$true] %s16
      %22 = dma.hbm_to_vmem [thread:$0]  %s1, 7168, %s17, [#allocation3], 128, 128, 8
    $region9: #{residual_ae_forward.1} parent=1 // pred_fallthru
      _
    // Predicated region
    $region10: #{residual_ae_forward.1} parent=1 // pred_check
      _
    $region11: #{residual_ae_forward.1} parent=1 // pred_check_branch
      %24 = sbr.rel (0) target = $region13
    $region12: #{residual_ae_forward.1} parent=1 // pred_region
      _
    $region13: #{residual_ae_forward.1} parent=1 // pred_fallthru
      _
    // Predicated region
    $region14: #{residual_ae_forward.1} parent=1 // pred_check
      _
    $region15: #{residual_ae_forward.1} parent=1 // pred_check_branch
      %26 = sbr.rel (0) target = $region17
    $region16: #{residual_ae_forward.1} parent=1 // pred_region
      %27 = dma.done [#allocation3], 7168
    $region17: #{residual_ae_forward.1} parent=1 // pred_fallthru
      _
    %v28 = vld [vmem:[%s0] sm:$0xff]
    %v29 = vld [vmem:[%s0 + $0x8] sm:$0xff]
    %v30 = vld [vmem:[%s0 + $0x10] sm:$0xff]
    %v31 = vld [vmem:[%s0 + $0x18] sm:$0xff]
    %v32 = vld [vmem:[%s0 + $0x20] sm:$0xff]
    %v33 = vld [vmem:[%s0 + $0x28] sm:$0xff]
    %v34 = vld [vmem:[%s0 + $0x30] sm:$0xff]
    %v35 = vld [vmem:[%s0 + $0x38] sm:$0xff]
    %v36 = vld [vmem:[%s0 + $0x40] sm:$0xff]
    %v37 = vld [vmem:[%s0 + $0x48] sm:$0xff]
    %v38 = vld [vmem:[%s0 + $0x50] sm:$0xff]
    %v39 = vld [vmem:[%s0 + $0x58] sm:$0xff]
    %v40 = vld [vmem:[%s0 + $0x60] sm:$0xff]
    %v41 = vld [vmem:[%s0 + $0x68] sm:$0xff]
    %v42 = vld [vmem:[%s0 + $0x70] sm:$0xff]
    %v43 = vld [vmem:[%s0 + $0x78] sm:$0xff]
    %v44 = vld [vmem:[%s0 + $0x80] sm:$0xff]
    %v45 = vld [vmem:[%s0 + $0x88] sm:$0xff]
    %v46 = vld [vmem:[%s0 + $0x90] sm:$0xff]
    %v47 = vld [vmem:[%s0 + $0x98] sm:$0xff]
    %v48 = vld [vmem:[%s0 + $0xa0] sm:$0xff]
    %v49 = vld [vmem:[%s0 + $0xa8] sm:$0xff]
    %v50 = vld [vmem:[%s0 + $0xb0] sm:$0xff]
    %v51 = vld [vmem:[%s0 + $0xb8] sm:$0xff]
    %v52 = vld [vmem:[%s0 + $0xc0] sm:$0xff]
    %v53 = vld [vmem:[%s0 + $0xc8] sm:$0xff]
    %v54 = vld [vmem:[%s0 + $0xd0] sm:$0xff]
    %v55 = vld [vmem:[%s0 + $0xd8] sm:$0xff]
    %v56 = vld [vmem:[%s0 + $0xe0] sm:$0xff]
    %v57 = vld [vmem:[%s0 + $0xe8] sm:$0xff]
    %v58 = vld [vmem:[%s0 + $0xf0] sm:$0xff]
    %v59 = vld [vmem:[%s0 + $0xf8] sm:$0xff]
    %v60 = vld [vmem:[#allocation2] sm:$0xff]
    %v61 = vld [vmem:[#allocation2 + $0x8] sm:$0xff]
    %v62 = vld [vmem:[#allocation2 + $0x10] sm:$0xff]
    %v63 = vld [vmem:[#allocation2 + $0x18] sm:$0xff]
    %v64 = vld [vmem:[%s2] sm:$0x1]
    %v66 = vlaneseq
    %v67 = vshrl.u32 %v66, 7
    %v68 = vsub.s32 0, %v67
    %v69 = vrot.slane %v64, %v68
    %vm71 = vcmask 261120
    %v73 = vsel %vm71, %v28, 0
    %v76 = vsel %vm71, %v29, 0
    %v79 = vsel %vm71, %v30, 0
    %v82 = vsel %vm71, %v31, 0
    %v85 = vsel %vm71, %v32, 0
    %v88 = vsel %vm71, %v33, 0
    %v91 = vsel %vm71, %v34, 0
    %v94 = vsel %vm71, %v35, 0
    %v97 = vsel %vm71, %v36, 0
    %v100 = vsel %vm71, %v37, 0
    %v103 = vsel %vm71, %v38, 0
    %v106 = vsel %vm71, %v39, 0
    %v109 = vsel %vm71, %v40, 0
    %v112 = vsel %vm71, %v41, 0
    %v115 = vsel %vm71, %v42, 0
    %v118 = vsel %vm71, %v43, 0
    %v121 = vsel %vm71, %v44, 0
    %v124 = vsel %vm71, %v45, 0
    %v127 = vsel %vm71, %v46, 0
    %v130 = vsel %vm71, %v47, 0
    %v133 = vsel %vm71, %v48, 0
    %v136 = vsel %vm71, %v49, 0
    %v139 = vsel %vm71, %v50, 0
    %v142 = vsel %vm71, %v51, 0
    %v145 = vsel %vm71, %v52, 0
    %v148 = vsel %vm71, %v53, 0
    %v151 = vsel %vm71, %v54, 0
    %v154 = vsel %vm71, %v55, 0
    %v157 = vsel %vm71, %v56, 0
    %v160 = vsel %vm71, %v57, 0
    %v163 = vsel %vm71, %v58, 0
    %v166 = vsel %vm71, %v59, 0
    %168 = vmatprep.subr.mxu0 0.0
    %169 = vmatpush1.msra.mxu0 %v60
    %170 = vmatprep.subr.mxu0 0.0
    %171 = vmatpush1.msra.mxu0 %v61
    %172 = vmatprep.subr.mxu0 0.0
    %173 = vmatpush1.msra.mxu0 %v62
    %174 = vmatprep.subr.mxu0 0.0
    %175 = vmatpush1.msra.mxu0 %v63
    %176 = vmatprep.subr.mxu0 0.0
    %177 = vmatpush1.msra.mxu0 0.0
    %178 = vmatprep.subr.mxu0 0.0
    %179 = vmatpush1.msra.mxu0 0.0
    %180 = vmatprep.subr.mxu0 0.0
    %181 = vmatpush1.msra.mxu0 0.0
    %182 = vmatprep.subr.mxu0 0.0
    %183 = vmatpush1.msra.mxu0 0.0
    %184 = vmatprep.subr.mxu0 0.0
    %185 = vmatpush1.msra.mxu0 0.0
    %186 = vmatprep.subr.mxu0 0.0
    %187 = vmatpush1.msra.mxu0 0.0
    %188 = vmatprep.subr.mxu0 0.0
    %189 = vmatpush1.msra.mxu0 0.0
    %190 = vmatprep.subr.mxu0 0.0
    %191 = vmatpush1.msra.mxu0 0.0
    %192 = vmatprep.subr.mxu0 0.0
    %193 = vmatpush1.msra.mxu0 0.0
    %194 = vmatprep.subr.mxu0 0.0
    %195 = vmatpush1.msra.mxu0 0.0
    %196 = vmatprep.subr.mxu0 0.0
    %197 = vmatpush1.msra.mxu0 0.0
    %198 = vmatprep.subr.mxu0 0.0
    %199 = vmatpush1.msra.mxu0 0.0
    %200 = vmatprep.subr.mxu0 0.0
    %201 = vmatpush1.msra.mxu0 0.0
    %202 = vmatprep.subr.mxu0 0.0
    %203 = vmatpush1.msra.mxu0 0.0
    %204 = vmatprep.subr.mxu0 0.0
    %205 = vmatpush1.msra.mxu0 0.0
    %206 = vmatprep.subr.mxu0 0.0
    %207 = vmatpush1.msra.mxu0 0.0
    %208 = vmatprep.subr.mxu0 0.0
    %209 = vmatpush1.msra.mxu0 0.0
    %210 = vmatprep.subr.mxu0 0.0
    %211 = vmatpush1.msra.mxu0 0.0
    %212 = vmatprep.subr.mxu0 0.0
    %213 = vmatpush1.msra.mxu0 0.0
    %214 = vmatprep.subr.mxu0 0.0
    %215 = vmatpush1.msra.mxu0 0.0
    %216 = vmatprep.subr.mxu0 0.0
    %217 = vmatpush1.msra.mxu0 0.0
    %218 = vmatprep.subr.mxu0 0.0
    %219 = vmatpush1.msra.mxu0 0.0
    %220 = vmatprep.subr.mxu0 0.0
    %221 = vmatpush1.msra.mxu0 0.0
    %222 = vmatprep.subr.mxu0 0.0
    %223 = vmatpush1.msra.mxu0 0.0
    %224 = vmatprep.subr.mxu0 0.0
    %225 = vmatpush1.msra.mxu0 0.0
    %226 = vmatprep.subr.mxu0 0.0
    %227 = vmatpush1.msra.mxu0 0.0
    %228 = vmatprep.subr.mxu0 0.0
    %229 = vmatpush1.msra.mxu0 0.0
    %230 = vmatprep.subr.mxu0 0.0
    %231 = vmatpush1.msra.mxu0 0.0
    %232 = vmatprep.mubr.f32.mxu0 0.0
    %233 = vmatmul.mubr.f32.gmra.mrb[0].mxu0 %v73
    %v234 = vpop.f32.mrb[0].mxu0
    %v235 = vadd.f32 %v69, %v234
    %v236 = vpop.f32.mrb[0].mxu0
    %237 = vmatprep.mubr.f32.mxu0 0.0
    %238 = vmatmul.mubr.f32.gmra.mrb[0].mxu0 %v76
    %v239 = vpop.f32.mrb[0].mxu0
    %v240 = vadd.f32 %v69, %v239
    %v241 = vpop.f32.mrb[0].mxu0
    %242 = vmatprep.mubr.f32.mxu0 0.0
    %243 = vmatmul.mubr.f32.gmra.mrb[0].mxu0 %v79
    %v244 = vpop.f32.mrb[0].mxu0
    %v245 = vadd.f32 %v69, %v244
    %v246 = vpop.f32.mrb[0].mxu0
    %247 = vmatprep.mubr.f32.mxu0 0.0
    %248 = vmatmul.mubr.f32.gmra.mrb[0].mxu0 %v82
    %v249 = vpop.f32.mrb[0].mxu0
    %v250 = vadd.f32 %v69, %v249
    %v251 = vpop.f32.mrb[0].mxu0
    %252 = vmatprep.mubr.f32.mxu0 0.0
    %253 = vmatmul.mubr.f32.gmra.mrb[0].mxu0 %v85
    %v254 = vpop.f32.mrb[0].mxu0
    %v255 = vadd.f32 %v69, %v254
    %v256 = vpop.f32.mrb[0].mxu0
    %257 = vmatprep.mubr.f32.mxu0 0.0
    %258 = vmatmul.mubr.f32.gmra.mrb[0].mxu0 %v88
    %v259 = vpop.f32.mrb[0].mxu0
    %v260 = vadd.f32 %v69, %v259
    %v261 = vpop.f32.mrb[0].mxu0
    %262 = vmatprep.mubr.f32.mxu0 0.0
    %263 = vmatmul.mubr.f32.gmra.mrb[0].mxu0 %v91
    %v264 = vpop.f32.mrb[0].mxu0
    %v265 = vadd.f32 %v69, %v264
    %v266 = vpop.f32.mrb[0].mxu0
    %267 = vmatprep.mubr.f32.mxu0 0.0
    %268 = vmatmul.mubr.f32.gmra.mrb[0].mxu0 %v94
    %v269 = vpop.f32.mrb[0].mxu0
    %v270 = vadd.f32 %v69, %v269
    %v271 = vpop.f32.mrb[0].mxu0
    %272 = vmatprep.mubr.f32.mxu0 0.0
    %273 = vmatmul.mubr.f32.gmra.mrb[0].mxu0 %v97
    %v274 = vpop.f32.mrb[0].mxu0
    %v275 = vadd.f32 %v69, %v274
    %v276 = vpop.f32.mrb[0].mxu0
    %277 = vmatprep.mubr.f32.mxu0 0.0
    %278 = vmatmul.mubr.f32.gmra.mrb[0].mxu0 %v100
    %v279 = vpop.f32.mrb[0].mxu0
    %v280 = vadd.f32 %v69, %v279
    %v281 = vpop.f32.mrb[0].mxu0
    %282 = vmatprep.mubr.f32.mxu0 0.0
    %283 = vmatmul.mubr.f32.gmra.mrb[0].mxu0 %v103
    %v284 = vpop.f32.mrb[0].mxu0
    %v285 = vadd.f32 %v69, %v284
    %v286 = vpop.f32.mrb[0].mxu0
    %287 = vmatprep.mubr.f32.mxu0 0.0
    %288 = vmatmul.mubr.f32.gmra.mrb[0].mxu0 %v106
    %v289 = vpop.f32.mrb[0].mxu0
    %v290 = vadd.f32 %v69, %v289
    %v291 = vpop.f32.mrb[0].mxu0
    %292 = vmatprep.mubr.f32.mxu0 0.0
    %293 = vmatmul.mubr.f32.gmra.mrb[0].mxu0 %v109
    %v294 = vpop.f32.mrb[0].mxu0
    %v295 = vadd.f32 %v69, %v294
    %v296 = vpop.f32.mrb[0].mxu0
    %297 = vmatprep.mubr.f32.mxu0 0.0
    %298 = vmatmul.mubr.f32.gmra.mrb[0].mxu0 %v112
    %v299 = vpop.f32.mrb[0].mxu0
    %v300 = vadd.f32 %v69, %v299
    %v301 = vpop.f32.mrb[0].mxu0
    %302 = vmatprep.mubr.f32.mxu0 0.0
    %303 = vmatmul.mubr.f32.gmra.mrb[0].mxu0 %v115
    %v304 = vpop.f32.mrb[0].mxu0
    %v305 = vadd.f32 %v69, %v304
    %v306 = vpop.f32.mrb[0].mxu0
    %307 = vmatprep.mubr.f32.mxu0 0.0
    %308 = vmatmul.mubr.f32.gmra.mrb[0].mxu0 %v118
    %v309 = vpop.f32.mrb[0].mxu0
    %v310 = vadd.f32 %v69, %v309
    %v311 = vpop.f32.mrb[0].mxu0
    %312 = vmatprep.mubr.f32.mxu0 0.0
    %313 = vmatmul.mubr.f32.gmra.mrb[0].mxu0 %v121
    %v314 = vpop.f32.mrb[0].mxu0
    %v315 = vadd.f32 %v69, %v314
    %v316 = vpop.f32.mrb[0].mxu0
    %317 = vmatprep.mubr.f32.mxu0 0.0
    %318 = vmatmul.mubr.f32.gmra.mrb[0].mxu0 %v124
    %v319 = vpop.f32.mrb[0].mxu0
    %v320 = vadd.f32 %v69, %v319
    %v321 = vpop.f32.mrb[0].mxu0
    %322 = vmatprep.mubr.f32.mxu0 0.0
    %323 = vmatmul.mubr.f32.gmra.mrb[0].mxu0 %v127
    %v324 = vpop.f32.mrb[0].mxu0
    %v325 = vadd.f32 %v69, %v324
    %v326 = vpop.f32.mrb[0].mxu0
    %327 = vmatprep.mubr.f32.mxu0 0.0
    %328 = vmatmul.mubr.f32.gmra.mrb[0].mxu0 %v130
    %v329 = vpop.f32.mrb[0].mxu0
    %v330 = vadd.f32 %v69, %v329
    %v331 = vpop.f32.mrb[0].mxu0
    %332 = vmatprep.mubr.f32.mxu0 0.0
    %333 = vmatmul.mubr.f32.gmra.mrb[0].mxu0 %v133
    %v334 = vpop.f32.mrb[0].mxu0
    %v335 = vadd.f32 %v69, %v334
    %v336 = vpop.f32.mrb[0].mxu0
    %337 = vmatprep.mubr.f32.mxu0 0.0
    %338 = vmatmul.mubr.f32.gmra.mrb[0].mxu0 %v136
    %v339 = vpop.f32.mrb[0].mxu0
    %v340 = vadd.f32 %v69, %v339
    %v341 = vpop.f32.mrb[0].mxu0
    %342 = vmatprep.mubr.f32.mxu0 0.0
    %343 = vmatmul.mubr.f32.gmra.mrb[0].mxu0 %v139
    %v344 = vpop.f32.mrb[0].mxu0
    %v345 = vadd.f32 %v69, %v344
    %v346 = vpop.f32.mrb[0].mxu0
    %347 = vmatprep.mubr.f32.mxu0 0.0
    %348 = vmatmul.mubr.f32.gmra.mrb[0].mxu0 %v142
    %v349 = vpop.f32.mrb[0].mxu0
    %v350 = vadd.f32 %v69, %v349
    %v351 = vpop.f32.mrb[0].mxu0
    %352 = vmatprep.mubr.f32.mxu0 0.0
    %353 = vmatmul.mubr.f32.gmra.mrb[0].mxu0 %v145
    %v354 = vpop.f32.mrb[0].mxu0
    %v355 = vadd.f32 %v69, %v354
    %v356 = vpop.f32.mrb[0].mxu0
    %357 = vmatprep.mubr.f32.mxu0 0.0
    %358 = vmatmul.mubr.f32.gmra.mrb[0].mxu0 %v148
    %v359 = vpop.f32.mrb[0].mxu0
    %v360 = vadd.f32 %v69, %v359
    %v361 = vpop.f32.mrb[0].mxu0
    %362 = vmatprep.mubr.f32.mxu0 0.0
    %363 = vmatmul.mubr.f32.gmra.mrb[0].mxu0 %v151
    %v364 = vpop.f32.mrb[0].mxu0
    %v365 = vadd.f32 %v69, %v364
    %v366 = vpop.f32.mrb[0].mxu0
    %367 = vmatprep.mubr.f32.mxu0 0.0
    %368 = vmatmul.mubr.f32.gmra.mrb[0].mxu0 %v154
    %v369 = vpop.f32.mrb[0].mxu0
    %v370 = vadd.f32 %v69, %v369
    %v371 = vpop.f32.mrb[0].mxu0
    %372 = vmatprep.mubr.f32.mxu0 0.0
    %373 = vmatmul.mubr.f32.gmra.mrb[0].mxu0 %v157
    %v374 = vpop.f32.mrb[0].mxu0
    %v375 = vadd.f32 %v69, %v374
    %v376 = vpop.f32.mrb[0].mxu0
    %377 = vmatprep.mubr.f32.mxu0 0.0
    %378 = vmatmul.mubr.f32.gmra.mrb[0].mxu0 %v160
    %v379 = vpop.f32.mrb[0].mxu0
    %v380 = vadd.f32 %v69, %v379
    %v381 = vpop.f32.mrb[0].mxu0
    %382 = vmatprep.mubr.f32.mxu0 0.0
    %383 = vmatmul.mubr.f32.gmra.mrb[0].mxu0 %v163
    %v384 = vpop.f32.mrb[0].mxu0
    %v385 = vadd.f32 %v69, %v384
    %v386 = vpop.f32.mrb[0].mxu0
    %387 = vmatprep.mubr.f32.mxu0 0.0
    %388 = vmatmul.mubr.f32.gmra.mrb[0].mxu0 %v166
    %v389 = vpop.f32.mrb[0].mxu0
    %v390 = vadd.f32 %v69, %v389
    %v391 = vpop.f32.mrb[0].mxu0
    %392 = vdwg.mxu0
    %v393 = vmul.f32 %v235, 0.01
    %v394 = vmul.f32 %v240, 0.01
    %v395 = vmul.f32 %v245, 0.01
    %v396 = vmul.f32 %v250, 0.01
    %v397 = vmul.f32 %v255, 0.01
    %v398 = vmul.f32 %v260, 0.01
    %v399 = vmul.f32 %v265, 0.01
    %v400 = vmul.f32 %v270, 0.01
    %v401 = vmul.f32 %v275, 0.01
    %v402 = vmul.f32 %v280, 0.01
    %v403 = vmul.f32 %v285, 0.01
    %v404 = vmul.f32 %v290, 0.01
    %v405 = vmul.f32 %v295, 0.01
    %v406 = vmul.f32 %v300, 0.01
    %v407 = vmul.f32 %v305, 0.01
    %v408 = vmul.f32 %v310, 0.01
    %v409 = vmul.f32 %v315, 0.01
    %v410 = vmul.f32 %v320, 0.01
    %v411 = vmul.f32 %v325, 0.01
    %v412 = vmul.f32 %v330, 0.01
    %v413 = vmul.f32 %v335, 0.01
    %v414 = vmul.f32 %v340, 0.01
    %v415 = vmul.f32 %v345, 0.01
    %v416 = vmul.f32 %v350, 0.01
    %v417 = vmul.f32 %v355, 0.01
    %v418 = vmul.f32 %v360, 0.01
    %v419 = vmul.f32 %v365, 0.01
    %v420 = vmul.f32 %v370, 0.01
    %v421 = vmul.f32 %v375, 0.01
    %v422 = vmul.f32 %v380, 0.01
    %v423 = vmul.f32 %v385, 0.01
    %v424 = vmul.f32 %v390, 0.01
    %v425 = vmax.f32 %v235, %v393
    %v426 = vmax.f32 %v240, %v394
    %v427 = vmax.f32 %v245, %v395
    %v428 = vmax.f32 %v250, %v396
    %v429 = vmax.f32 %v255, %v397
    %v430 = vmax.f32 %v260, %v398
    %v431 = vmax.f32 %v265, %v399
    %v432 = vmax.f32 %v270, %v400
    %v433 = vmax.f32 %v275, %v401
    %v434 = vmax.f32 %v280, %v402
    %v435 = vmax.f32 %v285, %v403
    %v436 = vmax.f32 %v290, %v404
    %v437 = vmax.f32 %v295, %v405
    %v438 = vmax.f32 %v300, %v406
    %v439 = vmax.f32 %v305, %v407
    %v440 = vmax.f32 %v310, %v408
    %v441 = vmax.f32 %v315, %v409
    %v442 = vmax.f32 %v320, %v410
    %v443 = vmax.f32 %v325, %v411
    %v444 = vmax.f32 %v330, %v412
    %v445 = vmax.f32 %v335, %v413
    %v446 = vmax.f32 %v340, %v414
    %v447 = vmax.f32 %v345, %v415
    %v448 = vmax.f32 %v350, %v416
    %v449 = vmax.f32 %v355, %v417
    %v450 = vmax.f32 %v360, %v418
    %v451 = vmax.f32 %v365, %v419
    %v452 = vmax.f32 %v370, %v420
    %v453 = vmax.f32 %v375, %v421
    %v454 = vmax.f32 %v380, %v422
    %v455 = vmax.f32 %v385, %v423
    %v456 = vmax.f32 %v390, %v424
    %s457 = scalar_lea.vmem [#allocation2], 32
    %v458 = vld [vmem:[%s457] sm:$0xff]
    %v459 = vld [vmem:[%s457 + $0x8] sm:$0xff]
    %v460 = vld [vmem:[%s457 + $0x10] sm:$0xff]
    %v461 = vld [vmem:[%s457 + $0x18] sm:$0xff]
    %s462 = scalar_lea.vmem %s2, 1
    %v463 = vld [vmem:[%s462] sm:$0x1]
    %v465 = vlaneseq
    %v466 = vshrl.u32 %v465, 7
    %v467 = vsub.s32 0, %v466
    %v468 = vrot.slane %v463, %v467
    %v471 = vsel %vm71, %v425, 0
    %v474 = vsel %vm71, %v426, 0
    %v477 = vsel %vm71, %v427, 0
    %v480 = vsel %vm71, %v428, 0
    %v483 = vsel %vm71, %v429, 0
    %v486 = vsel %vm71, %v430, 0
    %v489 = vsel %vm71, %v431, 0
    %v492 = vsel %vm71, %v432, 0
    %v495 = vsel %vm71, %v433, 0
    %v498 = vsel %vm71, %v434, 0
    %v501 = vsel %vm71, %v435, 0
    %v504 = vsel %vm71, %v436, 0
    %v507 = vsel %vm71, %v437, 0
    %v510 = vsel %vm71, %v438, 0
    %v513 = vsel %vm71, %v439, 0
    %v516 = vsel %vm71, %v440, 0
    %v519 = vsel %vm71, %v441, 0
    %v522 = vsel %vm71, %v442, 0
    %v525 = vsel %vm71, %v443, 0
    %v528 = vsel %vm71, %v444, 0
    %v531 = vsel %vm71, %v445, 0
    %v534 = vsel %vm71, %v446, 0
    %v537 = vsel %vm71, %v447, 0
    %v540 = vsel %vm71, %v448, 0
    %v543 = vsel %vm71, %v449, 0
    %v546 = vsel %vm71, %v450, 0
    %v549 = vsel %vm71, %v451, 0
    %v552 = vsel %vm71, %v452, 0
    %v555 = vsel %vm71, %v453, 0
    %v558 = vsel %vm71, %v454, 0
    %v561 = vsel %vm71, %v455, 0
    %v564 = vsel %vm71, %v456, 0
    %566 = vmatprep.subr.mxu0 0.0
    %567 = vmatpush1.msra.mxu0 %v458
    %568 = vmatprep.subr.mxu0 0.0
    %569 = vmatpush1.msra.mxu0 %v459
    %570 = vmatprep.subr.mxu0 0.0
    %571 = vmatpush1.msra.mxu0 %v460
    %572 = vmatprep.subr.mxu0 0.0
    %573 = vmatpush1.msra.mxu0 %v461
    %574 = vmatprep.subr.mxu0 0.0
    %575 = vmatpush1.msra.mxu0 0.0
    %576 = vmatprep.subr.mxu0 0.0
    %577 = vmatpush1.msra.mxu0 0.0
    %578 = vmatprep.subr.mxu0 0.0
    %579 = vmatpush1.msra.mxu0 0.0
    %580 = vmatprep.subr.mxu0 0.0
    %581 = vmatpush1.msra.mxu0 0.0
    %582 = vmatprep.subr.mxu0 0.0
    %583 = vmatpush1.msra.mxu0 0.0
    %584 = vmatprep.subr.mxu0 0.0
    %585 = vmatpush1.msra.mxu0 0.0
    %586 = vmatprep.subr.mxu0 0.0
    %587 = vmatpush1.msra.mxu0 0.0
    %588 = vmatprep.subr.mxu0 0.0
    %589 = vmatpush1.msra.mxu0 0.0
    %590 = vmatprep.subr.mxu0 0.0
    %591 = vmatpush1.msra.mxu0 0.0
    %592 = vmatprep.subr.mxu0 0.0
    %593 = vmatpush1.msra.mxu0 0.0
    %594 = vmatprep.subr.mxu0 0.0
    %595 = vmatpush1.msra.mxu0 0.0
    %596 = vmatprep.subr.mxu0 0.0
    %597 = vmatpush1.msra.mxu0 0.0
    %598 = vmatprep.subr.mxu0 0.0
    %599 = vmatpush1.msra.mxu0 0.0
    %600 = vmatprep.subr.mxu0 0.0
    %601 = vmatpush1.msra.mxu0 0.0
    %602 = vmatprep.subr.mxu0 0.0
    %603 = vmatpush1.msra.mxu0 0.0
    %604 = vmatprep.subr.mxu0 0.0
    %605 = vmatpush1.msra.mxu0 0.0
    %606 = vmatprep.subr.mxu0 0.0
    %607 = vmatpush1.msra.mxu0 0.0
    %608 = vmatprep.subr.mxu0 0.0
    %609 = vmatpush1.msra.mxu0 0.0
    %610 = vmatprep.subr.mxu0 0.0
    %611 = vmatpush1.msra.mxu0 0.0
    %612 = vmatprep.subr.mxu0 0.0
    %613 = vmatpush1.msra.mxu0 0.0
    %614 = vmatprep.subr.mxu0 0.0
    %615 = vmatpush1.msra.mxu0 0.0
    %616 = vmatprep.subr.mxu0 0.0
    %617 = vmatpush1.msra.mxu0 0.0
    %618 = vmatprep.subr.mxu0 0.0
    %619 = vmatpush1.msra.mxu0 0.0
    %620 = vmatprep.subr.mxu0 0.0
    %621 = vmatpush1.msra.mxu0 0.0
    %622 = vmatprep.subr.mxu0 0.0
    %623 = vmatpush1.msra.mxu0 0.0
    %624 = vmatprep.subr.mxu0 0.0
    %625 = vmatpush1.msra.mxu0 0.0
    %626 = vmatprep.subr.mxu0 0.0
    %627 = vmatpush1.msra.mxu0 0.0
    %628 = vmatprep.subr.mxu0 0.0
    %629 = vmatpush1.msra.mxu0 0.0
    %630 = vmatprep.mubr.f32.mxu0 0.0
    %631 = vmatmul.mubr.f32.gmra.mrb[0].mxu0 %v471
    %v632 = vpop.f32.mrb[0].mxu0
    %v633 = vadd.f32 %v468, %v632
    %v634 = vpop.f32.mrb[0].mxu0
    %635 = vmatprep.mubr.f32.mxu0 0.0
    %636 = vmatmul.mubr.f32.gmra.mrb[0].mxu0 %v474
    %v637 = vpop.f32.mrb[0].mxu0
    %v638 = vadd.f32 %v468, %v637
    %v639 = vpop.f32.mrb[0].mxu0
    %640 = vmatprep.mubr.f32.mxu0 0.0
    %641 = vmatmul.mubr.f32.gmra.mrb[0].mxu0 %v477
    %v642 = vpop.f32.mrb[0].mxu0
    %v643 = vadd.f32 %v468, %v642
    %v644 = vpop.f32.mrb[0].mxu0
    %645 = vmatprep.mubr.f32.mxu0 0.0
    %646 = vmatmul.mubr.f32.gmra.mrb[0].mxu0 %v480
    %v647 = vpop.f32.mrb[0].mxu0
    %v648 = vadd.f32 %v468, %v647
    %v649 = vpop.f32.mrb[0].mxu0
    %650 = vmatprep.mubr.f32.mxu0 0.0
    %651 = vmatmul.mubr.f32.gmra.mrb[0].mxu0 %v483
    %v652 = vpop.f32.mrb[0].mxu0
    %v653 = vadd.f32 %v468, %v652
    %v654 = vpop.f32.mrb[0].mxu0
    %655 = vmatprep.mubr.f32.mxu0 0.0
    %656 = vmatmul.mubr.f32.gmra.mrb[0].mxu0 %v486
    %v657 = vpop.f32.mrb[0].mxu0
    %v658 = vadd.f32 %v468, %v657
    %v659 = vpop.f32.mrb[0].mxu0
    %660 = vmatprep.mubr.f32.mxu0 0.0
    %661 = vmatmul.mubr.f32.gmra.mrb[0].mxu0 %v489
    %v662 = vpop.f32.mrb[0].mxu0
    %v663 = vadd.f32 %v468, %v662
    %v664 = vpop.f32.mrb[0].mxu0
    %665 = vmatprep.mubr.f32.mxu0 0.0
    %666 = vmatmul.mubr.f32.gmra.mrb[0].mxu0 %v492
    %v667 = vpop.f32.mrb[0].mxu0
    %v668 = vadd.f32 %v468, %v667
    %v669 = vpop.f32.mrb[0].mxu0
    %670 = vmatprep.mubr.f32.mxu0 0.0
    %671 = vmatmul.mubr.f32.gmra.mrb[0].mxu0 %v495
    %v672 = vpop.f32.mrb[0].mxu0
    %v673 = vadd.f32 %v468, %v672
    %v674 = vpop.f32.mrb[0].mxu0
    %675 = vmatprep.mubr.f32.mxu0 0.0
    %676 = vmatmul.mubr.f32.gmra.mrb[0].mxu0 %v498
    %v677 = vpop.f32.mrb[0].mxu0
    %v678 = vadd.f32 %v468, %v677
    %v679 = vpop.f32.mrb[0].mxu0
    %680 = vmatprep.mubr.f32.mxu0 0.0
    %681 = vmatmul.mubr.f32.gmra.mrb[0].mxu0 %v501
    %v682 = vpop.f32.mrb[0].mxu0
    %v683 = vadd.f32 %v468, %v682
    %v684 = vpop.f32.mrb[0].mxu0
    %685 = vmatprep.mubr.f32.mxu0 0.0
    %686 = vmatmul.mubr.f32.gmra.mrb[0].mxu0 %v504
    %v687 = vpop.f32.mrb[0].mxu0
    %v688 = vadd.f32 %v468, %v687
    %v689 = vpop.f32.mrb[0].mxu0
    %690 = vmatprep.mubr.f32.mxu0 0.0
    %691 = vmatmul.mubr.f32.gmra.mrb[0].mxu0 %v507
    %v692 = vpop.f32.mrb[0].mxu0
    %v693 = vadd.f32 %v468, %v692
    %v694 = vpop.f32.mrb[0].mxu0
    %695 = vmatprep.mubr.f32.mxu0 0.0
    %696 = vmatmul.mubr.f32.gmra.mrb[0].mxu0 %v510
    %v697 = vpop.f32.mrb[0].mxu0
    %v698 = vadd.f32 %v468, %v697
    %v699 = vpop.f32.mrb[0].mxu0
    %700 = vmatprep.mubr.f32.mxu0 0.0
    %701 = vmatmul.mubr.f32.gmra.mrb[0].mxu0 %v513
    %v702 = vpop.f32.mrb[0].mxu0
    %v703 = vadd.f32 %v468, %v702
    %v704 = vpop.f32.mrb[0].mxu0
    %705 = vmatprep.mubr.f32.mxu0 0.0
    %706 = vmatmul.mubr.f32.gmra.mrb[0].mxu0 %v516
    %v707 = vpop.f32.mrb[0].mxu0
    %v708 = vadd.f32 %v468, %v707
    %v709 = vpop.f32.mrb[0].mxu0
    %710 = vmatprep.mubr.f32.mxu0 0.0
    %711 = vmatmul.mubr.f32.gmra.mrb[0].mxu0 %v519
    %v712 = vpop.f32.mrb[0].mxu0
    %v713 = vadd.f32 %v468, %v712
    %v714 = vpop.f32.mrb[0].mxu0
    %715 = vmatprep.mubr.f32.mxu0 0.0
    %716 = vmatmul.mubr.f32.gmra.mrb[0].mxu0 %v522
    %v717 = vpop.f32.mrb[0].mxu0
    %v718 = vadd.f32 %v468, %v717
    %v719 = vpop.f32.mrb[0].mxu0
    %720 = vmatprep.mubr.f32.mxu0 0.0
    %721 = vmatmul.mubr.f32.gmra.mrb[0].mxu0 %v525
    %v722 = vpop.f32.mrb[0].mxu0
    %v723 = vadd.f32 %v468, %v722
    %v724 = vpop.f32.mrb[0].mxu0
    %725 = vmatprep.mubr.f32.mxu0 0.0
    %726 = vmatmul.mubr.f32.gmra.mrb[0].mxu0 %v528
    %v727 = vpop.f32.mrb[0].mxu0
    %v728 = vadd.f32 %v468, %v727
    %v729 = vpop.f32.mrb[0].mxu0
    %730 = vmatprep.mubr.f32.mxu0 0.0
    %731 = vmatmul.mubr.f32.gmra.mrb[0].mxu0 %v531
    %v732 = vpop.f32.mrb[0].mxu0
    %v733 = vadd.f32 %v468, %v732
    %v734 = vpop.f32.mrb[0].mxu0
    %735 = vmatprep.mubr.f32.mxu0 0.0
    %736 = vmatmul.mubr.f32.gmra.mrb[0].mxu0 %v534
    %v737 = vpop.f32.mrb[0].mxu0
    %v738 = vadd.f32 %v468, %v737
    %v739 = vpop.f32.mrb[0].mxu0
    %740 = vmatprep.mubr.f32.mxu0 0.0
    %741 = vmatmul.mubr.f32.gmra.mrb[0].mxu0 %v537
    %v742 = vpop.f32.mrb[0].mxu0
    %v743 = vadd.f32 %v468, %v742
    %v744 = vpop.f32.mrb[0].mxu0
    %745 = vmatprep.mubr.f32.mxu0 0.0
    %746 = vmatmul.mubr.f32.gmra.mrb[0].mxu0 %v540
    %v747 = vpop.f32.mrb[0].mxu0
    %v748 = vadd.f32 %v468, %v747
    %v749 = vpop.f32.mrb[0].mxu0
    %750 = vmatprep.mubr.f32.mxu0 0.0
    %751 = vmatmul.mubr.f32.gmra.mrb[0].mxu0 %v543
    %v752 = vpop.f32.mrb[0].mxu0
    %v753 = vadd.f32 %v468, %v752
    %v754 = vpop.f32.mrb[0].mxu0
    %755 = vmatprep.mubr.f32.mxu0 0.0
    %756 = vmatmul.mubr.f32.gmra.mrb[0].mxu0 %v546
    %v757 = vpop.f32.mrb[0].mxu0
    %v758 = vadd.f32 %v468, %v757
    %v759 = vpop.f32.mrb[0].mxu0
    %760 = vmatprep.mubr.f32.mxu0 0.0
    %761 = vmatmul.mubr.f32.gmra.mrb[0].mxu0 %v549
    %v762 = vpop.f32.mrb[0].mxu0
    %v763 = vadd.f32 %v468, %v762
    %v764 = vpop.f32.mrb[0].mxu0
    %765 = vmatprep.mubr.f32.mxu0 0.0
    %766 = vmatmul.mubr.f32.gmra.mrb[0].mxu0 %v552
    %v767 = vpop.f32.mrb[0].mxu0
    %v768 = vadd.f32 %v468, %v767
    %v769 = vpop.f32.mrb[0].mxu0
    %770 = vmatprep.mubr.f32.mxu0 0.0
    %771 = vmatmul.mubr.f32.gmra.mrb[0].mxu0 %v555
    %v772 = vpop.f32.mrb[0].mxu0
    %v773 = vadd.f32 %v468, %v772
    %v774 = vpop.f32.mrb[0].mxu0
    %775 = vmatprep.mubr.f32.mxu0 0.0
    %776 = vmatmul.mubr.f32.gmra.mrb[0].mxu0 %v558
    %v777 = vpop.f32.mrb[0].mxu0
    %v778 = vadd.f32 %v468, %v777
    %v779 = vpop.f32.mrb[0].mxu0
    %780 = vmatprep.mubr.f32.mxu0 0.0
    %781 = vmatmul.mubr.f32.gmra.mrb[0].mxu0 %v561
    %v782 = vpop.f32.mrb[0].mxu0
    %v783 = vadd.f32 %v468, %v782
    %v784 = vpop.f32.mrb[0].mxu0
    %785 = vmatprep.mubr.f32.mxu0 0.0
    %786 = vmatmul.mubr.f32.gmra.mrb[0].mxu0 %v564
    %v787 = vpop.f32.mrb[0].mxu0
    %v788 = vadd.f32 %v468, %v787
    %v789 = vpop.f32.mrb[0].mxu0
    %790 = vdwg.mxu0
    %s791 = scalar_lea.vmem [#allocation2], 64
    %v792 = vld [vmem:[%s791] sm:$0xff]
    %v793 = vld [vmem:[%s791 + $0x8] sm:$0xff]
    %v794 = vld [vmem:[%s791 + $0x10] sm:$0xff]
    %v795 = vld [vmem:[%s791 + $0x18] sm:$0xff]
    %s796 = scalar_lea.vmem %s2, 2
    %v797 = vld [vmem:[%s796] sm:$0x1]
    %v799 = vlaneseq
    %v800 = vshrl.u32 %v799, 7
    %v801 = vsub.s32 0, %v800
    %v802 = vrot.slane %v797, %v801
    %v805 = vsel %vm71, %v633, 0
    %v808 = vsel %vm71, %v638, 0
    %v811 = vsel %vm71, %v643, 0
    %v814 = vsel %vm71, %v648, 0
    %v817 = vsel %vm71, %v653, 0
    %v820 = vsel %vm71, %v658, 0
    %v823 = vsel %vm71, %v663, 0
    %v826 = vsel %vm71, %v668, 0
    %v829 = vsel %vm71, %v673, 0
    %v832 = vsel %vm71, %v678, 0
    %v835 = vsel %vm71, %v683, 0
    %v838 = vsel %vm71, %v688, 0
    %v841 = vsel %vm71, %v693, 0
    %v844 = vsel %vm71, %v698, 0
    %v847 = vsel %vm71, %v703, 0
    %v850 = vsel %vm71, %v708, 0
    %v853 = vsel %vm71, %v713, 0
    %v856 = vsel %vm71, %v718, 0
    %v859 = vsel %vm71, %v723, 0
    %v862 = vsel %vm71, %v728, 0
    %v865 = vsel %vm71, %v733, 0
    %v868 = vsel %vm71, %v738, 0
    %v871 = vsel %vm71, %v743, 0
    %v874 = vsel %vm71, %v748, 0
    %v877 = vsel %vm71, %v753, 0
    %v880 = vsel %vm71, %v758, 0
    %v883 = vsel %vm71, %v763, 0
    %v886 = vsel %vm71, %v768, 0
    %v889 = vsel %vm71, %v773, 0
    %v892 = vsel %vm71, %v778, 0
    %v895 = vsel %vm71, %v783, 0
    %v898 = vsel %vm71, %v788, 0
    %900 = vmatprep.subr.mxu0 0.0
    %901 = vmatpush1.msra.mxu0 %v792
    %902 = vmatprep.subr.mxu0 0.0
    %903 = vmatpush1.msra.mxu0 %v793
    %904 = vmatprep.subr.mxu0 0.0
    %905 = vmatpush1.msra.mxu0 %v794
    %906 = vmatprep.subr.mxu0 0.0
    %907 = vmatpush1.msra.mxu0 %v795
    %908 = vmatprep.subr.mxu0 0.0
    %909 = vmatpush1.msra.mxu0 0.0
    %910 = vmatprep.subr.mxu0 0.0
    %911 = vmatpush1.msra.mxu0 0.0
    %912 = vmatprep.subr.mxu0 0.0
    %913 = vmatpush1.msra.mxu0 0.0
    %914 = vmatprep.subr.mxu0 0.0
    %915 = vmatpush1.msra.mxu0 0.0
    %916 = vmatprep.subr.mxu0 0.0
    %917 = vmatpush1.msra.mxu0 0.0
    %918 = vmatprep.subr.mxu0 0.0
    %919 = vmatpush1.msra.mxu0 0.0
    %920 = vmatprep.subr.mxu0 0.0
    %921 = vmatpush1.msra.mxu0 0.0
    %922 = vmatprep.subr.mxu0 0.0
    %923 = vmatpush1.msra.mxu0 0.0
    %924 = vmatprep.subr.mxu0 0.0
    %925 = vmatpush1.msra.mxu0 0.0
    %926 = vmatprep.subr.mxu0 0.0
    %927 = vmatpush1.msra.mxu0 0.0
    %928 = vmatprep.subr.mxu0 0.0
    %929 = vmatpush1.msra.mxu0 0.0
    %930 = vmatprep.subr.mxu0 0.0
    %931 = vmatpush1.msra.mxu0 0.0
    %932 = vmatprep.subr.mxu0 0.0
    %933 = vmatpush1.msra.mxu0 0.0
    %934 = vmatprep.subr.mxu0 0.0
    %935 = vmatpush1.msra.mxu0 0.0
    %936 = vmatprep.subr.mxu0 0.0
    %937 = vmatpush1.msra.mxu0 0.0
    %938 = vmatprep.subr.mxu0 0.0
    %939 = vmatpush1.msra.mxu0 0.0
    %940 = vmatprep.subr.mxu0 0.0
    %941 = vmatpush1.msra.mxu0 0.0
    %942 = vmatprep.subr.mxu0 0.0
    %943 = vmatpush1.msra.mxu0 0.0
    %944 = vmatprep.subr.mxu0 0.0
    %945 = vmatpush1.msra.mxu0 0.0
    %946 = vmatprep.subr.mxu0 0.0
    %947 = vmatpush1.msra.mxu0 0.0
    %948 = vmatprep.subr.mxu0 0.0
    %949 = vmatpush1.msra.mxu0 0.0
    %950 = vmatprep.subr.mxu0 0.0
    %951 = vmatpush1.msra.mxu0 0.0
    %952 = vmatprep.subr.mxu0 0.0
    %953 = vmatpush1.msra.mxu0 0.0
    %954 = vmatprep.subr.mxu0 0.0
    %955 = vmatpush1.msra.mxu0 0.0
    %956 = vmatprep.subr.mxu0 0.0
    %957 = vmatpush1.msra.mxu0 0.0
    %958 = vmatprep.subr.mxu0 0.0
    %959 = vmatpush1.msra.mxu0 0.0
    %960 = vmatprep.subr.mxu0 0.0
    %961 = vmatpush1.msra.mxu0 0.0
    %962 = vmatprep.subr.mxu0 0.0
    %963 = vmatpush1.msra.mxu0 0.0
    %964 = vmatprep.mubr.f32.mxu0 0.0
    %965 = vmatmul.mubr.f32.gmra.mrb[0].mxu0 %v805
    %v966 = vpop.f32.mrb[0].mxu0
    %v967 = vadd.f32 %v802, %v966
    %v968 = vpop.f32.mrb[0].mxu0
    %969 = vmatprep.mubr.f32.mxu0 0.0
    %970 = vmatmul.mubr.f32.gmra.mrb[0].mxu0 %v808
    %v971 = vpop.f32.mrb[0].mxu0
    %v972 = vadd.f32 %v802, %v971
    %v973 = vpop.f32.mrb[0].mxu0
    %974 = vmatprep.mubr.f32.mxu0 0.0
    %975 = vmatmul.mubr.f32.gmra.mrb[0].mxu0 %v811
    %v976 = vpop.f32.mrb[0].mxu0
    %v977 = vadd.f32 %v802, %v976
    %v978 = vpop.f32.mrb[0].mxu0
    %979 = vmatprep.mubr.f32.mxu0 0.0
    %980 = vmatmul.mubr.f32.gmra.mrb[0].mxu0 %v814
    %v981 = vpop.f32.mrb[0].mxu0
    %v982 = vadd.f32 %v802, %v981
    %v983 = vpop.f32.mrb[0].mxu0
    %984 = vmatprep.mubr.f32.mxu0 0.0
    %985 = vmatmul.mubr.f32.gmra.mrb[0].mxu0 %v817
    %v986 = vpop.f32.mrb[0].mxu0
    %v987 = vadd.f32 %v802, %v986
    %v988 = vpop.f32.mrb[0].mxu0
    %989 = vmatprep.mubr.f32.mxu0 0.0
    %990 = vmatmul.mubr.f32.gmra.mrb[0].mxu0 %v820
    %v991 = vpop.f32.mrb[0].mxu0
    %v992 = vadd.f32 %v802, %v991
    %v993 = vpop.f32.mrb[0].mxu0
    %994 = vmatprep.mubr.f32.mxu0 0.0
    %995 = vmatmul.mubr.f32.gmra.mrb[0].mxu0 %v823
    %v996 = vpop.f32.mrb[0].mxu0
    %v997 = vadd.f32 %v802, %v996
    %v998 = vpop.f32.mrb[0].mxu0
    %999 = vmatprep.mubr.f32.mxu0 0.0
    %1000 = vmatmul.mubr.f32.gmra.mrb[0].mxu0 %v826
    %v1001 = vpop.f32.mrb[0].mxu0
    %v1002 = vadd.f32 %v802, %v1001
    %v1003 = vpop.f32.mrb[0].mxu0
    %1004 = vmatprep.mubr.f32.mxu0 0.0
    %1005 = vmatmul.mubr.f32.gmra.mrb[0].mxu0 %v829
    %v1006 = vpop.f32.mrb[0].mxu0
    %v1007 = vadd.f32 %v802, %v1006
    %v1008 = vpop.f32.mrb[0].mxu0
    %1009 = vmatprep.mubr.f32.mxu0 0.0
    %1010 = vmatmul.mubr.f32.gmra.mrb[0].mxu0 %v832
    %v1011 = vpop.f32.mrb[0].mxu0
    %v1012 = vadd.f32 %v802, %v1011
    %v1013 = vpop.f32.mrb[0].mxu0
    %1014 = vmatprep.mubr.f32.mxu0 0.0
    %1015 = vmatmul.mubr.f32.gmra.mrb[0].mxu0 %v835
    %v1016 = vpop.f32.mrb[0].mxu0
    %v1017 = vadd.f32 %v802, %v1016
    %v1018 = vpop.f32.mrb[0].mxu0
    %1019 = vmatprep.mubr.f32.mxu0 0.0
    %1020 = vmatmul.mubr.f32.gmra.mrb[0].mxu0 %v838
    %v1021 = vpop.f32.mrb[0].mxu0
    %v1022 = vadd.f32 %v802, %v1021
    %v1023 = vpop.f32.mrb[0].mxu0
    %1024 = vmatprep.mubr.f32.mxu0 0.0
    %1025 = vmatmul.mubr.f32.gmra.mrb[0].mxu0 %v841
    %v1026 = vpop.f32.mrb[0].mxu0
    %v1027 = vadd.f32 %v802, %v1026
    %v1028 = vpop.f32.mrb[0].mxu0
    %1029 = vmatprep.mubr.f32.mxu0 0.0
    %1030 = vmatmul.mubr.f32.gmra.mrb[0].mxu0 %v844
    %v1031 = vpop.f32.mrb[0].mxu0
    %v1032 = vadd.f32 %v802, %v1031
    %v1033 = vpop.f32.mrb[0].mxu0
    %1034 = vmatprep.mubr.f32.mxu0 0.0
    %1035 = vmatmul.mubr.f32.gmra.mrb[0].mxu0 %v847
    %v1036 = vpop.f32.mrb[0].mxu0
    %v1037 = vadd.f32 %v802, %v1036
    %v1038 = vpop.f32.mrb[0].mxu0
    %1039 = vmatprep.mubr.f32.mxu0 0.0
    %1040 = vmatmul.mubr.f32.gmra.mrb[0].mxu0 %v850
    %v1041 = vpop.f32.mrb[0].mxu0
    %v1042 = vadd.f32 %v802, %v1041
    %v1043 = vpop.f32.mrb[0].mxu0
    %1044 = vmatprep.mubr.f32.mxu0 0.0
    %1045 = vmatmul.mubr.f32.gmra.mrb[0].mxu0 %v853
    %v1046 = vpop.f32.mrb[0].mxu0
    %v1047 = vadd.f32 %v802, %v1046
    %v1048 = vpop.f32.mrb[0].mxu0
    %1049 = vmatprep.mubr.f32.mxu0 0.0
    %1050 = vmatmul.mubr.f32.gmra.mrb[0].mxu0 %v856
    %v1051 = vpop.f32.mrb[0].mxu0
    %v1052 = vadd.f32 %v802, %v1051
    %v1053 = vpop.f32.mrb[0].mxu0
    %1054 = vmatprep.mubr.f32.mxu0 0.0
    %1055 = vmatmul.mubr.f32.gmra.mrb[0].mxu0 %v859
    %v1056 = vpop.f32.mrb[0].mxu0
    %v1057 = vadd.f32 %v802, %v1056
    %v1058 = vpop.f32.mrb[0].mxu0
    %1059 = vmatprep.mubr.f32.mxu0 0.0
    %1060 = vmatmul.mubr.f32.gmra.mrb[0].mxu0 %v862
    %v1061 = vpop.f32.mrb[0].mxu0
    %v1062 = vadd.f32 %v802, %v1061
    %v1063 = vpop.f32.mrb[0].mxu0
    %1064 = vmatprep.mubr.f32.mxu0 0.0
    %1065 = vmatmul.mubr.f32.gmra.mrb[0].mxu0 %v865
    %v1066 = vpop.f32.mrb[0].mxu0
    %v1067 = vadd.f32 %v802, %v1066
    %v1068 = vpop.f32.mrb[0].mxu0
    %1069 = vmatprep.mubr.f32.mxu0 0.0
    %1070 = vmatmul.mubr.f32.gmra.mrb[0].mxu0 %v868
    %v1071 = vpop.f32.mrb[0].mxu0
    %v1072 = vadd.f32 %v802, %v1071
    %v1073 = vpop.f32.mrb[0].mxu0
    %1074 = vmatprep.mubr.f32.mxu0 0.0
    %1075 = vmatmul.mubr.f32.gmra.mrb[0].mxu0 %v871
    %v1076 = vpop.f32.mrb[0].mxu0
    %v1077 = vadd.f32 %v802, %v1076
    %v1078 = vpop.f32.mrb[0].mxu0
    %1079 = vmatprep.mubr.f32.mxu0 0.0
    %1080 = vmatmul.mubr.f32.gmra.mrb[0].mxu0 %v874
    %v1081 = vpop.f32.mrb[0].mxu0
    %v1082 = vadd.f32 %v802, %v1081
    %v1083 = vpop.f32.mrb[0].mxu0
    %1084 = vmatprep.mubr.f32.mxu0 0.0
    %1085 = vmatmul.mubr.f32.gmra.mrb[0].mxu0 %v877
    %v1086 = vpop.f32.mrb[0].mxu0
    %v1087 = vadd.f32 %v802, %v1086
    %v1088 = vpop.f32.mrb[0].mxu0
    %1089 = vmatprep.mubr.f32.mxu0 0.0
    %1090 = vmatmul.mubr.f32.gmra.mrb[0].mxu0 %v880
    %v1091 = vpop.f32.mrb[0].mxu0
    %v1092 = vadd.f32 %v802, %v1091
    %v1093 = vpop.f32.mrb[0].mxu0
    %1094 = vmatprep.mubr.f32.mxu0 0.0
    %1095 = vmatmul.mubr.f32.gmra.mrb[0].mxu0 %v883
    %v1096 = vpop.f32.mrb[0].mxu0
    %v1097 = vadd.f32 %v802, %v1096
    %v1098 = vpop.f32.mrb[0].mxu0
    %1099 = vmatprep.mubr.f32.mxu0 0.0
    %1100 = vmatmul.mubr.f32.gmra.mrb[0].mxu0 %v886
    %v1101 = vpop.f32.mrb[0].mxu0
    %v1102 = vadd.f32 %v802, %v1101
    %v1103 = vpop.f32.mrb[0].mxu0
    %1104 = vmatprep.mubr.f32.mxu0 0.0
    %1105 = vmatmul.mubr.f32.gmra.mrb[0].mxu0 %v889
    %v1106 = vpop.f32.mrb[0].mxu0
    %v1107 = vadd.f32 %v802, %v1106
    %v1108 = vpop.f32.mrb[0].mxu0
    %1109 = vmatprep.mubr.f32.mxu0 0.0
    %1110 = vmatmul.mubr.f32.gmra.mrb[0].mxu0 %v892
    %v1111 = vpop.f32.mrb[0].mxu0
    %v1112 = vadd.f32 %v802, %v1111
    %v1113 = vpop.f32.mrb[0].mxu0
    %1114 = vmatprep.mubr.f32.mxu0 0.0
    %1115 = vmatmul.mubr.f32.gmra.mrb[0].mxu0 %v895
    %v1116 = vpop.f32.mrb[0].mxu0
    %v1117 = vadd.f32 %v802, %v1116
    %v1118 = vpop.f32.mrb[0].mxu0
    %1119 = vmatprep.mubr.f32.mxu0 0.0
    %1120 = vmatmul.mubr.f32.gmra.mrb[0].mxu0 %v898
    %v1121 = vpop.f32.mrb[0].mxu0
    %v1122 = vadd.f32 %v802, %v1121
    %v1123 = vpop.f32.mrb[0].mxu0
    %1124 = vdwg.mxu0
    %v1125 = vmax.f32 %v967, 0.0
    %v1126 = vmax.f32 %v972, 0.0
    %v1127 = vmax.f32 %v977, 0.0
    %v1128 = vmax.f32 %v982, 0.0
    %v1129 = vmax.f32 %v987, 0.0
    %v1130 = vmax.f32 %v992, 0.0
    %v1131 = vmax.f32 %v997, 0.0
    %v1132 = vmax.f32 %v1002, 0.0
    %v1133 = vmax.f32 %v1007, 0.0
    %v1134 = vmax.f32 %v1012, 0.0
    %v1135 = vmax.f32 %v1017, 0.0
    %v1136 = vmax.f32 %v1022, 0.0
    %v1137 = vmax.f32 %v1027, 0.0
    %v1138 = vmax.f32 %v1032, 0.0
    %v1139 = vmax.f32 %v1037, 0.0
    %v1140 = vmax.f32 %v1042, 0.0
    %v1141 = vmax.f32 %v1047, 0.0
    %v1142 = vmax.f32 %v1052, 0.0
    %v1143 = vmax.f32 %v1057, 0.0
    %v1144 = vmax.f32 %v1062, 0.0
    %v1145 = vmax.f32 %v1067, 0.0
    %v1146 = vmax.f32 %v1072, 0.0
    %v1147 = vmax.f32 %v1077, 0.0
    %v1148 = vmax.f32 %v1082, 0.0
    %v1149 = vmax.f32 %v1087, 0.0
    %v1150 = vmax.f32 %v1092, 0.0
    %v1151 = vmax.f32 %v1097, 0.0
    %v1152 = vmax.f32 %v1102, 0.0
    %v1153 = vmax.f32 %v1107, 0.0
    %v1154 = vmax.f32 %v1112, 0.0
    %v1155 = vmax.f32 %v1117, 0.0
    %v1156 = vmax.f32 %v1122, 0.0
    %s1157 = scalar_lea.vmem [#allocation2], 96
    %v1158 = vld [vmem:[%s1157] sm:$0xff]
    %v1159 = vld [vmem:[%s1157 + $0x8] sm:$0xff]
    %v1160 = vld [vmem:[%s1157 + $0x10] sm:$0xff]
    %v1161 = vld [vmem:[%s1157 + $0x18] sm:$0xff]
    %s1162 = scalar_lea.vmem %s2, 3
    %v1163 = vld [vmem:[%s1162] sm:$0x1]
    %v1165 = vlaneseq
    %v1166 = vshrl.u32 %v1165, 7
    %v1167 = vsub.s32 0, %v1166
    %v1168 = vrot.slane %v1163, %v1167
    %v1171 = vsel %vm71, %v1125, 0
    %v1174 = vsel %vm71, %v1126, 0
    %v1177 = vsel %vm71, %v1127, 0
    %v1180 = vsel %vm71, %v1128, 0
    %v1183 = vsel %vm71, %v1129, 0
    %v1186 = vsel %vm71, %v1130, 0
    %v1189 = vsel %vm71, %v1131, 0
    %v1192 = vsel %vm71, %v1132, 0
    %v1195 = vsel %vm71, %v1133, 0
    %v1198 = vsel %vm71, %v1134, 0
    %v1201 = vsel %vm71, %v1135, 0
    %v1204 = vsel %vm71, %v1136, 0
    %v1207 = vsel %vm71, %v1137, 0
    %v1210 = vsel %vm71, %v1138, 0
    %v1213 = vsel %vm71, %v1139, 0
    %v1216 = vsel %vm71, %v1140, 0
    %v1219 = vsel %vm71, %v1141, 0
    %v1222 = vsel %vm71, %v1142, 0
    %v1225 = vsel %vm71, %v1143, 0
    %v1228 = vsel %vm71, %v1144, 0
    %v1231 = vsel %vm71, %v1145, 0
    %v1234 = vsel %vm71, %v1146, 0
    %v1237 = vsel %vm71, %v1147, 0
    %v1240 = vsel %vm71, %v1148, 0
    %v1243 = vsel %vm71, %v1149, 0
    %v1246 = vsel %vm71, %v1150, 0
    %v1249 = vsel %vm71, %v1151, 0
    %v1252 = vsel %vm71, %v1152, 0
    %v1255 = vsel %vm71, %v1153, 0
    %v1258 = vsel %vm71, %v1154, 0
    %v1261 = vsel %vm71, %v1155, 0
    %v1264 = vsel %vm71, %v1156, 0
    %1266 = vmatprep.subr.mxu0 0.0
    %1267 = vmatpush1.msra.mxu0 %v1158
    %1268 = vmatprep.subr.mxu0 0.0
    %1269 = vmatpush1.msra.mxu0 %v1159
    %1270 = vmatprep.subr.mxu0 0.0
    %1271 = vmatpush1.msra.mxu0 %v1160
    %1272 = vmatprep.subr.mxu0 0.0
    %1273 = vmatpush1.msra.mxu0 %v1161
    %1274 = vmatprep.subr.mxu0 0.0
    %1275 = vmatpush1.msra.mxu0 0.0
    %1276 = vmatprep.subr.mxu0 0.0
    %1277 = vmatpush1.msra.mxu0 0.0
    %1278 = vmatprep.subr.mxu0 0.0
    %1279 = vmatpush1.msra.mxu0 0.0
    %1280 = vmatprep.subr.mxu0 0.0
    %1281 = vmatpush1.msra.mxu0 0.0
    %1282 = vmatprep.subr.mxu0 0.0
    %1283 = vmatpush1.msra.mxu0 0.0
    %1284 = vmatprep.subr.mxu0 0.0
    %1285 = vmatpush1.msra.mxu0 0.0
    %1286 = vmatprep.subr.mxu0 0.0
    %1287 = vmatpush1.msra.mxu0 0.0
    %1288 = vmatprep.subr.mxu0 0.0
    %1289 = vmatpush1.msra.mxu0 0.0
    %1290 = vmatprep.subr.mxu0 0.0
    %1291 = vmatpush1.msra.mxu0 0.0
    %1292 = vmatprep.subr.mxu0 0.0
    %1293 = vmatpush1.msra.mxu0 0.0
    %1294 = vmatprep.subr.mxu0 0.0
    %1295 = vmatpush1.msra.mxu0 0.0
    %1296 = vmatprep.subr.mxu0 0.0
    %1297 = vmatpush1.msra.mxu0 0.0
    %1298 = vmatprep.subr.mxu0 0.0
    %1299 = vmatpush1.msra.mxu0 0.0
    %1300 = vmatprep.subr.mxu0 0.0
    %1301 = vmatpush1.msra.mxu0 0.0
    %1302 = vmatprep.subr.mxu0 0.0
    %1303 = vmatpush1.msra.mxu0 0.0
    %1304 = vmatprep.subr.mxu0 0.0
    %1305 = vmatpush1.msra.mxu0 0.0
    %1306 = vmatprep.subr.mxu0 0.0
    %1307 = vmatpush1.msra.mxu0 0.0
    %1308 = vmatprep.subr.mxu0 0.0
    %1309 = vmatpush1.msra.mxu0 0.0
    %1310 = vmatprep.subr.mxu0 0.0
    %1311 = vmatpush1.msra.mxu0 0.0
    %1312 = vmatprep.subr.mxu0 0.0
    %1313 = vmatpush1.msra.mxu0 0.0
    %1314 = vmatprep.subr.mxu0 0.0
    %1315 = vmatpush1.msra.mxu0 0.0
    %1316 = vmatprep.subr.mxu0 0.0
    %1317 = vmatpush1.msra.mxu0 0.0
    %1318 = vmatprep.subr.mxu0 0.0
    %1319 = vmatpush1.msra.mxu0 0.0
    %1320 = vmatprep.subr.mxu0 0.0
    %1321 = vmatpush1.msra.mxu0 0.0
    %1322 = vmatprep.subr.mxu0 0.0
    %1323 = vmatpush1.msra.mxu0 0.0
    %1324 = vmatprep.subr.mxu0 0.0
    %1325 = vmatpush1.msra.mxu0 0.0
    %1326 = vmatprep.subr.mxu0 0.0
    %1327 = vmatpush1.msra.mxu0 0.0
    %1328 = vmatprep.subr.mxu0 0.0
    %1329 = vmatpush1.msra.mxu0 0.0
    %1330 = vmatprep.mubr.f32.mxu0 0.0
    %1331 = vmatmul.mubr.f32.gmra.mrb[0].mxu0 %v1171
    %v1332 = vpop.f32.mrb[0].mxu0
    %v1333 = vadd.f32 %v1168, %v1332
    %v1334 = vpop.f32.mrb[0].mxu0
    %1335 = vmatprep.mubr.f32.mxu0 0.0
    %1336 = vmatmul.mubr.f32.gmra.mrb[0].mxu0 %v1174
    %v1337 = vpop.f32.mrb[0].mxu0
    %v1338 = vadd.f32 %v1168, %v1337
    %v1339 = vpop.f32.mrb[0].mxu0
    %1340 = vmatprep.mubr.f32.mxu0 0.0
    %1341 = vmatmul.mubr.f32.gmra.mrb[0].mxu0 %v1177
    %v1342 = vpop.f32.mrb[0].mxu0
    %v1343 = vadd.f32 %v1168, %v1342
    %v1344 = vpop.f32.mrb[0].mxu0
    %1345 = vmatprep.mubr.f32.mxu0 0.0
    %1346 = vmatmul.mubr.f32.gmra.mrb[0].mxu0 %v1180
    %v1347 = vpop.f32.mrb[0].mxu0
    %v1348 = vadd.f32 %v1168, %v1347
    %v1349 = vpop.f32.mrb[0].mxu0
    %1350 = vmatprep.mubr.f32.mxu0 0.0
    %1351 = vmatmul.mubr.f32.gmra.mrb[0].mxu0 %v1183
    %v1352 = vpop.f32.mrb[0].mxu0
    %v1353 = vadd.f32 %v1168, %v1352
    %v1354 = vpop.f32.mrb[0].mxu0
    %1355 = vmatprep.mubr.f32.mxu0 0.0
    %1356 = vmatmul.mubr.f32.gmra.mrb[0].mxu0 %v1186
    %v1357 = vpop.f32.mrb[0].mxu0
    %v1358 = vadd.f32 %v1168, %v1357
    %v1359 = vpop.f32.mrb[0].mxu0
    %1360 = vmatprep.mubr.f32.mxu0 0.0
    %1361 = vmatmul.mubr.f32.gmra.mrb[0].mxu0 %v1189
    %v1362 = vpop.f32.mrb[0].mxu0
    %v1363 = vadd.f32 %v1168, %v1362
    %v1364 = vpop.f32.mrb[0].mxu0
    %1365 = vmatprep.mubr.f32.mxu0 0.0
    %1366 = vmatmul.mubr.f32.gmra.mrb[0].mxu0 %v1192
    %v1367 = vpop.f32.mrb[0].mxu0
    %v1368 = vadd.f32 %v1168, %v1367
    %v1369 = vpop.f32.mrb[0].mxu0
    %1370 = vmatprep.mubr.f32.mxu0 0.0
    %1371 = vmatmul.mubr.f32.gmra.mrb[0].mxu0 %v1195
    %v1372 = vpop.f32.mrb[0].mxu0
    %v1373 = vadd.f32 %v1168, %v1372
    %v1374 = vpop.f32.mrb[0].mxu0
    %1375 = vmatprep.mubr.f32.mxu0 0.0
    %1376 = vmatmul.mubr.f32.gmra.mrb[0].mxu0 %v1198
    %v1377 = vpop.f32.mrb[0].mxu0
    %v1378 = vadd.f32 %v1168, %v1377
    %v1379 = vpop.f32.mrb[0].mxu0
    %1380 = vmatprep.mubr.f32.mxu0 0.0
    %1381 = vmatmul.mubr.f32.gmra.mrb[0].mxu0 %v1201
    %v1382 = vpop.f32.mrb[0].mxu0
    %v1383 = vadd.f32 %v1168, %v1382
    %v1384 = vpop.f32.mrb[0].mxu0
    %1385 = vmatprep.mubr.f32.mxu0 0.0
    %1386 = vmatmul.mubr.f32.gmra.mrb[0].mxu0 %v1204
    %v1387 = vpop.f32.mrb[0].mxu0
    %v1388 = vadd.f32 %v1168, %v1387
    %v1389 = vpop.f32.mrb[0].mxu0
    %1390 = vmatprep.mubr.f32.mxu0 0.0
    %1391 = vmatmul.mubr.f32.gmra.mrb[0].mxu0 %v1207
    %v1392 = vpop.f32.mrb[0].mxu0
    %v1393 = vadd.f32 %v1168, %v1392
    %v1394 = vpop.f32.mrb[0].mxu0
    %1395 = vmatprep.mubr.f32.mxu0 0.0
    %1396 = vmatmul.mubr.f32.gmra.mrb[0].mxu0 %v1210
    %v1397 = vpop.f32.mrb[0].mxu0
    %v1398 = vadd.f32 %v1168, %v1397
    %v1399 = vpop.f32.mrb[0].mxu0
    %1400 = vmatprep.mubr.f32.mxu0 0.0
    %1401 = vmatmul.mubr.f32.gmra.mrb[0].mxu0 %v1213
    %v1402 = vpop.f32.mrb[0].mxu0
    %v1403 = vadd.f32 %v1168, %v1402
    %v1404 = vpop.f32.mrb[0].mxu0
    %1405 = vmatprep.mubr.f32.mxu0 0.0
    %1406 = vmatmul.mubr.f32.gmra.mrb[0].mxu0 %v1216
    %v1407 = vpop.f32.mrb[0].mxu0
    %v1408 = vadd.f32 %v1168, %v1407
    %v1409 = vpop.f32.mrb[0].mxu0
    %1410 = vmatprep.mubr.f32.mxu0 0.0
    %1411 = vmatmul.mubr.f32.gmra.mrb[0].mxu0 %v1219
    %v1412 = vpop.f32.mrb[0].mxu0
    %v1413 = vadd.f32 %v1168, %v1412
    %v1414 = vpop.f32.mrb[0].mxu0
    %1415 = vmatprep.mubr.f32.mxu0 0.0
    %1416 = vmatmul.mubr.f32.gmra.mrb[0].mxu0 %v1222
    %v1417 = vpop.f32.mrb[0].mxu0
    %v1418 = vadd.f32 %v1168, %v1417
    %v1419 = vpop.f32.mrb[0].mxu0
    %1420 = vmatprep.mubr.f32.mxu0 0.0
    %1421 = vmatmul.mubr.f32.gmra.mrb[0].mxu0 %v1225
    %v1422 = vpop.f32.mrb[0].mxu0
    %v1423 = vadd.f32 %v1168, %v1422
    %v1424 = vpop.f32.mrb[0].mxu0
    %1425 = vmatprep.mubr.f32.mxu0 0.0
    %1426 = vmatmul.mubr.f32.gmra.mrb[0].mxu0 %v1228
    %v1427 = vpop.f32.mrb[0].mxu0
    %v1428 = vadd.f32 %v1168, %v1427
    %v1429 = vpop.f32.mrb[0].mxu0
    %1430 = vmatprep.mubr.f32.mxu0 0.0
    %1431 = vmatmul.mubr.f32.gmra.mrb[0].mxu0 %v1231
    %v1432 = vpop.f32.mrb[0].mxu0
    %v1433 = vadd.f32 %v1168, %v1432
    %v1434 = vpop.f32.mrb[0].mxu0
    %1435 = vmatprep.mubr.f32.mxu0 0.0
    %1436 = vmatmul.mubr.f32.gmra.mrb[0].mxu0 %v1234
    %v1437 = vpop.f32.mrb[0].mxu0
    %v1438 = vadd.f32 %v1168, %v1437
    %v1439 = vpop.f32.mrb[0].mxu0
    %1440 = vmatprep.mubr.f32.mxu0 0.0
    %1441 = vmatmul.mubr.f32.gmra.mrb[0].mxu0 %v1237
    %v1442 = vpop.f32.mrb[0].mxu0
    %v1443 = vadd.f32 %v1168, %v1442
    %v1444 = vpop.f32.mrb[0].mxu0
    %1445 = vmatprep.mubr.f32.mxu0 0.0
    %1446 = vmatmul.mubr.f32.gmra.mrb[0].mxu0 %v1240
    %v1447 = vpop.f32.mrb[0].mxu0
    %v1448 = vadd.f32 %v1168, %v1447
    %v1449 = vpop.f32.mrb[0].mxu0
    %1450 = vmatprep.mubr.f32.mxu0 0.0
    %1451 = vmatmul.mubr.f32.gmra.mrb[0].mxu0 %v1243
    %v1452 = vpop.f32.mrb[0].mxu0
    %v1453 = vadd.f32 %v1168, %v1452
    %v1454 = vpop.f32.mrb[0].mxu0
    %1455 = vmatprep.mubr.f32.mxu0 0.0
    %1456 = vmatmul.mubr.f32.gmra.mrb[0].mxu0 %v1246
    %v1457 = vpop.f32.mrb[0].mxu0
    %v1458 = vadd.f32 %v1168, %v1457
    %v1459 = vpop.f32.mrb[0].mxu0
    %1460 = vmatprep.mubr.f32.mxu0 0.0
    %1461 = vmatmul.mubr.f32.gmra.mrb[0].mxu0 %v1249
    %v1462 = vpop.f32.mrb[0].mxu0
    %v1463 = vadd.f32 %v1168, %v1462
    %v1464 = vpop.f32.mrb[0].mxu0
    %1465 = vmatprep.mubr.f32.mxu0 0.0
    %1466 = vmatmul.mubr.f32.gmra.mrb[0].mxu0 %v1252
    %v1467 = vpop.f32.mrb[0].mxu0
    %v1468 = vadd.f32 %v1168, %v1467
    %v1469 = vpop.f32.mrb[0].mxu0
    %1470 = vmatprep.mubr.f32.mxu0 0.0
    %1471 = vmatmul.mubr.f32.gmra.mrb[0].mxu0 %v1255
    %v1472 = vpop.f32.mrb[0].mxu0
    %v1473 = vadd.f32 %v1168, %v1472
    %v1474 = vpop.f32.mrb[0].mxu0
    %1475 = vmatprep.mubr.f32.mxu0 0.0
    %1476 = vmatmul.mubr.f32.gmra.mrb[0].mxu0 %v1258
    %v1477 = vpop.f32.mrb[0].mxu0
    %v1478 = vadd.f32 %v1168, %v1477
    %v1479 = vpop.f32.mrb[0].mxu0
    %1480 = vmatprep.mubr.f32.mxu0 0.0
    %1481 = vmatmul.mubr.f32.gmra.mrb[0].mxu0 %v1261
    %v1482 = vpop.f32.mrb[0].mxu0
    %v1483 = vadd.f32 %v1168, %v1482
    %v1484 = vpop.f32.mrb[0].mxu0
    %1485 = vmatprep.mubr.f32.mxu0 0.0
    %1486 = vmatmul.mubr.f32.gmra.mrb[0].mxu0 %v1264
    %v1487 = vpop.f32.mrb[0].mxu0
    %v1488 = vadd.f32 %v1168, %v1487
    %v1489 = vpop.f32.mrb[0].mxu0
    %1490 = vdwg.mxu0
    %v1491 = vadd.f32 %v28, %v1333
    %v1492 = vadd.f32 %v29, %v1338
    %v1493 = vadd.f32 %v30, %v1343
    %v1494 = vadd.f32 %v31, %v1348
    %v1495 = vadd.f32 %v32, %v1353
    %v1496 = vadd.f32 %v33, %v1358
    %v1497 = vadd.f32 %v34, %v1363
    %v1498 = vadd.f32 %v35, %v1368
    %v1499 = vadd.f32 %v36, %v1373
    %v1500 = vadd.f32 %v37, %v1378
    %v1501 = vadd.f32 %v38, %v1383
    %v1502 = vadd.f32 %v39, %v1388
    %v1503 = vadd.f32 %v40, %v1393
    %v1504 = vadd.f32 %v41, %v1398
    %v1505 = vadd.f32 %v42, %v1403
    %v1506 = vadd.f32 %v43, %v1408
    %v1507 = vadd.f32 %v44, %v1413
    %v1508 = vadd.f32 %v45, %v1418
    %v1509 = vadd.f32 %v46, %v1423
    %v1510 = vadd.f32 %v47, %v1428
    %v1511 = vadd.f32 %v48, %v1433
    %v1512 = vadd.f32 %v49, %v1438
    %v1513 = vadd.f32 %v50, %v1443
    %v1514 = vadd.f32 %v51, %v1448
    %v1515 = vadd.f32 %v52, %v1453
    %v1516 = vadd.f32 %v53, %v1458
    %v1517 = vadd.f32 %v54, %v1463
    %v1518 = vadd.f32 %v55, %v1468
    %v1519 = vadd.f32 %v56, %v1473
    %v1520 = vadd.f32 %v57, %v1478
    %v1521 = vadd.f32 %v58, %v1483
    %v1522 = vadd.f32 %v59, %v1488
    %s1523 = scalar_lea.vmem [#allocation2], 128
    %v1524 = vld [vmem:[%s1523] sm:$0xff]
    %v1525 = vld [vmem:[%s1523 + $0x8] sm:$0xff]
    %v1526 = vld [vmem:[%s1523 + $0x10] sm:$0xff]
    %v1527 = vld [vmem:[%s1523 + $0x18] sm:$0xff]
    %s1528 = scalar_lea.vmem %s2, 4
    %v1529 = vld [vmem:[%s1528] sm:$0x1]
    %v1531 = vlaneseq
    %v1532 = vshrl.u32 %v1531, 7
    %v1533 = vsub.s32 0, %v1532
    %v1534 = vrot.slane %v1529, %v1533
    %v1537 = vsel %vm71, %v1491, 0
    %v1540 = vsel %vm71, %v1492, 0
    %v1543 = vsel %vm71, %v1493, 0
    %v1546 = vsel %vm71, %v1494, 0
    %v1549 = vsel %vm71, %v1495, 0
    %v1552 = vsel %vm71, %v1496, 0
    %v1555 = vsel %vm71, %v1497, 0
    %v1558 = vsel %vm71, %v1498, 0
    %v1561 = vsel %vm71, %v1499, 0
    %v1564 = vsel %vm71, %v1500, 0
    %v1567 = vsel %vm71, %v1501, 0
    %v1570 = vsel %vm71, %v1502, 0
    %v1573 = vsel %vm71, %v1503, 0
    %v1576 = vsel %vm71, %v1504, 0
    %v1579 = vsel %vm71, %v1505, 0
    %v1582 = vsel %vm71, %v1506, 0
    %v1585 = vsel %vm71, %v1507, 0
    %v1588 = vsel %vm71, %v1508, 0
    %v1591 = vsel %vm71, %v1509, 0
    %v1594 = vsel %vm71, %v1510, 0
    %v1597 = vsel %vm71, %v1511, 0
    %v1600 = vsel %vm71, %v1512, 0
    %v1603 = vsel %vm71, %v1513, 0
    %v1606 = vsel %vm71, %v1514, 0
    %v1609 = vsel %vm71, %v1515, 0
    %v1612 = vsel %vm71, %v1516, 0
    %v1615 = vsel %vm71, %v1517, 0
    %v1618 = vsel %vm71, %v1518, 0
    %v1621 = vsel %vm71, %v1519, 0
    %v1624 = vsel %vm71, %v1520, 0
    %v1627 = vsel %vm71, %v1521, 0
    %v1630 = vsel %vm71, %v1522, 0
    %1632 = vmatprep.subr.mxu0 0.0
    %1633 = vmatpush1.msra.mxu0 %v1524
    %1634 = vmatprep.subr.mxu0 0.0
    %1635 = vmatpush1.msra.mxu0 %v1525
    %1636 = vmatprep.subr.mxu0 0.0
    %1637 = vmatpush1.msra.mxu0 %v1526
    %1638 = vmatprep.subr.mxu0 0.0
    %1639 = vmatpush1.msra.mxu0 %v1527
    %1640 = vmatprep.subr.mxu0 0.0
    %1641 = vmatpush1.msra.mxu0 0.0
    %1642 = vmatprep.subr.mxu0 0.0
    %1643 = vmatpush1.msra.mxu0 0.0
    %1644 = vmatprep.subr.mxu0 0.0
    %1645 = vmatpush1.msra.mxu0 0.0
    %1646 = vmatprep.subr.mxu0 0.0
    %1647 = vmatpush1.msra.mxu0 0.0
    %1648 = vmatprep.subr.mxu0 0.0
    %1649 = vmatpush1.msra.mxu0 0.0
    %1650 = vmatprep.subr.mxu0 0.0
    %1651 = vmatpush1.msra.mxu0 0.0
    %1652 = vmatprep.subr.mxu0 0.0
    %1653 = vmatpush1.msra.mxu0 0.0
    %1654 = vmatprep.subr.mxu0 0.0
    %1655 = vmatpush1.msra.mxu0 0.0
    %1656 = vmatprep.subr.mxu0 0.0
    %1657 = vmatpush1.msra.mxu0 0.0
    %1658 = vmatprep.subr.mxu0 0.0
    %1659 = vmatpush1.msra.mxu0 0.0
    %1660 = vmatprep.subr.mxu0 0.0
    %1661 = vmatpush1.msra.mxu0 0.0
    %1662 = vmatprep.subr.mxu0 0.0
    %1663 = vmatpush1.msra.mxu0 0.0
    %1664 = vmatprep.subr.mxu0 0.0
    %1665 = vmatpush1.msra.mxu0 0.0
    %1666 = vmatprep.subr.mxu0 0.0
    %1667 = vmatpush1.msra.mxu0 0.0
    %1668 = vmatprep.subr.mxu0 0.0
    %1669 = vmatpush1.msra.mxu0 0.0
    %1670 = vmatprep.subr.mxu0 0.0
    %1671 = vmatpush1.msra.mxu0 0.0
    %1672 = vmatprep.subr.mxu0 0.0
    %1673 = vmatpush1.msra.mxu0 0.0
    %1674 = vmatprep.subr.mxu0 0.0
    %1675 = vmatpush1.msra.mxu0 0.0
    %1676 = vmatprep.subr.mxu0 0.0
    %1677 = vmatpush1.msra.mxu0 0.0
    %1678 = vmatprep.subr.mxu0 0.0
    %1679 = vmatpush1.msra.mxu0 0.0
    %1680 = vmatprep.subr.mxu0 0.0
    %1681 = vmatpush1.msra.mxu0 0.0
    %1682 = vmatprep.subr.mxu0 0.0
    %1683 = vmatpush1.msra.mxu0 0.0
    %1684 = vmatprep.subr.mxu0 0.0
    %1685 = vmatpush1.msra.mxu0 0.0
    %1686 = vmatprep.subr.mxu0 0.0
    %1687 = vmatpush1.msra.mxu0 0.0
    %1688 = vmatprep.subr.mxu0 0.0
    %1689 = vmatpush1.msra.mxu0 0.0
    %1690 = vmatprep.subr.mxu0 0.0
    %1691 = vmatpush1.msra.mxu0 0.0
    %1692 = vmatprep.subr.mxu0 0.0
    %1693 = vmatpush1.msra.mxu0 0.0
    %1694 = vmatprep.subr.mxu0 0.0
    %1695 = vmatpush1.msra.mxu0 0.0
    %1696 = vmatprep.mubr.f32.mxu0 0.0
    %1697 = vmatmul.mubr.f32.gmra.mrb[0].mxu0 %v1537
    %v1698 = vpop.f32.mrb[0].mxu0
    %v1699 = vadd.f32 %v1534, %v1698
    %v1700 = vpop.f32.mrb[0].mxu0
    %1701 = vmatprep.mubr.f32.mxu0 0.0
    %1702 = vmatmul.mubr.f32.gmra.mrb[0].mxu0 %v1540
    %v1703 = vpop.f32.mrb[0].mxu0
    %v1704 = vadd.f32 %v1534, %v1703
    %v1705 = vpop.f32.mrb[0].mxu0
    %1706 = vmatprep.mubr.f32.mxu0 0.0
    %1707 = vmatmul.mubr.f32.gmra.mrb[0].mxu0 %v1543
    %v1708 = vpop.f32.mrb[0].mxu0
    %v1709 = vadd.f32 %v1534, %v1708
    %v1710 = vpop.f32.mrb[0].mxu0
    %1711 = vmatprep.mubr.f32.mxu0 0.0
    %1712 = vmatmul.mubr.f32.gmra.mrb[0].mxu0 %v1546
    %v1713 = vpop.f32.mrb[0].mxu0
    %v1714 = vadd.f32 %v1534, %v1713
    %v1715 = vpop.f32.mrb[0].mxu0
    %1716 = vmatprep.mubr.f32.mxu0 0.0
    %1717 = vmatmul.mubr.f32.gmra.mrb[0].mxu0 %v1549
    %v1718 = vpop.f32.mrb[0].mxu0
    %v1719 = vadd.f32 %v1534, %v1718
    %v1720 = vpop.f32.mrb[0].mxu0
    %1721 = vmatprep.mubr.f32.mxu0 0.0
    %1722 = vmatmul.mubr.f32.gmra.mrb[0].mxu0 %v1552
    %v1723 = vpop.f32.mrb[0].mxu0
    %v1724 = vadd.f32 %v1534, %v1723
    %v1725 = vpop.f32.mrb[0].mxu0
    %1726 = vmatprep.mubr.f32.mxu0 0.0
    %1727 = vmatmul.mubr.f32.gmra.mrb[0].mxu0 %v1555
    %v1728 = vpop.f32.mrb[0].mxu0
    %v1729 = vadd.f32 %v1534, %v1728
    %v1730 = vpop.f32.mrb[0].mxu0
    %1731 = vmatprep.mubr.f32.mxu0 0.0
    %1732 = vmatmul.mubr.f32.gmra.mrb[0].mxu0 %v1558
    %v1733 = vpop.f32.mrb[0].mxu0
    %v1734 = vadd.f32 %v1534, %v1733
    %v1735 = vpop.f32.mrb[0].mxu0
    %1736 = vmatprep.mubr.f32.mxu0 0.0
    %1737 = vmatmul.mubr.f32.gmra.mrb[0].mxu0 %v1561
    %v1738 = vpop.f32.mrb[0].mxu0
    %v1739 = vadd.f32 %v1534, %v1738
    %v1740 = vpop.f32.mrb[0].mxu0
    %1741 = vmatprep.mubr.f32.mxu0 0.0
    %1742 = vmatmul.mubr.f32.gmra.mrb[0].mxu0 %v1564
    %v1743 = vpop.f32.mrb[0].mxu0
    %v1744 = vadd.f32 %v1534, %v1743
    %v1745 = vpop.f32.mrb[0].mxu0
    %1746 = vmatprep.mubr.f32.mxu0 0.0
    %1747 = vmatmul.mubr.f32.gmra.mrb[0].mxu0 %v1567
    %v1748 = vpop.f32.mrb[0].mxu0
    %v1749 = vadd.f32 %v1534, %v1748
    %v1750 = vpop.f32.mrb[0].mxu0
    %1751 = vmatprep.mubr.f32.mxu0 0.0
    %1752 = vmatmul.mubr.f32.gmra.mrb[0].mxu0 %v1570
    %v1753 = vpop.f32.mrb[0].mxu0
    %v1754 = vadd.f32 %v1534, %v1753
    %v1755 = vpop.f32.mrb[0].mxu0
    %1756 = vmatprep.mubr.f32.mxu0 0.0
    %1757 = vmatmul.mubr.f32.gmra.mrb[0].mxu0 %v1573
    %v1758 = vpop.f32.mrb[0].mxu0
    %v1759 = vadd.f32 %v1534, %v1758
    %v1760 = vpop.f32.mrb[0].mxu0
    %1761 = vmatprep.mubr.f32.mxu0 0.0
    %1762 = vmatmul.mubr.f32.gmra.mrb[0].mxu0 %v1576
    %v1763 = vpop.f32.mrb[0].mxu0
    %v1764 = vadd.f32 %v1534, %v1763
    %v1765 = vpop.f32.mrb[0].mxu0
    %1766 = vmatprep.mubr.f32.mxu0 0.0
    %1767 = vmatmul.mubr.f32.gmra.mrb[0].mxu0 %v1579
    %v1768 = vpop.f32.mrb[0].mxu0
    %v1769 = vadd.f32 %v1534, %v1768
    %v1770 = vpop.f32.mrb[0].mxu0
    %1771 = vmatprep.mubr.f32.mxu0 0.0
    %1772 = vmatmul.mubr.f32.gmra.mrb[0].mxu0 %v1582
    %v1773 = vpop.f32.mrb[0].mxu0
    %v1774 = vadd.f32 %v1534, %v1773
    %v1775 = vpop.f32.mrb[0].mxu0
    %1776 = vmatprep.mubr.f32.mxu0 0.0
    %1777 = vmatmul.mubr.f32.gmra.mrb[0].mxu0 %v1585
    %v1778 = vpop.f32.mrb[0].mxu0
    %v1779 = vadd.f32 %v1534, %v1778
    %v1780 = vpop.f32.mrb[0].mxu0
    %1781 = vmatprep.mubr.f32.mxu0 0.0
    %1782 = vmatmul.mubr.f32.gmra.mrb[0].mxu0 %v1588
    %v1783 = vpop.f32.mrb[0].mxu0
    %v1784 = vadd.f32 %v1534, %v1783
    %v1785 = vpop.f32.mrb[0].mxu0
    %1786 = vmatprep.mubr.f32.mxu0 0.0
    %1787 = vmatmul.mubr.f32.gmra.mrb[0].mxu0 %v1591
    %v1788 = vpop.f32.mrb[0].mxu0
    %v1789 = vadd.f32 %v1534, %v1788
    %v1790 = vpop.f32.mrb[0].mxu0
    %1791 = vmatprep.mubr.f32.mxu0 0.0
    %1792 = vmatmul.mubr.f32.gmra.mrb[0].mxu0 %v1594
    %v1793 = vpop.f32.mrb[0].mxu0
    %v1794 = vadd.f32 %v1534, %v1793
    %v1795 = vpop.f32.mrb[0].mxu0
    %1796 = vmatprep.mubr.f32.mxu0 0.0
    %1797 = vmatmul.mubr.f32.gmra.mrb[0].mxu0 %v1597
    %v1798 = vpop.f32.mrb[0].mxu0
    %v1799 = vadd.f32 %v1534, %v1798
    %v1800 = vpop.f32.mrb[0].mxu0
    %1801 = vmatprep.mubr.f32.mxu0 0.0
    %1802 = vmatmul.mubr.f32.gmra.mrb[0].mxu0 %v1600
    %v1803 = vpop.f32.mrb[0].mxu0
    %v1804 = vadd.f32 %v1534, %v1803
    %v1805 = vpop.f32.mrb[0].mxu0
    %1806 = vmatprep.mubr.f32.mxu0 0.0
    %1807 = vmatmul.mubr.f32.gmra.mrb[0].mxu0 %v1603
    %v1808 = vpop.f32.mrb[0].mxu0
    %v1809 = vadd.f32 %v1534, %v1808
    %v1810 = vpop.f32.mrb[0].mxu0
    %1811 = vmatprep.mubr.f32.mxu0 0.0
    %1812 = vmatmul.mubr.f32.gmra.mrb[0].mxu0 %v1606
    %v1813 = vpop.f32.mrb[0].mxu0
    %v1814 = vadd.f32 %v1534, %v1813
    %v1815 = vpop.f32.mrb[0].mxu0
    %1816 = vmatprep.mubr.f32.mxu0 0.0
    %1817 = vmatmul.mubr.f32.gmra.mrb[0].mxu0 %v1609
    %v1818 = vpop.f32.mrb[0].mxu0
    %v1819 = vadd.f32 %v1534, %v1818
    %v1820 = vpop.f32.mrb[0].mxu0
    %1821 = vmatprep.mubr.f32.mxu0 0.0
    %1822 = vmatmul.mubr.f32.gmra.mrb[0].mxu0 %v1612
    %v1823 = vpop.f32.mrb[0].mxu0
    %v1824 = vadd.f32 %v1534, %v1823
    %v1825 = vpop.f32.mrb[0].mxu0
    %1826 = vmatprep.mubr.f32.mxu0 0.0
    %1827 = vmatmul.mubr.f32.gmra.mrb[0].mxu0 %v1615
    %v1828 = vpop.f32.mrb[0].mxu0
    %v1829 = vadd.f32 %v1534, %v1828
    %v1830 = vpop.f32.mrb[0].mxu0
    %1831 = vmatprep.mubr.f32.mxu0 0.0
    %1832 = vmatmul.mubr.f32.gmra.mrb[0].mxu0 %v1618
    %v1833 = vpop.f32.mrb[0].mxu0
    %v1834 = vadd.f32 %v1534, %v1833
    %v1835 = vpop.f32.mrb[0].mxu0
    %1836 = vmatprep.mubr.f32.mxu0 0.0
    %1837 = vmatmul.mubr.f32.gmra.mrb[0].mxu0 %v1621
    %v1838 = vpop.f32.mrb[0].mxu0
    %v1839 = vadd.f32 %v1534, %v1838
    %v1840 = vpop.f32.mrb[0].mxu0
    %1841 = vmatprep.mubr.f32.mxu0 0.0
    %1842 = vmatmul.mubr.f32.gmra.mrb[0].mxu0 %v1624
    %v1843 = vpop.f32.mrb[0].mxu0
    %v1844 = vadd.f32 %v1534, %v1843
    %v1845 = vpop.f32.mrb[0].mxu0
    %1846 = vmatprep.mubr.f32.mxu0 0.0
    %1847 = vmatmul.mubr.f32.gmra.mrb[0].mxu0 %v1627
    %v1848 = vpop.f32.mrb[0].mxu0
    %v1849 = vadd.f32 %v1534, %v1848
    %v1850 = vpop.f32.mrb[0].mxu0
    %1851 = vmatprep.mubr.f32.mxu0 0.0
    %1852 = vmatmul.mubr.f32.gmra.mrb[0].mxu0 %v1630
    %v1853 = vpop.f32.mrb[0].mxu0
    %v1854 = vadd.f32 %v1534, %v1853
    %v1855 = vpop.f32.mrb[0].mxu0
    %1856 = vdwg.mxu0
    %v1857 = vmul.f32 %v1699, 0.01
    %v1858 = vmul.f32 %v1704, 0.01
    %v1859 = vmul.f32 %v1709, 0.01
    %v1860 = vmul.f32 %v1714, 0.01
    %v1861 = vmul.f32 %v1719, 0.01
    %v1862 = vmul.f32 %v1724, 0.01
    %v1863 = vmul.f32 %v1729, 0.01
    %v1864 = vmul.f32 %v1734, 0.01
    %v1865 = vmul.f32 %v1739, 0.01
    %v1866 = vmul.f32 %v1744, 0.01
    %v1867 = vmul.f32 %v1749, 0.01
    %v1868 = vmul.f32 %v1754, 0.01
    %v1869 = vmul.f32 %v1759, 0.01
    %v1870 = vmul.f32 %v1764, 0.01
    %v1871 = vmul.f32 %v1769, 0.01
    %v1872 = vmul.f32 %v1774, 0.01
    %v1873 = vmul.f32 %v1779, 0.01
    %v1874 = vmul.f32 %v1784, 0.01
    %v1875 = vmul.f32 %v1789, 0.01
    %v1876 = vmul.f32 %v1794, 0.01
    %v1877 = vmul.f32 %v1799, 0.01
    %v1878 = vmul.f32 %v1804, 0.01
    %v1879 = vmul.f32 %v1809, 0.01
    %v1880 = vmul.f32 %v1814, 0.01
    %v1881 = vmul.f32 %v1819, 0.01
    %v1882 = vmul.f32 %v1824, 0.01
    %v1883 = vmul.f32 %v1829, 0.01
    %v1884 = vmul.f32 %v1834, 0.01
    %v1885 = vmul.f32 %v1839, 0.01
    %v1886 = vmul.f32 %v1844, 0.01
    %v1887 = vmul.f32 %v1849, 0.01
    %v1888 = vmul.f32 %v1854, 0.01
    %v1889 = vmax.f32 %v1699, %v1857
    %v1890 = vmax.f32 %v1704, %v1858
    %v1891 = vmax.f32 %v1709, %v1859
    %v1892 = vmax.f32 %v1714, %v1860
    %v1893 = vmax.f32 %v1719, %v1861
    %v1894 = vmax.f32 %v1724, %v1862
    %v1895 = vmax.f32 %v1729, %v1863
    %v1896 = vmax.f32 %v1734, %v1864
    %v1897 = vmax.f32 %v1739, %v1865
    %v1898 = vmax.f32 %v1744, %v1866
    %v1899 = vmax.f32 %v1749, %v1867
    %v1900 = vmax.f32 %v1754, %v1868
    %v1901 = vmax.f32 %v1759, %v1869
    %v1902 = vmax.f32 %v1764, %v1870
    %v1903 = vmax.f32 %v1769, %v1871
    %v1904 = vmax.f32 %v1774, %v1872
    %v1905 = vmax.f32 %v1779, %v1873
    %v1906 = vmax.f32 %v1784, %v1874
    %v1907 = vmax.f32 %v1789, %v1875
    %v1908 = vmax.f32 %v1794, %v1876
    %v1909 = vmax.f32 %v1799, %v1877
    %v1910 = vmax.f32 %v1804, %v1878
    %v1911 = vmax.f32 %v1809, %v1879
    %v1912 = vmax.f32 %v1814, %v1880
    %v1913 = vmax.f32 %v1819, %v1881
    %v1914 = vmax.f32 %v1824, %v1882
    %v1915 = vmax.f32 %v1829, %v1883
    %v1916 = vmax.f32 %v1834, %v1884
    %v1917 = vmax.f32 %v1839, %v1885
    %v1918 = vmax.f32 %v1844, %v1886
    %v1919 = vmax.f32 %v1849, %v1887
    %v1920 = vmax.f32 %v1854, %v1888
    %s1921 = scalar_lea.vmem [#allocation2], 160
    %v1922 = vld [vmem:[%s1921] sm:$0xff]
    %v1923 = vld [vmem:[%s1921 + $0x8] sm:$0xff]
    %v1924 = vld [vmem:[%s1921 + $0x10] sm:$0xff]
    %v1925 = vld [vmem:[%s1921 + $0x18] sm:$0xff]
    %s1926 = scalar_lea.vmem %s2, 5
    %v1927 = vld [vmem:[%s1926] sm:$0x1]
    %v1929 = vlaneseq
    %v1930 = vshrl.u32 %v1929, 7
    %v1931 = vsub.s32 0, %v1930
    %v1932 = vrot.slane %v1927, %v1931
    %v1935 = vsel %vm71, %v1889, 0
    %v1938 = vsel %vm71, %v1890, 0
    %v1941 = vsel %vm71, %v1891, 0
    %v1944 = vsel %vm71, %v1892, 0
    %v1947 = vsel %vm71, %v1893, 0
    %v1950 = vsel %vm71, %v1894, 0
    %v1953 = vsel %vm71, %v1895, 0
    %v1956 = vsel %vm71, %v1896, 0
    %v1959 = vsel %vm71, %v1897, 0
    %v1962 = vsel %vm71, %v1898, 0
    %v1965 = vsel %vm71, %v1899, 0
    %v1968 = vsel %vm71, %v1900, 0
    %v1971 = vsel %vm71, %v1901, 0
    %v1974 = vsel %vm71, %v1902, 0
    %v1977 = vsel %vm71, %v1903, 0
    %v1980 = vsel %vm71, %v1904, 0
    %v1983 = vsel %vm71, %v1905, 0
    %v1986 = vsel %vm71, %v1906, 0
    %v1989 = vsel %vm71, %v1907, 0
    %v1992 = vsel %vm71, %v1908, 0
    %v1995 = vsel %vm71, %v1909, 0
    %v1998 = vsel %vm71, %v1910, 0
    %v2001 = vsel %vm71, %v1911, 0
    %v2004 = vsel %vm71, %v1912, 0
    %v2007 = vsel %vm71, %v1913, 0
    %v2010 = vsel %vm71, %v1914, 0
    %v2013 = vsel %vm71, %v1915, 0
    %v2016 = vsel %vm71, %v1916, 0
    %v2019 = vsel %vm71, %v1917, 0
    %v2022 = vsel %vm71, %v1918, 0
    %v2025 = vsel %vm71, %v1919, 0
    %v2028 = vsel %vm71, %v1920, 0
    %2030 = vmatprep.subr.mxu0 0.0
    %2031 = vmatpush1.msra.mxu0 %v1922
    %2032 = vmatprep.subr.mxu0 0.0
    %2033 = vmatpush1.msra.mxu0 %v1923
    %2034 = vmatprep.subr.mxu0 0.0
    %2035 = vmatpush1.msra.mxu0 %v1924
    %2036 = vmatprep.subr.mxu0 0.0
    %2037 = vmatpush1.msra.mxu0 %v1925
    %2038 = vmatprep.subr.mxu0 0.0
    %2039 = vmatpush1.msra.mxu0 0.0
    %2040 = vmatprep.subr.mxu0 0.0
    %2041 = vmatpush1.msra.mxu0 0.0
    %2042 = vmatprep.subr.mxu0 0.0
    %2043 = vmatpush1.msra.mxu0 0.0
    %2044 = vmatprep.subr.mxu0 0.0
    %2045 = vmatpush1.msra.mxu0 0.0
    %2046 = vmatprep.subr.mxu0 0.0
    %2047 = vmatpush1.msra.mxu0 0.0
    %2048 = vmatprep.subr.mxu0 0.0
    %2049 = vmatpush1.msra.mxu0 0.0
    %2050 = vmatprep.subr.mxu0 0.0
    %2051 = vmatpush1.msra.mxu0 0.0
    %2052 = vmatprep.subr.mxu0 0.0
    %2053 = vmatpush1.msra.mxu0 0.0
    %2054 = vmatprep.subr.mxu0 0.0
    %2055 = vmatpush1.msra.mxu0 0.0
    %2056 = vmatprep.subr.mxu0 0.0
    %2057 = vmatpush1.msra.mxu0 0.0
    %2058 = vmatprep.subr.mxu0 0.0
    %2059 = vmatpush1.msra.mxu0 0.0
    %2060 = vmatprep.subr.mxu0 0.0
    %2061 = vmatpush1.msra.mxu0 0.0
    %2062 = vmatprep.subr.mxu0 0.0
    %2063 = vmatpush1.msra.mxu0 0.0
    %2064 = vmatprep.subr.mxu0 0.0
    %2065 = vmatpush1.msra.mxu0 0.0
    %2066 = vmatprep.subr.mxu0 0.0
    %2067 = vmatpush1.msra.mxu0 0.0
    %2068 = vmatprep.subr.mxu0 0.0
    %2069 = vmatpush1.msra.mxu0 0.0
    %2070 = vmatprep.subr.mxu0 0.0
    %2071 = vmatpush1.msra.mxu0 0.0
    %2072 = vmatprep.subr.mxu0 0.0
    %2073 = vmatpush1.msra.mxu0 0.0
    %2074 = vmatprep.subr.mxu0 0.0
    %2075 = vmatpush1.msra.mxu0 0.0
    %2076 = vmatprep.subr.mxu0 0.0
    %2077 = vmatpush1.msra.mxu0 0.0
    %2078 = vmatprep.subr.mxu0 0.0
    %2079 = vmatpush1.msra.mxu0 0.0
    %2080 = vmatprep.subr.mxu0 0.0
    %2081 = vmatpush1.msra.mxu0 0.0
    %2082 = vmatprep.subr.mxu0 0.0
    %2083 = vmatpush1.msra.mxu0 0.0
    %2084 = vmatprep.subr.mxu0 0.0
    %2085 = vmatpush1.msra.mxu0 0.0
    %2086 = vmatprep.subr.mxu0 0.0
    %2087 = vmatpush1.msra.mxu0 0.0
    %2088 = vmatprep.subr.mxu0 0.0
    %2089 = vmatpush1.msra.mxu0 0.0
    %2090 = vmatprep.subr.mxu0 0.0
    %2091 = vmatpush1.msra.mxu0 0.0
    %2092 = vmatprep.subr.mxu0 0.0
    %2093 = vmatpush1.msra.mxu0 0.0
    %2094 = vmatprep.mubr.f32.mxu0 0.0
    %2095 = vmatmul.mubr.f32.gmra.mrb[0].mxu0 %v1935
    %v2096 = vpop.f32.mrb[0].mxu0
    %v2097 = vadd.f32 %v1932, %v2096
    %v2098 = vpop.f32.mrb[0].mxu0
    %2099 = vmatprep.mubr.f32.mxu0 0.0
    %2100 = vmatmul.mubr.f32.gmra.mrb[0].mxu0 %v1938
    %v2101 = vpop.f32.mrb[0].mxu0
    %v2102 = vadd.f32 %v1932, %v2101
    %v2103 = vpop.f32.mrb[0].mxu0
    %2104 = vmatprep.mubr.f32.mxu0 0.0
    %2105 = vmatmul.mubr.f32.gmra.mrb[0].mxu0 %v1941
    %v2106 = vpop.f32.mrb[0].mxu0
    %v2107 = vadd.f32 %v1932, %v2106
    %v2108 = vpop.f32.mrb[0].mxu0
    %2109 = vmatprep.mubr.f32.mxu0 0.0
    %2110 = vmatmul.mubr.f32.gmra.mrb[0].mxu0 %v1944
    %v2111 = vpop.f32.mrb[0].mxu0
    %v2112 = vadd.f32 %v1932, %v2111
    %v2113 = vpop.f32.mrb[0].mxu0
    %2114 = vmatprep.mubr.f32.mxu0 0.0
    %2115 = vmatmul.mubr.f32.gmra.mrb[0].mxu0 %v1947
    %v2116 = vpop.f32.mrb[0].mxu0
    %v2117 = vadd.f32 %v1932, %v2116
    %v2118 = vpop.f32.mrb[0].mxu0
    %2119 = vmatprep.mubr.f32.mxu0 0.0
    %2120 = vmatmul.mubr.f32.gmra.mrb[0].mxu0 %v1950
    %v2121 = vpop.f32.mrb[0].mxu0
    %v2122 = vadd.f32 %v1932, %v2121
    %v2123 = vpop.f32.mrb[0].mxu0
    %2124 = vmatprep.mubr.f32.mxu0 0.0
    %2125 = vmatmul.mubr.f32.gmra.mrb[0].mxu0 %v1953
    %v2126 = vpop.f32.mrb[0].mxu0
    %v2127 = vadd.f32 %v1932, %v2126
    %v2128 = vpop.f32.mrb[0].mxu0
    %2129 = vmatprep.mubr.f32.mxu0 0.0
    %2130 = vmatmul.mubr.f32.gmra.mrb[0].mxu0 %v1956
    %v2131 = vpop.f32.mrb[0].mxu0
    %v2132 = vadd.f32 %v1932, %v2131
    %v2133 = vpop.f32.mrb[0].mxu0
    %2134 = vmatprep.mubr.f32.mxu0 0.0
    %2135 = vmatmul.mubr.f32.gmra.mrb[0].mxu0 %v1959
    %v2136 = vpop.f32.mrb[0].mxu0
    %v2137 = vadd.f32 %v1932, %v2136
    %v2138 = vpop.f32.mrb[0].mxu0
    %2139 = vmatprep.mubr.f32.mxu0 0.0
    %2140 = vmatmul.mubr.f32.gmra.mrb[0].mxu0 %v1962
    %v2141 = vpop.f32.mrb[0].mxu0
    %v2142 = vadd.f32 %v1932, %v2141
    %v2143 = vpop.f32.mrb[0].mxu0
    %2144 = vmatprep.mubr.f32.mxu0 0.0
    %2145 = vmatmul.mubr.f32.gmra.mrb[0].mxu0 %v1965
    %v2146 = vpop.f32.mrb[0].mxu0
    %v2147 = vadd.f32 %v1932, %v2146
    %v2148 = vpop.f32.mrb[0].mxu0
    %2149 = vmatprep.mubr.f32.mxu0 0.0
    %2150 = vmatmul.mubr.f32.gmra.mrb[0].mxu0 %v1968
    %v2151 = vpop.f32.mrb[0].mxu0
    %v2152 = vadd.f32 %v1932, %v2151
    %v2153 = vpop.f32.mrb[0].mxu0
    %2154 = vmatprep.mubr.f32.mxu0 0.0
    %2155 = vmatmul.mubr.f32.gmra.mrb[0].mxu0 %v1971
    %v2156 = vpop.f32.mrb[0].mxu0
    %v2157 = vadd.f32 %v1932, %v2156
    %v2158 = vpop.f32.mrb[0].mxu0
    %2159 = vmatprep.mubr.f32.mxu0 0.0
    %2160 = vmatmul.mubr.f32.gmra.mrb[0].mxu0 %v1974
    %v2161 = vpop.f32.mrb[0].mxu0
    %v2162 = vadd.f32 %v1932, %v2161
    %v2163 = vpop.f32.mrb[0].mxu0
    %2164 = vmatprep.mubr.f32.mxu0 0.0
    %2165 = vmatmul.mubr.f32.gmra.mrb[0].mxu0 %v1977
    %v2166 = vpop.f32.mrb[0].mxu0
    %v2167 = vadd.f32 %v1932, %v2166
    %v2168 = vpop.f32.mrb[0].mxu0
    %2169 = vmatprep.mubr.f32.mxu0 0.0
    %2170 = vmatmul.mubr.f32.gmra.mrb[0].mxu0 %v1980
    %v2171 = vpop.f32.mrb[0].mxu0
    %v2172 = vadd.f32 %v1932, %v2171
    %v2173 = vpop.f32.mrb[0].mxu0
    %2174 = vmatprep.mubr.f32.mxu0 0.0
    %2175 = vmatmul.mubr.f32.gmra.mrb[0].mxu0 %v1983
    %v2176 = vpop.f32.mrb[0].mxu0
    %v2177 = vadd.f32 %v1932, %v2176
    %v2178 = vpop.f32.mrb[0].mxu0
    %2179 = vmatprep.mubr.f32.mxu0 0.0
    %2180 = vmatmul.mubr.f32.gmra.mrb[0].mxu0 %v1986
    %v2181 = vpop.f32.mrb[0].mxu0
    %v2182 = vadd.f32 %v1932, %v2181
    %v2183 = vpop.f32.mrb[0].mxu0
    %2184 = vmatprep.mubr.f32.mxu0 0.0
    %2185 = vmatmul.mubr.f32.gmra.mrb[0].mxu0 %v1989
    %v2186 = vpop.f32.mrb[0].mxu0
    %v2187 = vadd.f32 %v1932, %v2186
    %v2188 = vpop.f32.mrb[0].mxu0
    %2189 = vmatprep.mubr.f32.mxu0 0.0
    %2190 = vmatmul.mubr.f32.gmra.mrb[0].mxu0 %v1992
    %v2191 = vpop.f32.mrb[0].mxu0
    %v2192 = vadd.f32 %v1932, %v2191
    %v2193 = vpop.f32.mrb[0].mxu0
    %2194 = vmatprep.mubr.f32.mxu0 0.0
    %2195 = vmatmul.mubr.f32.gmra.mrb[0].mxu0 %v1995
    %v2196 = vpop.f32.mrb[0].mxu0
    %v2197 = vadd.f32 %v1932, %v2196
    %v2198 = vpop.f32.mrb[0].mxu0
    %2199 = vmatprep.mubr.f32.mxu0 0.0
    %2200 = vmatmul.mubr.f32.gmra.mrb[0].mxu0 %v1998
    %v2201 = vpop.f32.mrb[0].mxu0
    %v2202 = vadd.f32 %v1932, %v2201
    %v2203 = vpop.f32.mrb[0].mxu0
    %2204 = vmatprep.mubr.f32.mxu0 0.0
    %2205 = vmatmul.mubr.f32.gmra.mrb[0].mxu0 %v2001
    %v2206 = vpop.f32.mrb[0].mxu0
    %v2207 = vadd.f32 %v1932, %v2206
    %v2208 = vpop.f32.mrb[0].mxu0
    %2209 = vmatprep.mubr.f32.mxu0 0.0
    %2210 = vmatmul.mubr.f32.gmra.mrb[0].mxu0 %v2004
    %v2211 = vpop.f32.mrb[0].mxu0
    %v2212 = vadd.f32 %v1932, %v2211
    %v2213 = vpop.f32.mrb[0].mxu0
    %2214 = vmatprep.mubr.f32.mxu0 0.0
    %2215 = vmatmul.mubr.f32.gmra.mrb[0].mxu0 %v2007
    %v2216 = vpop.f32.mrb[0].mxu0
    %v2217 = vadd.f32 %v1932, %v2216
    %v2218 = vpop.f32.mrb[0].mxu0
    %2219 = vmatprep.mubr.f32.mxu0 0.0
    %2220 = vmatmul.mubr.f32.gmra.mrb[0].mxu0 %v2010
    %v2221 = vpop.f32.mrb[0].mxu0
    %v2222 = vadd.f32 %v1932, %v2221
    %v2223 = vpop.f32.mrb[0].mxu0
    %2224 = vmatprep.mubr.f32.mxu0 0.0
    %2225 = vmatmul.mubr.f32.gmra.mrb[0].mxu0 %v2013
    %v2226 = vpop.f32.mrb[0].mxu0
    %v2227 = vadd.f32 %v1932, %v2226
    %v2228 = vpop.f32.mrb[0].mxu0
    %2229 = vmatprep.mubr.f32.mxu0 0.0
    %2230 = vmatmul.mubr.f32.gmra.mrb[0].mxu0 %v2016
    %v2231 = vpop.f32.mrb[0].mxu0
    %v2232 = vadd.f32 %v1932, %v2231
    %v2233 = vpop.f32.mrb[0].mxu0
    %2234 = vmatprep.mubr.f32.mxu0 0.0
    %2235 = vmatmul.mubr.f32.gmra.mrb[0].mxu0 %v2019
    %v2236 = vpop.f32.mrb[0].mxu0
    %v2237 = vadd.f32 %v1932, %v2236
    %v2238 = vpop.f32.mrb[0].mxu0
    %2239 = vmatprep.mubr.f32.mxu0 0.0
    %2240 = vmatmul.mubr.f32.gmra.mrb[0].mxu0 %v2022
    %v2241 = vpop.f32.mrb[0].mxu0
    %v2242 = vadd.f32 %v1932, %v2241
    %v2243 = vpop.f32.mrb[0].mxu0
    %2244 = vmatprep.mubr.f32.mxu0 0.0
    %2245 = vmatmul.mubr.f32.gmra.mrb[0].mxu0 %v2025
    %v2246 = vpop.f32.mrb[0].mxu0
    %v2247 = vadd.f32 %v1932, %v2246
    %v2248 = vpop.f32.mrb[0].mxu0
    %2249 = vmatprep.mubr.f32.mxu0 0.0
    %2250 = vmatmul.mubr.f32.gmra.mrb[0].mxu0 %v2028
    %v2251 = vpop.f32.mrb[0].mxu0
    %v2252 = vadd.f32 %v1932, %v2251
    %v2253 = vpop.f32.mrb[0].mxu0
    %2254 = vdwg.mxu0
    %s2255 = scalar_lea.vmem [#allocation2], 192
    %v2256 = vld [vmem:[%s2255] sm:$0xff]
    %v2257 = vld [vmem:[%s2255 + $0x8] sm:$0xff]
    %v2258 = vld [vmem:[%s2255 + $0x10] sm:$0xff]
    %v2259 = vld [vmem:[%s2255 + $0x18] sm:$0xff]
    %s2260 = scalar_lea.vmem %s2, 6
    %v2261 = vld [vmem:[%s2260] sm:$0x1]
    %v2263 = vlaneseq
    %v2264 = vshrl.u32 %v2263, 7
    %v2265 = vsub.s32 0, %v2264
    %v2266 = vrot.slane %v2261, %v2265
    %v2269 = vsel %vm71, %v2097, 0
    %v2272 = vsel %vm71, %v2102, 0
    %v2275 = vsel %vm71, %v2107, 0
    %v2278 = vsel %vm71, %v2112, 0
    %v2281 = vsel %vm71, %v2117, 0
    %v2284 = vsel %vm71, %v2122, 0
    %v2287 = vsel %vm71, %v2127, 0
    %v2290 = vsel %vm71, %v2132, 0
    %v2293 = vsel %vm71, %v2137, 0
    %v2296 = vsel %vm71, %v2142, 0
    %v2299 = vsel %vm71, %v2147, 0
    %v2302 = vsel %vm71, %v2152, 0
    %v2305 = vsel %vm71, %v2157, 0
    %v2308 = vsel %vm71, %v2162, 0
    %v2311 = vsel %vm71, %v2167, 0
    %v2314 = vsel %vm71, %v2172, 0
    %v2317 = vsel %vm71, %v2177, 0
    %v2320 = vsel %vm71, %v2182, 0
    %v2323 = vsel %vm71, %v2187, 0
    %v2326 = vsel %vm71, %v2192, 0
    %v2329 = vsel %vm71, %v2197, 0
    %v2332 = vsel %vm71, %v2202, 0
    %v2335 = vsel %vm71, %v2207, 0
    %v2338 = vsel %vm71, %v2212, 0
    %v2341 = vsel %vm71, %v2217, 0
    %v2344 = vsel %vm71, %v2222, 0
    %v2347 = vsel %vm71, %v2227, 0
    %v2350 = vsel %vm71, %v2232, 0
    %v2353 = vsel %vm71, %v2237, 0
    %v2356 = vsel %vm71, %v2242, 0
    %v2359 = vsel %vm71, %v2247, 0
    %v2362 = vsel %vm71, %v2252, 0
    %2364 = vmatprep.subr.mxu0 0.0
    %2365 = vmatpush1.msra.mxu0 %v2256
    %2366 = vmatprep.subr.mxu0 0.0
    %2367 = vmatpush1.msra.mxu0 %v2257
    %2368 = vmatprep.subr.mxu0 0.0
    %2369 = vmatpush1.msra.mxu0 %v2258
    %2370 = vmatprep.subr.mxu0 0.0
    %2371 = vmatpush1.msra.mxu0 %v2259
    %2372 = vmatprep.subr.mxu0 0.0
    %2373 = vmatpush1.msra.mxu0 0.0
    %2374 = vmatprep.subr.mxu0 0.0
    %2375 = vmatpush1.msra.mxu0 0.0
    %2376 = vmatprep.subr.mxu0 0.0
    %2377 = vmatpush1.msra.mxu0 0.0
    %2378 = vmatprep.subr.mxu0 0.0
    %2379 = vmatpush1.msra.mxu0 0.0
    %2380 = vmatprep.subr.mxu0 0.0
    %2381 = vmatpush1.msra.mxu0 0.0
    %2382 = vmatprep.subr.mxu0 0.0
    %2383 = vmatpush1.msra.mxu0 0.0
    %2384 = vmatprep.subr.mxu0 0.0
    %2385 = vmatpush1.msra.mxu0 0.0
    %2386 = vmatprep.subr.mxu0 0.0
    %2387 = vmatpush1.msra.mxu0 0.0
    %2388 = vmatprep.subr.mxu0 0.0
    %2389 = vmatpush1.msra.mxu0 0.0
    %2390 = vmatprep.subr.mxu0 0.0
    %2391 = vmatpush1.msra.mxu0 0.0
    %2392 = vmatprep.subr.mxu0 0.0
    %2393 = vmatpush1.msra.mxu0 0.0
    %2394 = vmatprep.subr.mxu0 0.0
    %2395 = vmatpush1.msra.mxu0 0.0
    %2396 = vmatprep.subr.mxu0 0.0
    %2397 = vmatpush1.msra.mxu0 0.0
    %2398 = vmatprep.subr.mxu0 0.0
    %2399 = vmatpush1.msra.mxu0 0.0
    %2400 = vmatprep.subr.mxu0 0.0
    %2401 = vmatpush1.msra.mxu0 0.0
    %2402 = vmatprep.subr.mxu0 0.0
    %2403 = vmatpush1.msra.mxu0 0.0
    %2404 = vmatprep.subr.mxu0 0.0
    %2405 = vmatpush1.msra.mxu0 0.0
    %2406 = vmatprep.subr.mxu0 0.0
    %2407 = vmatpush1.msra.mxu0 0.0
    %2408 = vmatprep.subr.mxu0 0.0
    %2409 = vmatpush1.msra.mxu0 0.0
    %2410 = vmatprep.subr.mxu0 0.0
    %2411 = vmatpush1.msra.mxu0 0.0
    %2412 = vmatprep.subr.mxu0 0.0
    %2413 = vmatpush1.msra.mxu0 0.0
    %2414 = vmatprep.subr.mxu0 0.0
    %2415 = vmatpush1.msra.mxu0 0.0
    %2416 = vmatprep.subr.mxu0 0.0
    %2417 = vmatpush1.msra.mxu0 0.0
    %2418 = vmatprep.subr.mxu0 0.0
    %2419 = vmatpush1.msra.mxu0 0.0
    %2420 = vmatprep.subr.mxu0 0.0
    %2421 = vmatpush1.msra.mxu0 0.0
    %2422 = vmatprep.subr.mxu0 0.0
    %2423 = vmatpush1.msra.mxu0 0.0
    %2424 = vmatprep.subr.mxu0 0.0
    %2425 = vmatpush1.msra.mxu0 0.0
    %2426 = vmatprep.subr.mxu0 0.0
    %2427 = vmatpush1.msra.mxu0 0.0
    %2428 = vmatprep.mubr.f32.mxu0 0.0
    %2429 = vmatmul.mubr.f32.gmra.mrb[0].mxu0 %v2269
    %v2430 = vpop.f32.mrb[0].mxu0
    %v2431 = vadd.f32 %v2266, %v2430
    %v2432 = vpop.f32.mrb[0].mxu0
    %2433 = vmatprep.mubr.f32.mxu0 0.0
    %2434 = vmatmul.mubr.f32.gmra.mrb[0].mxu0 %v2272
    %v2435 = vpop.f32.mrb[0].mxu0
    %v2436 = vadd.f32 %v2266, %v2435
    %v2437 = vpop.f32.mrb[0].mxu0
    %2438 = vmatprep.mubr.f32.mxu0 0.0
    %2439 = vmatmul.mubr.f32.gmra.mrb[0].mxu0 %v2275
    %v2440 = vpop.f32.mrb[0].mxu0
    %v2441 = vadd.f32 %v2266, %v2440
    %v2442 = vpop.f32.mrb[0].mxu0
    %2443 = vmatprep.mubr.f32.mxu0 0.0
    %2444 = vmatmul.mubr.f32.gmra.mrb[0].mxu0 %v2278
    %v2445 = vpop.f32.mrb[0].mxu0
    %v2446 = vadd.f32 %v2266, %v2445
    %v2447 = vpop.f32.mrb[0].mxu0
    %2448 = vmatprep.mubr.f32.mxu0 0.0
    %2449 = vmatmul.mubr.f32.gmra.mrb[0].mxu0 %v2281
    %v2450 = vpop.f32.mrb[0].mxu0
    %v2451 = vadd.f32 %v2266, %v2450
    %v2452 = vpop.f32.mrb[0].mxu0
    %2453 = vmatprep.mubr.f32.mxu0 0.0
    %2454 = vmatmul.mubr.f32.gmra.mrb[0].mxu0 %v2284
    %v2455 = vpop.f32.mrb[0].mxu0
    %v2456 = vadd.f32 %v2266, %v2455
    %v2457 = vpop.f32.mrb[0].mxu0
    %2458 = vmatprep.mubr.f32.mxu0 0.0
    %2459 = vmatmul.mubr.f32.gmra.mrb[0].mxu0 %v2287
    %v2460 = vpop.f32.mrb[0].mxu0
    %v2461 = vadd.f32 %v2266, %v2460
    %v2462 = vpop.f32.mrb[0].mxu0
    %2463 = vmatprep.mubr.f32.mxu0 0.0
    %2464 = vmatmul.mubr.f32.gmra.mrb[0].mxu0 %v2290
    %v2465 = vpop.f32.mrb[0].mxu0
    %v2466 = vadd.f32 %v2266, %v2465
    %v2467 = vpop.f32.mrb[0].mxu0
    %2468 = vmatprep.mubr.f32.mxu0 0.0
    %2469 = vmatmul.mubr.f32.gmra.mrb[0].mxu0 %v2293
    %v2470 = vpop.f32.mrb[0].mxu0
    %v2471 = vadd.f32 %v2266, %v2470
    %v2472 = vpop.f32.mrb[0].mxu0
    %2473 = vmatprep.mubr.f32.mxu0 0.0
    %2474 = vmatmul.mubr.f32.gmra.mrb[0].mxu0 %v2296
    %v2475 = vpop.f32.mrb[0].mxu0
    %v2476 = vadd.f32 %v2266, %v2475
    %v2477 = vpop.f32.mrb[0].mxu0
    %2478 = vmatprep.mubr.f32.mxu0 0.0
    %2479 = vmatmul.mubr.f32.gmra.mrb[0].mxu0 %v2299
    %v2480 = vpop.f32.mrb[0].mxu0
    %v2481 = vadd.f32 %v2266, %v2480
    %v2482 = vpop.f32.mrb[0].mxu0
    %2483 = vmatprep.mubr.f32.mxu0 0.0
    %2484 = vmatmul.mubr.f32.gmra.mrb[0].mxu0 %v2302
    %v2485 = vpop.f32.mrb[0].mxu0
    %v2486 = vadd.f32 %v2266, %v2485
    %v2487 = vpop.f32.mrb[0].mxu0
    %2488 = vmatprep.mubr.f32.mxu0 0.0
    %2489 = vmatmul.mubr.f32.gmra.mrb[0].mxu0 %v2305
    %v2490 = vpop.f32.mrb[0].mxu0
    %v2491 = vadd.f32 %v2266, %v2490
    %v2492 = vpop.f32.mrb[0].mxu0
    %2493 = vmatprep.mubr.f32.mxu0 0.0
    %2494 = vmatmul.mubr.f32.gmra.mrb[0].mxu0 %v2308
    %v2495 = vpop.f32.mrb[0].mxu0
    %v2496 = vadd.f32 %v2266, %v2495
    %v2497 = vpop.f32.mrb[0].mxu0
    %2498 = vmatprep.mubr.f32.mxu0 0.0
    %2499 = vmatmul.mubr.f32.gmra.mrb[0].mxu0 %v2311
    %v2500 = vpop.f32.mrb[0].mxu0
    %v2501 = vadd.f32 %v2266, %v2500
    %v2502 = vpop.f32.mrb[0].mxu0
    %2503 = vmatprep.mubr.f32.mxu0 0.0
    %2504 = vmatmul.mubr.f32.gmra.mrb[0].mxu0 %v2314
    %v2505 = vpop.f32.mrb[0].mxu0
    %v2506 = vadd.f32 %v2266, %v2505
    %v2507 = vpop.f32.mrb[0].mxu0
    %2508 = vmatprep.mubr.f32.mxu0 0.0
    %2509 = vmatmul.mubr.f32.gmra.mrb[0].mxu0 %v2317
    %v2510 = vpop.f32.mrb[0].mxu0
    %v2511 = vadd.f32 %v2266, %v2510
    %v2512 = vpop.f32.mrb[0].mxu0
    %2513 = vmatprep.mubr.f32.mxu0 0.0
    %2514 = vmatmul.mubr.f32.gmra.mrb[0].mxu0 %v2320
    %v2515 = vpop.f32.mrb[0].mxu0
    %v2516 = vadd.f32 %v2266, %v2515
    %v2517 = vpop.f32.mrb[0].mxu0
    %2518 = vmatprep.mubr.f32.mxu0 0.0
    %2519 = vmatmul.mubr.f32.gmra.mrb[0].mxu0 %v2323
    %v2520 = vpop.f32.mrb[0].mxu0
    %v2521 = vadd.f32 %v2266, %v2520
    %v2522 = vpop.f32.mrb[0].mxu0
    %2523 = vmatprep.mubr.f32.mxu0 0.0
    %2524 = vmatmul.mubr.f32.gmra.mrb[0].mxu0 %v2326
    %v2525 = vpop.f32.mrb[0].mxu0
    %v2526 = vadd.f32 %v2266, %v2525
    %v2527 = vpop.f32.mrb[0].mxu0
    %2528 = vmatprep.mubr.f32.mxu0 0.0
    %2529 = vmatmul.mubr.f32.gmra.mrb[0].mxu0 %v2329
    %v2530 = vpop.f32.mrb[0].mxu0
    %v2531 = vadd.f32 %v2266, %v2530
    %v2532 = vpop.f32.mrb[0].mxu0
    %2533 = vmatprep.mubr.f32.mxu0 0.0
    %2534 = vmatmul.mubr.f32.gmra.mrb[0].mxu0 %v2332
    %v2535 = vpop.f32.mrb[0].mxu0
    %v2536 = vadd.f32 %v2266, %v2535
    %v2537 = vpop.f32.mrb[0].mxu0
    %2538 = vmatprep.mubr.f32.mxu0 0.0
    %2539 = vmatmul.mubr.f32.gmra.mrb[0].mxu0 %v2335
    %v2540 = vpop.f32.mrb[0].mxu0
    %v2541 = vadd.f32 %v2266, %v2540
    %v2542 = vpop.f32.mrb[0].mxu0
    %2543 = vmatprep.mubr.f32.mxu0 0.0
    %2544 = vmatmul.mubr.f32.gmra.mrb[0].mxu0 %v2338
    %v2545 = vpop.f32.mrb[0].mxu0
    %v2546 = vadd.f32 %v2266, %v2545
    %v2547 = vpop.f32.mrb[0].mxu0
    %2548 = vmatprep.mubr.f32.mxu0 0.0
    %2549 = vmatmul.mubr.f32.gmra.mrb[0].mxu0 %v2341
    %v2550 = vpop.f32.mrb[0].mxu0
    %v2551 = vadd.f32 %v2266, %v2550
    %v2552 = vpop.f32.mrb[0].mxu0
    %2553 = vmatprep.mubr.f32.mxu0 0.0
    %2554 = vmatmul.mubr.f32.gmra.mrb[0].mxu0 %v2344
    %v2555 = vpop.f32.mrb[0].mxu0
    %v2556 = vadd.f32 %v2266, %v2555
    %v2557 = vpop.f32.mrb[0].mxu0
    %2558 = vmatprep.mubr.f32.mxu0 0.0
    %2559 = vmatmul.mubr.f32.gmra.mrb[0].mxu0 %v2347
    %v2560 = vpop.f32.mrb[0].mxu0
    %v2561 = vadd.f32 %v2266, %v2560
    %v2562 = vpop.f32.mrb[0].mxu0
    %2563 = vmatprep.mubr.f32.mxu0 0.0
    %2564 = vmatmul.mubr.f32.gmra.mrb[0].mxu0 %v2350
    %v2565 = vpop.f32.mrb[0].mxu0
    %v2566 = vadd.f32 %v2266, %v2565
    %v2567 = vpop.f32.mrb[0].mxu0
    %2568 = vmatprep.mubr.f32.mxu0 0.0
    %2569 = vmatmul.mubr.f32.gmra.mrb[0].mxu0 %v2353
    %v2570 = vpop.f32.mrb[0].mxu0
    %v2571 = vadd.f32 %v2266, %v2570
    %v2572 = vpop.f32.mrb[0].mxu0
    %2573 = vmatprep.mubr.f32.mxu0 0.0
    %2574 = vmatmul.mubr.f32.gmra.mrb[0].mxu0 %v2356
    %v2575 = vpop.f32.mrb[0].mxu0
    %v2576 = vadd.f32 %v2266, %v2575
    %v2577 = vpop.f32.mrb[0].mxu0
    %2578 = vmatprep.mubr.f32.mxu0 0.0
    %2579 = vmatmul.mubr.f32.gmra.mrb[0].mxu0 %v2359
    %v2580 = vpop.f32.mrb[0].mxu0
    %v2581 = vadd.f32 %v2266, %v2580
    %v2582 = vpop.f32.mrb[0].mxu0
    %2583 = vmatprep.mubr.f32.mxu0 0.0
    %2584 = vmatmul.mubr.f32.gmra.mrb[0].mxu0 %v2362
    %v2585 = vpop.f32.mrb[0].mxu0
    %v2586 = vadd.f32 %v2266, %v2585
    %v2587 = vpop.f32.mrb[0].mxu0
    %2588 = vdwg.mxu0
    %v2589 = vmax.f32 %v2431, 0.0
    %v2590 = vmax.f32 %v2436, 0.0
    %v2591 = vmax.f32 %v2441, 0.0
    %v2592 = vmax.f32 %v2446, 0.0
    %v2593 = vmax.f32 %v2451, 0.0
    %v2594 = vmax.f32 %v2456, 0.0
    %v2595 = vmax.f32 %v2461, 0.0
    %v2596 = vmax.f32 %v2466, 0.0
    %v2597 = vmax.f32 %v2471, 0.0
    %v2598 = vmax.f32 %v2476, 0.0
    %v2599 = vmax.f32 %v2481, 0.0
    %v2600 = vmax.f32 %v2486, 0.0
    %v2601 = vmax.f32 %v2491, 0.0
    %v2602 = vmax.f32 %v2496, 0.0
    %v2603 = vmax.f32 %v2501, 0.0
    %v2604 = vmax.f32 %v2506, 0.0
    %v2605 = vmax.f32 %v2511, 0.0
    %v2606 = vmax.f32 %v2516, 0.0
    %v2607 = vmax.f32 %v2521, 0.0
    %v2608 = vmax.f32 %v2526, 0.0
    %v2609 = vmax.f32 %v2531, 0.0
    %v2610 = vmax.f32 %v2536, 0.0
    %v2611 = vmax.f32 %v2541, 0.0
    %v2612 = vmax.f32 %v2546, 0.0
    %v2613 = vmax.f32 %v2551, 0.0
    %v2614 = vmax.f32 %v2556, 0.0
    %v2615 = vmax.f32 %v2561, 0.0
    %v2616 = vmax.f32 %v2566, 0.0
    %v2617 = vmax.f32 %v2571, 0.0
    %v2618 = vmax.f32 %v2576, 0.0
    %v2619 = vmax.f32 %v2581, 0.0
    %v2620 = vmax.f32 %v2586, 0.0
    %s2621 = scalar_lea.vmem [#allocation2], 224
    %v2622 = vld [vmem:[%s2621] sm:$0xff]
    %v2623 = vld [vmem:[%s2621 + $0x8] sm:$0xff]
    %v2624 = vld [vmem:[%s2621 + $0x10] sm:$0xff]
    %v2625 = vld [vmem:[%s2621 + $0x18] sm:$0xff]
    %s2626 = scalar_lea.vmem %s2, 7
    %v2627 = vld [vmem:[%s2626] sm:$0x1]
    %v2629 = vlaneseq
    %v2630 = vshrl.u32 %v2629, 7
    %v2631 = vsub.s32 0, %v2630
    %v2632 = vrot.slane %v2627, %v2631
    %v2635 = vsel %vm71, %v2589, 0
    %v2638 = vsel %vm71, %v2590, 0
    %v2641 = vsel %vm71, %v2591, 0
    %v2644 = vsel %vm71, %v2592, 0
    %v2647 = vsel %vm71, %v2593, 0
    %v2650 = vsel %vm71, %v2594, 0
    %v2653 = vsel %vm71, %v2595, 0
    %v2656 = vsel %vm71, %v2596, 0
    %v2659 = vsel %vm71, %v2597, 0
    %v2662 = vsel %vm71, %v2598, 0
    %v2665 = vsel %vm71, %v2599, 0
    %v2668 = vsel %vm71, %v2600, 0
    %v2671 = vsel %vm71, %v2601, 0
    %v2674 = vsel %vm71, %v2602, 0
    %v2677 = vsel %vm71, %v2603, 0
    %v2680 = vsel %vm71, %v2604, 0
    %v2683 = vsel %vm71, %v2605, 0
    %v2686 = vsel %vm71, %v2606, 0
    %v2689 = vsel %vm71, %v2607, 0
    %v2692 = vsel %vm71, %v2608, 0
    %v2695 = vsel %vm71, %v2609, 0
    %v2698 = vsel %vm71, %v2610, 0
    %v2701 = vsel %vm71, %v2611, 0
    %v2704 = vsel %vm71, %v2612, 0
    %v2707 = vsel %vm71, %v2613, 0
    %v2710 = vsel %vm71, %v2614, 0
    %v2713 = vsel %vm71, %v2615, 0
    %v2716 = vsel %vm71, %v2616, 0
    %v2719 = vsel %vm71, %v2617, 0
    %v2722 = vsel %vm71, %v2618, 0
    %v2725 = vsel %vm71, %v2619, 0
    %v2728 = vsel %vm71, %v2620, 0
    %2730 = vmatprep.subr.mxu0 0.0
    %2731 = vmatpush1.msra.mxu0 %v2622
    %2732 = vmatprep.subr.mxu0 0.0
    %2733 = vmatpush1.msra.mxu0 %v2623
    %2734 = vmatprep.subr.mxu0 0.0
    %2735 = vmatpush1.msra.mxu0 %v2624
    %2736 = vmatprep.subr.mxu0 0.0
    %2737 = vmatpush1.msra.mxu0 %v2625
    %2738 = vmatprep.subr.mxu0 0.0
    %2739 = vmatpush1.msra.mxu0 0.0
    %2740 = vmatprep.subr.mxu0 0.0
    %2741 = vmatpush1.msra.mxu0 0.0
    %2742 = vmatprep.subr.mxu0 0.0
    %2743 = vmatpush1.msra.mxu0 0.0
    %2744 = vmatprep.subr.mxu0 0.0
    %2745 = vmatpush1.msra.mxu0 0.0
    %2746 = vmatprep.subr.mxu0 0.0
    %2747 = vmatpush1.msra.mxu0 0.0
    %2748 = vmatprep.subr.mxu0 0.0
    %2749 = vmatpush1.msra.mxu0 0.0
    %2750 = vmatprep.subr.mxu0 0.0
    %2751 = vmatpush1.msra.mxu0 0.0
    %2752 = vmatprep.subr.mxu0 0.0
    %2753 = vmatpush1.msra.mxu0 0.0
    %2754 = vmatprep.subr.mxu0 0.0
    %2755 = vmatpush1.msra.mxu0 0.0
    %2756 = vmatprep.subr.mxu0 0.0
    %2757 = vmatpush1.msra.mxu0 0.0
    %2758 = vmatprep.subr.mxu0 0.0
    %2759 = vmatpush1.msra.mxu0 0.0
    %2760 = vmatprep.subr.mxu0 0.0
    %2761 = vmatpush1.msra.mxu0 0.0
    %2762 = vmatprep.subr.mxu0 0.0
    %2763 = vmatpush1.msra.mxu0 0.0
    %2764 = vmatprep.subr.mxu0 0.0
    %2765 = vmatpush1.msra.mxu0 0.0
    %2766 = vmatprep.subr.mxu0 0.0
    %2767 = vmatpush1.msra.mxu0 0.0
    %2768 = vmatprep.subr.mxu0 0.0
    %2769 = vmatpush1.msra.mxu0 0.0
    %2770 = vmatprep.subr.mxu0 0.0
    %2771 = vmatpush1.msra.mxu0 0.0
    %2772 = vmatprep.subr.mxu0 0.0
    %2773 = vmatpush1.msra.mxu0 0.0
    %2774 = vmatprep.subr.mxu0 0.0
    %2775 = vmatpush1.msra.mxu0 0.0
    %2776 = vmatprep.subr.mxu0 0.0
    %2777 = vmatpush1.msra.mxu0 0.0
    %2778 = vmatprep.subr.mxu0 0.0
    %2779 = vmatpush1.msra.mxu0 0.0
    %2780 = vmatprep.subr.mxu0 0.0
    %2781 = vmatpush1.msra.mxu0 0.0
    %2782 = vmatprep.subr.mxu0 0.0
    %2783 = vmatpush1.msra.mxu0 0.0
    %2784 = vmatprep.subr.mxu0 0.0
    %2785 = vmatpush1.msra.mxu0 0.0
    %2786 = vmatprep.subr.mxu0 0.0
    %2787 = vmatpush1.msra.mxu0 0.0
    %2788 = vmatprep.subr.mxu0 0.0
    %2789 = vmatpush1.msra.mxu0 0.0
    %2790 = vmatprep.subr.mxu0 0.0
    %2791 = vmatpush1.msra.mxu0 0.0
    %2792 = vmatprep.subr.mxu0 0.0
    %2793 = vmatpush1.msra.mxu0 0.0
    %2794 = vmatprep.mubr.f32.mxu0 0.0
    %2795 = vmatmul.mubr.f32.gmra.mrb[0].mxu0 %v2635
    %v2796 = vpop.f32.mrb[0].mxu0
    %v2797 = vadd.f32 %v2632, %v2796
    %v2798 = vpop.f32.mrb[0].mxu0
    %2799 = vmatprep.mubr.f32.mxu0 0.0
    %2800 = vmatmul.mubr.f32.gmra.mrb[0].mxu0 %v2638
    %v2801 = vpop.f32.mrb[0].mxu0
    %v2802 = vadd.f32 %v2632, %v2801
    %v2803 = vpop.f32.mrb[0].mxu0
    %2804 = vmatprep.mubr.f32.mxu0 0.0
    %2805 = vmatmul.mubr.f32.gmra.mrb[0].mxu0 %v2641
    %v2806 = vpop.f32.mrb[0].mxu0
    %v2807 = vadd.f32 %v2632, %v2806
    %v2808 = vpop.f32.mrb[0].mxu0
    %2809 = vmatprep.mubr.f32.mxu0 0.0
    %2810 = vmatmul.mubr.f32.gmra.mrb[0].mxu0 %v2644
    %v2811 = vpop.f32.mrb[0].mxu0
    %v2812 = vadd.f32 %v2632, %v2811
    %v2813 = vpop.f32.mrb[0].mxu0
    %2814 = vmatprep.mubr.f32.mxu0 0.0
    %2815 = vmatmul.mubr.f32.gmra.mrb[0].mxu0 %v2647
    %v2816 = vpop.f32.mrb[0].mxu0
    %v2817 = vadd.f32 %v2632, %v2816
    %v2818 = vpop.f32.mrb[0].mxu0
    %2819 = vmatprep.mubr.f32.mxu0 0.0
    %2820 = vmatmul.mubr.f32.gmra.mrb[0].mxu0 %v2650
    %v2821 = vpop.f32.mrb[0].mxu0
    %v2822 = vadd.f32 %v2632, %v2821
    %v2823 = vpop.f32.mrb[0].mxu0
    %2824 = vmatprep.mubr.f32.mxu0 0.0
    %2825 = vmatmul.mubr.f32.gmra.mrb[0].mxu0 %v2653
    %v2826 = vpop.f32.mrb[0].mxu0
    %v2827 = vadd.f32 %v2632, %v2826
    %v2828 = vpop.f32.mrb[0].mxu0
    %2829 = vmatprep.mubr.f32.mxu0 0.0
    %2830 = vmatmul.mubr.f32.gmra.mrb[0].mxu0 %v2656
    %v2831 = vpop.f32.mrb[0].mxu0
    %v2832 = vadd.f32 %v2632, %v2831
    %v2833 = vpop.f32.mrb[0].mxu0
    %2834 = vmatprep.mubr.f32.mxu0 0.0
    %2835 = vmatmul.mubr.f32.gmra.mrb[0].mxu0 %v2659
    %v2836 = vpop.f32.mrb[0].mxu0
    %v2837 = vadd.f32 %v2632, %v2836
    %v2838 = vpop.f32.mrb[0].mxu0
    %2839 = vmatprep.mubr.f32.mxu0 0.0
    %2840 = vmatmul.mubr.f32.gmra.mrb[0].mxu0 %v2662
    %v2841 = vpop.f32.mrb[0].mxu0
    %v2842 = vadd.f32 %v2632, %v2841
    %v2843 = vpop.f32.mrb[0].mxu0
    %2844 = vmatprep.mubr.f32.mxu0 0.0
    %2845 = vmatmul.mubr.f32.gmra.mrb[0].mxu0 %v2665
    %v2846 = vpop.f32.mrb[0].mxu0
    %v2847 = vadd.f32 %v2632, %v2846
    %v2848 = vpop.f32.mrb[0].mxu0
    %2849 = vmatprep.mubr.f32.mxu0 0.0
    %2850 = vmatmul.mubr.f32.gmra.mrb[0].mxu0 %v2668
    %v2851 = vpop.f32.mrb[0].mxu0
    %v2852 = vadd.f32 %v2632, %v2851
    %v2853 = vpop.f32.mrb[0].mxu0
    %2854 = vmatprep.mubr.f32.mxu0 0.0
    %2855 = vmatmul.mubr.f32.gmra.mrb[0].mxu0 %v2671
    %v2856 = vpop.f32.mrb[0].mxu0
    %v2857 = vadd.f32 %v2632, %v2856
    %v2858 = vpop.f32.mrb[0].mxu0
    %2859 = vmatprep.mubr.f32.mxu0 0.0
    %2860 = vmatmul.mubr.f32.gmra.mrb[0].mxu0 %v2674
    %v2861 = vpop.f32.mrb[0].mxu0
    %v2862 = vadd.f32 %v2632, %v2861
    %v2863 = vpop.f32.mrb[0].mxu0
    %2864 = vmatprep.mubr.f32.mxu0 0.0
    %2865 = vmatmul.mubr.f32.gmra.mrb[0].mxu0 %v2677
    %v2866 = vpop.f32.mrb[0].mxu0
    %v2867 = vadd.f32 %v2632, %v2866
    %v2868 = vpop.f32.mrb[0].mxu0
    %2869 = vmatprep.mubr.f32.mxu0 0.0
    %2870 = vmatmul.mubr.f32.gmra.mrb[0].mxu0 %v2680
    %v2871 = vpop.f32.mrb[0].mxu0
    %v2872 = vadd.f32 %v2632, %v2871
    %v2873 = vpop.f32.mrb[0].mxu0
    %2874 = vmatprep.mubr.f32.mxu0 0.0
    %2875 = vmatmul.mubr.f32.gmra.mrb[0].mxu0 %v2683
    %v2876 = vpop.f32.mrb[0].mxu0
    %v2877 = vadd.f32 %v2632, %v2876
    %v2878 = vpop.f32.mrb[0].mxu0
    %2879 = vmatprep.mubr.f32.mxu0 0.0
    %2880 = vmatmul.mubr.f32.gmra.mrb[0].mxu0 %v2686
    %v2881 = vpop.f32.mrb[0].mxu0
    %v2882 = vadd.f32 %v2632, %v2881
    %v2883 = vpop.f32.mrb[0].mxu0
    %2884 = vmatprep.mubr.f32.mxu0 0.0
    %2885 = vmatmul.mubr.f32.gmra.mrb[0].mxu0 %v2689
    %v2886 = vpop.f32.mrb[0].mxu0
    %v2887 = vadd.f32 %v2632, %v2886
    %v2888 = vpop.f32.mrb[0].mxu0
    %2889 = vmatprep.mubr.f32.mxu0 0.0
    %2890 = vmatmul.mubr.f32.gmra.mrb[0].mxu0 %v2692
    %v2891 = vpop.f32.mrb[0].mxu0
    %v2892 = vadd.f32 %v2632, %v2891
    %v2893 = vpop.f32.mrb[0].mxu0
    %2894 = vmatprep.mubr.f32.mxu0 0.0
    %2895 = vmatmul.mubr.f32.gmra.mrb[0].mxu0 %v2695
    %v2896 = vpop.f32.mrb[0].mxu0
    %v2897 = vadd.f32 %v2632, %v2896
    %v2898 = vpop.f32.mrb[0].mxu0
    %2899 = vmatprep.mubr.f32.mxu0 0.0
    %2900 = vmatmul.mubr.f32.gmra.mrb[0].mxu0 %v2698
    %v2901 = vpop.f32.mrb[0].mxu0
    %v2902 = vadd.f32 %v2632, %v2901
    %v2903 = vpop.f32.mrb[0].mxu0
    %2904 = vmatprep.mubr.f32.mxu0 0.0
    %2905 = vmatmul.mubr.f32.gmra.mrb[0].mxu0 %v2701
    %v2906 = vpop.f32.mrb[0].mxu0
    %v2907 = vadd.f32 %v2632, %v2906
    %v2908 = vpop.f32.mrb[0].mxu0
    %2909 = vmatprep.mubr.f32.mxu0 0.0
    %2910 = vmatmul.mubr.f32.gmra.mrb[0].mxu0 %v2704
    %v2911 = vpop.f32.mrb[0].mxu0
    %v2912 = vadd.f32 %v2632, %v2911
    %v2913 = vpop.f32.mrb[0].mxu0
    %2914 = vmatprep.mubr.f32.mxu0 0.0
    %2915 = vmatmul.mubr.f32.gmra.mrb[0].mxu0 %v2707
    %v2916 = vpop.f32.mrb[0].mxu0
    %v2917 = vadd.f32 %v2632, %v2916
    %v2918 = vpop.f32.mrb[0].mxu0
    %2919 = vmatprep.mubr.f32.mxu0 0.0
    %2920 = vmatmul.mubr.f32.gmra.mrb[0].mxu0 %v2710
    %v2921 = vpop.f32.mrb[0].mxu0
    %v2922 = vadd.f32 %v2632, %v2921
    %v2923 = vpop.f32.mrb[0].mxu0
    %2924 = vmatprep.mubr.f32.mxu0 0.0
    %2925 = vmatmul.mubr.f32.gmra.mrb[0].mxu0 %v2713
    %v2926 = vpop.f32.mrb[0].mxu0
    %v2927 = vadd.f32 %v2632, %v2926
    %v2928 = vpop.f32.mrb[0].mxu0
    %2929 = vmatprep.mubr.f32.mxu0 0.0
    %2930 = vmatmul.mubr.f32.gmra.mrb[0].mxu0 %v2716
    %v2931 = vpop.f32.mrb[0].mxu0
    %v2932 = vadd.f32 %v2632, %v2931
    %v2933 = vpop.f32.mrb[0].mxu0
    %2934 = vmatprep.mubr.f32.mxu0 0.0
    %2935 = vmatmul.mubr.f32.gmra.mrb[0].mxu0 %v2719
    %v2936 = vpop.f32.mrb[0].mxu0
    %v2937 = vadd.f32 %v2632, %v2936
    %v2938 = vpop.f32.mrb[0].mxu0
    %2939 = vmatprep.mubr.f32.mxu0 0.0
    %2940 = vmatmul.mubr.f32.gmra.mrb[0].mxu0 %v2722
    %v2941 = vpop.f32.mrb[0].mxu0
    %v2942 = vadd.f32 %v2632, %v2941
    %v2943 = vpop.f32.mrb[0].mxu0
    %2944 = vmatprep.mubr.f32.mxu0 0.0
    %2945 = vmatmul.mubr.f32.gmra.mrb[0].mxu0 %v2725
    %v2946 = vpop.f32.mrb[0].mxu0
    %v2947 = vadd.f32 %v2632, %v2946
    %v2948 = vpop.f32.mrb[0].mxu0
    %2949 = vmatprep.mubr.f32.mxu0 0.0
    %2950 = vmatmul.mubr.f32.gmra.mrb[0].mxu0 %v2728
    %v2951 = vpop.f32.mrb[0].mxu0
    %v2952 = vadd.f32 %v2632, %v2951
    %v2953 = vpop.f32.mrb[0].mxu0
    %2954 = vdwg.mxu0
    %v2955 = vadd.f32 %v1491, %v2797
    %v2956 = vadd.f32 %v1492, %v2802
    %v2957 = vadd.f32 %v1493, %v2807
    %v2958 = vadd.f32 %v1494, %v2812
    %v2959 = vadd.f32 %v1495, %v2817
    %v2960 = vadd.f32 %v1496, %v2822
    %v2961 = vadd.f32 %v1497, %v2827
    %v2962 = vadd.f32 %v1498, %v2832
    %v2963 = vadd.f32 %v1499, %v2837
    %v2964 = vadd.f32 %v1500, %v2842
    %v2965 = vadd.f32 %v1501, %v2847
    %v2966 = vadd.f32 %v1502, %v2852
    %v2967 = vadd.f32 %v1503, %v2857
    %v2968 = vadd.f32 %v1504, %v2862
    %v2969 = vadd.f32 %v1505, %v2867
    %v2970 = vadd.f32 %v1506, %v2872
    %v2971 = vadd.f32 %v1507, %v2877
    %v2972 = vadd.f32 %v1508, %v2882
    %v2973 = vadd.f32 %v1509, %v2887
    %v2974 = vadd.f32 %v1510, %v2892
    %v2975 = vadd.f32 %v1511, %v2897
    %v2976 = vadd.f32 %v1512, %v2902
    %v2977 = vadd.f32 %v1513, %v2907
    %v2978 = vadd.f32 %v1514, %v2912
    %v2979 = vadd.f32 %v1515, %v2917
    %v2980 = vadd.f32 %v1516, %v2922
    %v2981 = vadd.f32 %v1517, %v2927
    %v2982 = vadd.f32 %v1518, %v2932
    %v2983 = vadd.f32 %v1519, %v2937
    %v2984 = vadd.f32 %v1520, %v2942
    %v2985 = vadd.f32 %v1521, %v2947
    %v2986 = vadd.f32 %v1522, %v2952
    %s2987 = scalar_lea.vmem [#allocation2], 256
    %v2988 = vld [vmem:[%s2987] sm:$0xff]
    %v2989 = vld [vmem:[%s2987 + $0x8] sm:$0xff]
    %v2990 = vld [vmem:[%s2987 + $0x10] sm:$0xff]
    %v2991 = vld [vmem:[%s2987 + $0x18] sm:$0xff]
    %s2992 = scalar_lea.vmem %s2, 8
    %v2993 = vld [vmem:[%s2992] sm:$0x1]
    %v2995 = vlaneseq
    %v2996 = vshrl.u32 %v2995, 7
    %v2997 = vsub.s32 0, %v2996
    %v2998 = vrot.slane %v2993, %v2997
    %v3001 = vsel %vm71, %v2955, 0
    %v3004 = vsel %vm71, %v2956, 0
    %v3007 = vsel %vm71, %v2957, 0
    %v3010 = vsel %vm71, %v2958, 0
    %v3013 = vsel %vm71, %v2959, 0
    %v3016 = vsel %vm71, %v2960, 0
    %v3019 = vsel %vm71, %v2961, 0
    %v3022 = vsel %vm71, %v2962, 0
    %v3025 = vsel %vm71, %v2963, 0
    %v3028 = vsel %vm71, %v2964, 0
    %v3031 = vsel %vm71, %v2965, 0
    %v3034 = vsel %vm71, %v2966, 0
    %v3037 = vsel %vm71, %v2967, 0
    %v3040 = vsel %vm71, %v2968, 0
    %v3043 = vsel %vm71, %v2969, 0
    %v3046 = vsel %vm71, %v2970, 0
    %v3049 = vsel %vm71, %v2971, 0
    %v3052 = vsel %vm71, %v2972, 0
    %v3055 = vsel %vm71, %v2973, 0
    %v3058 = vsel %vm71, %v2974, 0
    %v3061 = vsel %vm71, %v2975, 0
    %v3064 = vsel %vm71, %v2976, 0
    %v3067 = vsel %vm71, %v2977, 0
    %v3070 = vsel %vm71, %v2978, 0
    %v3073 = vsel %vm71, %v2979, 0
    %v3076 = vsel %vm71, %v2980, 0
    %v3079 = vsel %vm71, %v2981, 0
    %v3082 = vsel %vm71, %v2982, 0
    %v3085 = vsel %vm71, %v2983, 0
    %v3088 = vsel %vm71, %v2984, 0
    %v3091 = vsel %vm71, %v2985, 0
    %v3094 = vsel %vm71, %v2986, 0
    %3096 = vmatprep.subr.mxu0 0.0
    %3097 = vmatpush1.msra.mxu0 %v2988
    %3098 = vmatprep.subr.mxu0 0.0
    %3099 = vmatpush1.msra.mxu0 %v2989
    %3100 = vmatprep.subr.mxu0 0.0
    %3101 = vmatpush1.msra.mxu0 %v2990
    %3102 = vmatprep.subr.mxu0 0.0
    %3103 = vmatpush1.msra.mxu0 %v2991
    %3104 = vmatprep.subr.mxu0 0.0
    %3105 = vmatpush1.msra.mxu0 0.0
    %3106 = vmatprep.subr.mxu0 0.0
    %3107 = vmatpush1.msra.mxu0 0.0
    %3108 = vmatprep.subr.mxu0 0.0
    %3109 = vmatpush1.msra.mxu0 0.0
    %3110 = vmatprep.subr.mxu0 0.0
    %3111 = vmatpush1.msra.mxu0 0.0
    %3112 = vmatprep.subr.mxu0 0.0
    %3113 = vmatpush1.msra.mxu0 0.0
    %3114 = vmatprep.subr.mxu0 0.0
    %3115 = vmatpush1.msra.mxu0 0.0
    %3116 = vmatprep.subr.mxu0 0.0
    %3117 = vmatpush1.msra.mxu0 0.0
    %3118 = vmatprep.subr.mxu0 0.0
    %3119 = vmatpush1.msra.mxu0 0.0
    %3120 = vmatprep.subr.mxu0 0.0
    %3121 = vmatpush1.msra.mxu0 0.0
    %3122 = vmatprep.subr.mxu0 0.0
    %3123 = vmatpush1.msra.mxu0 0.0
    %3124 = vmatprep.subr.mxu0 0.0
    %3125 = vmatpush1.msra.mxu0 0.0
    %3126 = vmatprep.subr.mxu0 0.0
    %3127 = vmatpush1.msra.mxu0 0.0
    %3128 = vmatprep.subr.mxu0 0.0
    %3129 = vmatpush1.msra.mxu0 0.0
    %3130 = vmatprep.subr.mxu0 0.0
    %3131 = vmatpush1.msra.mxu0 0.0
    %3132 = vmatprep.subr.mxu0 0.0
    %3133 = vmatpush1.msra.mxu0 0.0
    %3134 = vmatprep.subr.mxu0 0.0
    %3135 = vmatpush1.msra.mxu0 0.0
    %3136 = vmatprep.subr.mxu0 0.0
    %3137 = vmatpush1.msra.mxu0 0.0
    %3138 = vmatprep.subr.mxu0 0.0
    %3139 = vmatpush1.msra.mxu0 0.0
    %3140 = vmatprep.subr.mxu0 0.0
    %3141 = vmatpush1.msra.mxu0 0.0
    %3142 = vmatprep.subr.mxu0 0.0
    %3143 = vmatpush1.msra.mxu0 0.0
    %3144 = vmatprep.subr.mxu0 0.0
    %3145 = vmatpush1.msra.mxu0 0.0
    %3146 = vmatprep.subr.mxu0 0.0
    %3147 = vmatpush1.msra.mxu0 0.0
    %3148 = vmatprep.subr.mxu0 0.0
    %3149 = vmatpush1.msra.mxu0 0.0
    %3150 = vmatprep.subr.mxu0 0.0
    %3151 = vmatpush1.msra.mxu0 0.0
    %3152 = vmatprep.subr.mxu0 0.0
    %3153 = vmatpush1.msra.mxu0 0.0
    %3154 = vmatprep.subr.mxu0 0.0
    %3155 = vmatpush1.msra.mxu0 0.0
    %3156 = vmatprep.subr.mxu0 0.0
    %3157 = vmatpush1.msra.mxu0 0.0
    %3158 = vmatprep.subr.mxu0 0.0
    %3159 = vmatpush1.msra.mxu0 0.0
    %3160 = vmatprep.mubr.f32.mxu0 0.0
    %3161 = vmatmul.mubr.f32.gmra.mrb[0].mxu0 %v3001
    %v3162 = vpop.f32.mrb[0].mxu0
    %v3163 = vadd.f32 %v2998, %v3162
    %v3164 = vpop.f32.mrb[0].mxu0
    %3165 = vmatprep.mubr.f32.mxu0 0.0
    %3166 = vmatmul.mubr.f32.gmra.mrb[0].mxu0 %v3004
    %v3167 = vpop.f32.mrb[0].mxu0
    %v3168 = vadd.f32 %v2998, %v3167
    %v3169 = vpop.f32.mrb[0].mxu0
    %3170 = vmatprep.mubr.f32.mxu0 0.0
    %3171 = vmatmul.mubr.f32.gmra.mrb[0].mxu0 %v3007
    %v3172 = vpop.f32.mrb[0].mxu0
    %v3173 = vadd.f32 %v2998, %v3172
    %v3174 = vpop.f32.mrb[0].mxu0
    %3175 = vmatprep.mubr.f32.mxu0 0.0
    %3176 = vmatmul.mubr.f32.gmra.mrb[0].mxu0 %v3010
    %v3177 = vpop.f32.mrb[0].mxu0
    %v3178 = vadd.f32 %v2998, %v3177
    %v3179 = vpop.f32.mrb[0].mxu0
    %3180 = vmatprep.mubr.f32.mxu0 0.0
    %3181 = vmatmul.mubr.f32.gmra.mrb[0].mxu0 %v3013
    %v3182 = vpop.f32.mrb[0].mxu0
    %v3183 = vadd.f32 %v2998, %v3182
    %v3184 = vpop.f32.mrb[0].mxu0
    %3185 = vmatprep.mubr.f32.mxu0 0.0
    %3186 = vmatmul.mubr.f32.gmra.mrb[0].mxu0 %v3016
    %v3187 = vpop.f32.mrb[0].mxu0
    %v3188 = vadd.f32 %v2998, %v3187
    %v3189 = vpop.f32.mrb[0].mxu0
    %3190 = vmatprep.mubr.f32.mxu0 0.0
    %3191 = vmatmul.mubr.f32.gmra.mrb[0].mxu0 %v3019
    %v3192 = vpop.f32.mrb[0].mxu0
    %v3193 = vadd.f32 %v2998, %v3192
    %v3194 = vpop.f32.mrb[0].mxu0
    %3195 = vmatprep.mubr.f32.mxu0 0.0
    %3196 = vmatmul.mubr.f32.gmra.mrb[0].mxu0 %v3022
    %v3197 = vpop.f32.mrb[0].mxu0
    %v3198 = vadd.f32 %v2998, %v3197
    %v3199 = vpop.f32.mrb[0].mxu0
    %3200 = vmatprep.mubr.f32.mxu0 0.0
    %3201 = vmatmul.mubr.f32.gmra.mrb[0].mxu0 %v3025
    %v3202 = vpop.f32.mrb[0].mxu0
    %v3203 = vadd.f32 %v2998, %v3202
    %v3204 = vpop.f32.mrb[0].mxu0
    %3205 = vmatprep.mubr.f32.mxu0 0.0
    %3206 = vmatmul.mubr.f32.gmra.mrb[0].mxu0 %v3028
    %v3207 = vpop.f32.mrb[0].mxu0
    %v3208 = vadd.f32 %v2998, %v3207
    %v3209 = vpop.f32.mrb[0].mxu0
    %3210 = vmatprep.mubr.f32.mxu0 0.0
    %3211 = vmatmul.mubr.f32.gmra.mrb[0].mxu0 %v3031
    %v3212 = vpop.f32.mrb[0].mxu0
    %v3213 = vadd.f32 %v2998, %v3212
    %v3214 = vpop.f32.mrb[0].mxu0
    %3215 = vmatprep.mubr.f32.mxu0 0.0
    %3216 = vmatmul.mubr.f32.gmra.mrb[0].mxu0 %v3034
    %v3217 = vpop.f32.mrb[0].mxu0
    %v3218 = vadd.f32 %v2998, %v3217
    %v3219 = vpop.f32.mrb[0].mxu0
    %3220 = vmatprep.mubr.f32.mxu0 0.0
    %3221 = vmatmul.mubr.f32.gmra.mrb[0].mxu0 %v3037
    %v3222 = vpop.f32.mrb[0].mxu0
    %v3223 = vadd.f32 %v2998, %v3222
    %v3224 = vpop.f32.mrb[0].mxu0
    %3225 = vmatprep.mubr.f32.mxu0 0.0
    %3226 = vmatmul.mubr.f32.gmra.mrb[0].mxu0 %v3040
    %v3227 = vpop.f32.mrb[0].mxu0
    %v3228 = vadd.f32 %v2998, %v3227
    %v3229 = vpop.f32.mrb[0].mxu0
    %3230 = vmatprep.mubr.f32.mxu0 0.0
    %3231 = vmatmul.mubr.f32.gmra.mrb[0].mxu0 %v3043
    %v3232 = vpop.f32.mrb[0].mxu0
    %v3233 = vadd.f32 %v2998, %v3232
    %v3234 = vpop.f32.mrb[0].mxu0
    %3235 = vmatprep.mubr.f32.mxu0 0.0
    %3236 = vmatmul.mubr.f32.gmra.mrb[0].mxu0 %v3046
    %v3237 = vpop.f32.mrb[0].mxu0
    %v3238 = vadd.f32 %v2998, %v3237
    %v3239 = vpop.f32.mrb[0].mxu0
    %3240 = vmatprep.mubr.f32.mxu0 0.0
    %3241 = vmatmul.mubr.f32.gmra.mrb[0].mxu0 %v3049
    %v3242 = vpop.f32.mrb[0].mxu0
    %v3243 = vadd.f32 %v2998, %v3242
    %v3244 = vpop.f32.mrb[0].mxu0
    %3245 = vmatprep.mubr.f32.mxu0 0.0
    %3246 = vmatmul.mubr.f32.gmra.mrb[0].mxu0 %v3052
    %v3247 = vpop.f32.mrb[0].mxu0
    %v3248 = vadd.f32 %v2998, %v3247
    %v3249 = vpop.f32.mrb[0].mxu0
    %3250 = vmatprep.mubr.f32.mxu0 0.0
    %3251 = vmatmul.mubr.f32.gmra.mrb[0].mxu0 %v3055
    %v3252 = vpop.f32.mrb[0].mxu0
    %v3253 = vadd.f32 %v2998, %v3252
    %v3254 = vpop.f32.mrb[0].mxu0
    %3255 = vmatprep.mubr.f32.mxu0 0.0
    %3256 = vmatmul.mubr.f32.gmra.mrb[0].mxu0 %v3058
    %v3257 = vpop.f32.mrb[0].mxu0
    %v3258 = vadd.f32 %v2998, %v3257
    %v3259 = vpop.f32.mrb[0].mxu0
    %3260 = vmatprep.mubr.f32.mxu0 0.0
    %3261 = vmatmul.mubr.f32.gmra.mrb[0].mxu0 %v3061
    %v3262 = vpop.f32.mrb[0].mxu0
    %v3263 = vadd.f32 %v2998, %v3262
    %v3264 = vpop.f32.mrb[0].mxu0
    %3265 = vmatprep.mubr.f32.mxu0 0.0
    %3266 = vmatmul.mubr.f32.gmra.mrb[0].mxu0 %v3064
    %v3267 = vpop.f32.mrb[0].mxu0
    %v3268 = vadd.f32 %v2998, %v3267
    %v3269 = vpop.f32.mrb[0].mxu0
    %3270 = vmatprep.mubr.f32.mxu0 0.0
    %3271 = vmatmul.mubr.f32.gmra.mrb[0].mxu0 %v3067
    %v3272 = vpop.f32.mrb[0].mxu0
    %v3273 = vadd.f32 %v2998, %v3272
    %v3274 = vpop.f32.mrb[0].mxu0
    %3275 = vmatprep.mubr.f32.mxu0 0.0
    %3276 = vmatmul.mubr.f32.gmra.mrb[0].mxu0 %v3070
    %v3277 = vpop.f32.mrb[0].mxu0
    %v3278 = vadd.f32 %v2998, %v3277
    %v3279 = vpop.f32.mrb[0].mxu0
    %3280 = vmatprep.mubr.f32.mxu0 0.0
    %3281 = vmatmul.mubr.f32.gmra.mrb[0].mxu0 %v3073
    %v3282 = vpop.f32.mrb[0].mxu0
    %v3283 = vadd.f32 %v2998, %v3282
    %v3284 = vpop.f32.mrb[0].mxu0
    %3285 = vmatprep.mubr.f32.mxu0 0.0
    %3286 = vmatmul.mubr.f32.gmra.mrb[0].mxu0 %v3076
    %v3287 = vpop.f32.mrb[0].mxu0
    %v3288 = vadd.f32 %v2998, %v3287
    %v3289 = vpop.f32.mrb[0].mxu0
    %3290 = vmatprep.mubr.f32.mxu0 0.0
    %3291 = vmatmul.mubr.f32.gmra.mrb[0].mxu0 %v3079
    %v3292 = vpop.f32.mrb[0].mxu0
    %v3293 = vadd.f32 %v2998, %v3292
    %v3294 = vpop.f32.mrb[0].mxu0
    %3295 = vmatprep.mubr.f32.mxu0 0.0
    %3296 = vmatmul.mubr.f32.gmra.mrb[0].mxu0 %v3082
    %v3297 = vpop.f32.mrb[0].mxu0
    %v3298 = vadd.f32 %v2998, %v3297
    %v3299 = vpop.f32.mrb[0].mxu0
    %3300 = vmatprep.mubr.f32.mxu0 0.0
    %3301 = vmatmul.mubr.f32.gmra.mrb[0].mxu0 %v3085
    %v3302 = vpop.f32.mrb[0].mxu0
    %v3303 = vadd.f32 %v2998, %v3302
    %v3304 = vpop.f32.mrb[0].mxu0
    %3305 = vmatprep.mubr.f32.mxu0 0.0
    %3306 = vmatmul.mubr.f32.gmra.mrb[0].mxu0 %v3088
    %v3307 = vpop.f32.mrb[0].mxu0
    %v3308 = vadd.f32 %v2998, %v3307
    %v3309 = vpop.f32.mrb[0].mxu0
    %3310 = vmatprep.mubr.f32.mxu0 0.0
    %3311 = vmatmul.mubr.f32.gmra.mrb[0].mxu0 %v3091
    %v3312 = vpop.f32.mrb[0].mxu0
    %v3313 = vadd.f32 %v2998, %v3312
    %v3314 = vpop.f32.mrb[0].mxu0
    %3315 = vmatprep.mubr.f32.mxu0 0.0
    %3316 = vmatmul.mubr.f32.gmra.mrb[0].mxu0 %v3094
    %v3317 = vpop.f32.mrb[0].mxu0
    %v3318 = vadd.f32 %v2998, %v3317
    %v3319 = vpop.f32.mrb[0].mxu0
    %3320 = vdwg.mxu0
    %v3321 = vmul.f32 %v3163, 0.01
    %v3322 = vmul.f32 %v3168, 0.01
    %v3323 = vmul.f32 %v3173, 0.01
    %v3324 = vmul.f32 %v3178, 0.01
    %v3325 = vmul.f32 %v3183, 0.01
    %v3326 = vmul.f32 %v3188, 0.01
    %v3327 = vmul.f32 %v3193, 0.01
    %v3328 = vmul.f32 %v3198, 0.01
    %v3329 = vmul.f32 %v3203, 0.01
    %v3330 = vmul.f32 %v3208, 0.01
    %v3331 = vmul.f32 %v3213, 0.01
    %v3332 = vmul.f32 %v3218, 0.01
    %v3333 = vmul.f32 %v3223, 0.01
    %v3334 = vmul.f32 %v3228, 0.01
    %v3335 = vmul.f32 %v3233, 0.01
    %v3336 = vmul.f32 %v3238, 0.01
    %v3337 = vmul.f32 %v3243, 0.01
    %v3338 = vmul.f32 %v3248, 0.01
    %v3339 = vmul.f32 %v3253, 0.01
    %v3340 = vmul.f32 %v3258, 0.01
    %v3341 = vmul.f32 %v3263, 0.01
    %v3342 = vmul.f32 %v3268, 0.01
    %v3343 = vmul.f32 %v3273, 0.01
    %v3344 = vmul.f32 %v3278, 0.01
    %v3345 = vmul.f32 %v3283, 0.01
    %v3346 = vmul.f32 %v3288, 0.01
    %v3347 = vmul.f32 %v3293, 0.01
    %v3348 = vmul.f32 %v3298, 0.01
    %v3349 = vmul.f32 %v3303, 0.01
    %v3350 = vmul.f32 %v3308, 0.01
    %v3351 = vmul.f32 %v3313, 0.01
    %v3352 = vmul.f32 %v3318, 0.01
    %v3353 = vmax.f32 %v3163, %v3321
    %v3354 = vmax.f32 %v3168, %v3322
    %v3355 = vmax.f32 %v3173, %v3323
    %v3356 = vmax.f32 %v3178, %v3324
    %v3357 = vmax.f32 %v3183, %v3325
    %v3358 = vmax.f32 %v3188, %v3326
    %v3359 = vmax.f32 %v3193, %v3327
    %v3360 = vmax.f32 %v3198, %v3328
    %v3361 = vmax.f32 %v3203, %v3329
    %v3362 = vmax.f32 %v3208, %v3330
    %v3363 = vmax.f32 %v3213, %v3331
    %v3364 = vmax.f32 %v3218, %v3332
    %v3365 = vmax.f32 %v3223, %v3333
    %v3366 = vmax.f32 %v3228, %v3334
    %v3367 = vmax.f32 %v3233, %v3335
    %v3368 = vmax.f32 %v3238, %v3336
    %v3369 = vmax.f32 %v3243, %v3337
    %v3370 = vmax.f32 %v3248, %v3338
    %v3371 = vmax.f32 %v3253, %v3339
    %v3372 = vmax.f32 %v3258, %v3340
    %v3373 = vmax.f32 %v3263, %v3341
    %v3374 = vmax.f32 %v3268, %v3342
    %v3375 = vmax.f32 %v3273, %v3343
    %v3376 = vmax.f32 %v3278, %v3344
    %v3377 = vmax.f32 %v3283, %v3345
    %v3378 = vmax.f32 %v3288, %v3346
    %v3379 = vmax.f32 %v3293, %v3347
    %v3380 = vmax.f32 %v3298, %v3348
    %v3381 = vmax.f32 %v3303, %v3349
    %v3382 = vmax.f32 %v3308, %v3350
    %v3383 = vmax.f32 %v3313, %v3351
    %v3384 = vmax.f32 %v3318, %v3352
    %s3385 = scalar_lea.vmem [#allocation2], 288
    %v3386 = vld [vmem:[%s3385] sm:$0xff]
    %v3387 = vld [vmem:[%s3385 + $0x8] sm:$0xff]
    %v3388 = vld [vmem:[%s3385 + $0x10] sm:$0xff]
    %v3389 = vld [vmem:[%s3385 + $0x18] sm:$0xff]
    %s3390 = scalar_lea.vmem %s2, 9
    %v3391 = vld [vmem:[%s3390] sm:$0x1]
    %v3393 = vlaneseq
    %v3394 = vshrl.u32 %v3393, 7
    %v3395 = vsub.s32 0, %v3394
    %v3396 = vrot.slane %v3391, %v3395
    %v3399 = vsel %vm71, %v3353, 0
    %v3402 = vsel %vm71, %v3354, 0
    %v3405 = vsel %vm71, %v3355, 0
    %v3408 = vsel %vm71, %v3356, 0
    %v3411 = vsel %vm71, %v3357, 0
    %v3414 = vsel %vm71, %v3358, 0
    %v3417 = vsel %vm71, %v3359, 0
    %v3420 = vsel %vm71, %v3360, 0
    %v3423 = vsel %vm71, %v3361, 0
    %v3426 = vsel %vm71, %v3362, 0
    %v3429 = vsel %vm71, %v3363, 0
    %v3432 = vsel %vm71, %v3364, 0
    %v3435 = vsel %vm71, %v3365, 0
    %v3438 = vsel %vm71, %v3366, 0
    %v3441 = vsel %vm71, %v3367, 0
    %v3444 = vsel %vm71, %v3368, 0
    %v3447 = vsel %vm71, %v3369, 0
    %v3450 = vsel %vm71, %v3370, 0
    %v3453 = vsel %vm71, %v3371, 0
    %v3456 = vsel %vm71, %v3372, 0
    %v3459 = vsel %vm71, %v3373, 0
    %v3462 = vsel %vm71, %v3374, 0
    %v3465 = vsel %vm71, %v3375, 0
    %v3468 = vsel %vm71, %v3376, 0
    %v3471 = vsel %vm71, %v3377, 0
    %v3474 = vsel %vm71, %v3378, 0
    %v3477 = vsel %vm71, %v3379, 0
    %v3480 = vsel %vm71, %v3380, 0
    %v3483 = vsel %vm71, %v3381, 0
    %v3486 = vsel %vm71, %v3382, 0
    %v3489 = vsel %vm71, %v3383, 0
    %v3492 = vsel %vm71, %v3384, 0
    %3494 = vmatprep.subr.mxu0 0.0
    %3495 = vmatpush1.msra.mxu0 %v3386
    %3496 = vmatprep.subr.mxu0 0.0
    %3497 = vmatpush1.msra.mxu0 %v3387
    %3498 = vmatprep.subr.mxu0 0.0
    %3499 = vmatpush1.msra.mxu0 %v3388
    %3500 = vmatprep.subr.mxu0 0.0
    %3501 = vmatpush1.msra.mxu0 %v3389
    %3502 = vmatprep.subr.mxu0 0.0
    %3503 = vmatpush1.msra.mxu0 0.0
    %3504 = vmatprep.subr.mxu0 0.0
    %3505 = vmatpush1.msra.mxu0 0.0
    %3506 = vmatprep.subr.mxu0 0.0
    %3507 = vmatpush1.msra.mxu0 0.0
    %3508 = vmatprep.subr.mxu0 0.0
    %3509 = vmatpush1.msra.mxu0 0.0
    %3510 = vmatprep.subr.mxu0 0.0
    %3511 = vmatpush1.msra.mxu0 0.0
    %3512 = vmatprep.subr.mxu0 0.0
    %3513 = vmatpush1.msra.mxu0 0.0
    %3514 = vmatprep.subr.mxu0 0.0
    %3515 = vmatpush1.msra.mxu0 0.0
    %3516 = vmatprep.subr.mxu0 0.0
    %3517 = vmatpush1.msra.mxu0 0.0
    %3518 = vmatprep.subr.mxu0 0.0
    %3519 = vmatpush1.msra.mxu0 0.0
    %3520 = vmatprep.subr.mxu0 0.0
    %3521 = vmatpush1.msra.mxu0 0.0
    %3522 = vmatprep.subr.mxu0 0.0
    %3523 = vmatpush1.msra.mxu0 0.0
    %3524 = vmatprep.subr.mxu0 0.0
    %3525 = vmatpush1.msra.mxu0 0.0
    %3526 = vmatprep.subr.mxu0 0.0
    %3527 = vmatpush1.msra.mxu0 0.0
    %3528 = vmatprep.subr.mxu0 0.0
    %3529 = vmatpush1.msra.mxu0 0.0
    %3530 = vmatprep.subr.mxu0 0.0
    %3531 = vmatpush1.msra.mxu0 0.0
    %3532 = vmatprep.subr.mxu0 0.0
    %3533 = vmatpush1.msra.mxu0 0.0
    %3534 = vmatprep.subr.mxu0 0.0
    %3535 = vmatpush1.msra.mxu0 0.0
    %3536 = vmatprep.subr.mxu0 0.0
    %3537 = vmatpush1.msra.mxu0 0.0
    %3538 = vmatprep.subr.mxu0 0.0
    %3539 = vmatpush1.msra.mxu0 0.0
    %3540 = vmatprep.subr.mxu0 0.0
    %3541 = vmatpush1.msra.mxu0 0.0
    %3542 = vmatprep.subr.mxu0 0.0
    %3543 = vmatpush1.msra.mxu0 0.0
    %3544 = vmatprep.subr.mxu0 0.0
    %3545 = vmatpush1.msra.mxu0 0.0
    %3546 = vmatprep.subr.mxu0 0.0
    %3547 = vmatpush1.msra.mxu0 0.0
    %3548 = vmatprep.subr.mxu0 0.0
    %3549 = vmatpush1.msra.mxu0 0.0
    %3550 = vmatprep.subr.mxu0 0.0
    %3551 = vmatpush1.msra.mxu0 0.0
    %3552 = vmatprep.subr.mxu0 0.0
    %3553 = vmatpush1.msra.mxu0 0.0
    %3554 = vmatprep.subr.mxu0 0.0
    %3555 = vmatpush1.msra.mxu0 0.0
    %3556 = vmatprep.subr.mxu0 0.0
    %3557 = vmatpush1.msra.mxu0 0.0
    %3558 = vmatprep.mubr.f32.mxu0 0.0
    %3559 = vmatmul.mubr.f32.gmra.mrb[0].mxu0 %v3399
    %v3560 = vpop.f32.mrb[0].mxu0
    %v3561 = vadd.f32 %v3396, %v3560
    %v3562 = vpop.f32.mrb[0].mxu0
    %3563 = vmatprep.mubr.f32.mxu0 0.0
    %3564 = vmatmul.mubr.f32.gmra.mrb[0].mxu0 %v3402
    %v3565 = vpop.f32.mrb[0].mxu0
    %v3566 = vadd.f32 %v3396, %v3565
    %v3567 = vpop.f32.mrb[0].mxu0
    %3568 = vmatprep.mubr.f32.mxu0 0.0
    %3569 = vmatmul.mubr.f32.gmra.mrb[0].mxu0 %v3405
    %v3570 = vpop.f32.mrb[0].mxu0
    %v3571 = vadd.f32 %v3396, %v3570
    %v3572 = vpop.f32.mrb[0].mxu0
    %3573 = vmatprep.mubr.f32.mxu0 0.0
    %3574 = vmatmul.mubr.f32.gmra.mrb[0].mxu0 %v3408
    %v3575 = vpop.f32.mrb[0].mxu0
    %v3576 = vadd.f32 %v3396, %v3575
    %v3577 = vpop.f32.mrb[0].mxu0
    %3578 = vmatprep.mubr.f32.mxu0 0.0
    %3579 = vmatmul.mubr.f32.gmra.mrb[0].mxu0 %v3411
    %v3580 = vpop.f32.mrb[0].mxu0
    %v3581 = vadd.f32 %v3396, %v3580
    %v3582 = vpop.f32.mrb[0].mxu0
    %3583 = vmatprep.mubr.f32.mxu0 0.0
    %3584 = vmatmul.mubr.f32.gmra.mrb[0].mxu0 %v3414
    %v3585 = vpop.f32.mrb[0].mxu0
    %v3586 = vadd.f32 %v3396, %v3585
    %v3587 = vpop.f32.mrb[0].mxu0
    %3588 = vmatprep.mubr.f32.mxu0 0.0
    %3589 = vmatmul.mubr.f32.gmra.mrb[0].mxu0 %v3417
    %v3590 = vpop.f32.mrb[0].mxu0
    %v3591 = vadd.f32 %v3396, %v3590
    %v3592 = vpop.f32.mrb[0].mxu0
    %3593 = vmatprep.mubr.f32.mxu0 0.0
    %3594 = vmatmul.mubr.f32.gmra.mrb[0].mxu0 %v3420
    %v3595 = vpop.f32.mrb[0].mxu0
    %v3596 = vadd.f32 %v3396, %v3595
    %v3597 = vpop.f32.mrb[0].mxu0
    %3598 = vmatprep.mubr.f32.mxu0 0.0
    %3599 = vmatmul.mubr.f32.gmra.mrb[0].mxu0 %v3423
    %v3600 = vpop.f32.mrb[0].mxu0
    %v3601 = vadd.f32 %v3396, %v3600
    %v3602 = vpop.f32.mrb[0].mxu0
    %3603 = vmatprep.mubr.f32.mxu0 0.0
    %3604 = vmatmul.mubr.f32.gmra.mrb[0].mxu0 %v3426
    %v3605 = vpop.f32.mrb[0].mxu0
    %v3606 = vadd.f32 %v3396, %v3605
    %v3607 = vpop.f32.mrb[0].mxu0
    %3608 = vmatprep.mubr.f32.mxu0 0.0
    %3609 = vmatmul.mubr.f32.gmra.mrb[0].mxu0 %v3429
    %v3610 = vpop.f32.mrb[0].mxu0
    %v3611 = vadd.f32 %v3396, %v3610
    %v3612 = vpop.f32.mrb[0].mxu0
    %3613 = vmatprep.mubr.f32.mxu0 0.0
    %3614 = vmatmul.mubr.f32.gmra.mrb[0].mxu0 %v3432
    %v3615 = vpop.f32.mrb[0].mxu0
    %v3616 = vadd.f32 %v3396, %v3615
    %v3617 = vpop.f32.mrb[0].mxu0
    %3618 = vmatprep.mubr.f32.mxu0 0.0
    %3619 = vmatmul.mubr.f32.gmra.mrb[0].mxu0 %v3435
    %v3620 = vpop.f32.mrb[0].mxu0
    %v3621 = vadd.f32 %v3396, %v3620
    %v3622 = vpop.f32.mrb[0].mxu0
    %3623 = vmatprep.mubr.f32.mxu0 0.0
    %3624 = vmatmul.mubr.f32.gmra.mrb[0].mxu0 %v3438
    %v3625 = vpop.f32.mrb[0].mxu0
    %v3626 = vadd.f32 %v3396, %v3625
    %v3627 = vpop.f32.mrb[0].mxu0
    %3628 = vmatprep.mubr.f32.mxu0 0.0
    %3629 = vmatmul.mubr.f32.gmra.mrb[0].mxu0 %v3441
    %v3630 = vpop.f32.mrb[0].mxu0
    %v3631 = vadd.f32 %v3396, %v3630
    %v3632 = vpop.f32.mrb[0].mxu0
    %3633 = vmatprep.mubr.f32.mxu0 0.0
    %3634 = vmatmul.mubr.f32.gmra.mrb[0].mxu0 %v3444
    %v3635 = vpop.f32.mrb[0].mxu0
    %v3636 = vadd.f32 %v3396, %v3635
    %v3637 = vpop.f32.mrb[0].mxu0
    %3638 = vmatprep.mubr.f32.mxu0 0.0
    %3639 = vmatmul.mubr.f32.gmra.mrb[0].mxu0 %v3447
    %v3640 = vpop.f32.mrb[0].mxu0
    %v3641 = vadd.f32 %v3396, %v3640
    %v3642 = vpop.f32.mrb[0].mxu0
    %3643 = vmatprep.mubr.f32.mxu0 0.0
    %3644 = vmatmul.mubr.f32.gmra.mrb[0].mxu0 %v3450
    %v3645 = vpop.f32.mrb[0].mxu0
    %v3646 = vadd.f32 %v3396, %v3645
    %v3647 = vpop.f32.mrb[0].mxu0
    %3648 = vmatprep.mubr.f32.mxu0 0.0
    %3649 = vmatmul.mubr.f32.gmra.mrb[0].mxu0 %v3453
    %v3650 = vpop.f32.mrb[0].mxu0
    %v3651 = vadd.f32 %v3396, %v3650
    %v3652 = vpop.f32.mrb[0].mxu0
    %3653 = vmatprep.mubr.f32.mxu0 0.0
    %3654 = vmatmul.mubr.f32.gmra.mrb[0].mxu0 %v3456
    %v3655 = vpop.f32.mrb[0].mxu0
    %v3656 = vadd.f32 %v3396, %v3655
    %v3657 = vpop.f32.mrb[0].mxu0
    %3658 = vmatprep.mubr.f32.mxu0 0.0
    %3659 = vmatmul.mubr.f32.gmra.mrb[0].mxu0 %v3459
    %v3660 = vpop.f32.mrb[0].mxu0
    %v3661 = vadd.f32 %v3396, %v3660
    %v3662 = vpop.f32.mrb[0].mxu0
    %3663 = vmatprep.mubr.f32.mxu0 0.0
    %3664 = vmatmul.mubr.f32.gmra.mrb[0].mxu0 %v3462
    %v3665 = vpop.f32.mrb[0].mxu0
    %v3666 = vadd.f32 %v3396, %v3665
    %v3667 = vpop.f32.mrb[0].mxu0
    %3668 = vmatprep.mubr.f32.mxu0 0.0
    %3669 = vmatmul.mubr.f32.gmra.mrb[0].mxu0 %v3465
    %v3670 = vpop.f32.mrb[0].mxu0
    %v3671 = vadd.f32 %v3396, %v3670
    %v3672 = vpop.f32.mrb[0].mxu0
    %3673 = vmatprep.mubr.f32.mxu0 0.0
    %3674 = vmatmul.mubr.f32.gmra.mrb[0].mxu0 %v3468
    %v3675 = vpop.f32.mrb[0].mxu0
    %v3676 = vadd.f32 %v3396, %v3675
    %v3677 = vpop.f32.mrb[0].mxu0
    %3678 = vmatprep.mubr.f32.mxu0 0.0
    %3679 = vmatmul.mubr.f32.gmra.mrb[0].mxu0 %v3471
    %v3680 = vpop.f32.mrb[0].mxu0
    %v3681 = vadd.f32 %v3396, %v3680
    %v3682 = vpop.f32.mrb[0].mxu0
    %3683 = vmatprep.mubr.f32.mxu0 0.0
    %3684 = vmatmul.mubr.f32.gmra.mrb[0].mxu0 %v3474
    %v3685 = vpop.f32.mrb[0].mxu0
    %v3686 = vadd.f32 %v3396, %v3685
    %v3687 = vpop.f32.mrb[0].mxu0
    %3688 = vmatprep.mubr.f32.mxu0 0.0
    %3689 = vmatmul.mubr.f32.gmra.mrb[0].mxu0 %v3477
    %v3690 = vpop.f32.mrb[0].mxu0
    %v3691 = vadd.f32 %v3396, %v3690
    %v3692 = vpop.f32.mrb[0].mxu0
    %3693 = vmatprep.mubr.f32.mxu0 0.0
    %3694 = vmatmul.mubr.f32.gmra.mrb[0].mxu0 %v3480
    %v3695 = vpop.f32.mrb[0].mxu0
    %v3696 = vadd.f32 %v3396, %v3695
    %v3697 = vpop.f32.mrb[0].mxu0
    %3698 = vmatprep.mubr.f32.mxu0 0.0
    %3699 = vmatmul.mubr.f32.gmra.mrb[0].mxu0 %v3483
    %v3700 = vpop.f32.mrb[0].mxu0
    %v3701 = vadd.f32 %v3396, %v3700
    %v3702 = vpop.f32.mrb[0].mxu0
    %3703 = vmatprep.mubr.f32.mxu0 0.0
    %3704 = vmatmul.mubr.f32.gmra.mrb[0].mxu0 %v3486
    %v3705 = vpop.f32.mrb[0].mxu0
    %v3706 = vadd.f32 %v3396, %v3705
    %v3707 = vpop.f32.mrb[0].mxu0
    %3708 = vmatprep.mubr.f32.mxu0 0.0
    %3709 = vmatmul.mubr.f32.gmra.mrb[0].mxu0 %v3489
    %v3710 = vpop.f32.mrb[0].mxu0
    %v3711 = vadd.f32 %v3396, %v3710
    %v3712 = vpop.f32.mrb[0].mxu0
    %3713 = vmatprep.mubr.f32.mxu0 0.0
    %3714 = vmatmul.mubr.f32.gmra.mrb[0].mxu0 %v3492
    %v3715 = vpop.f32.mrb[0].mxu0
    %v3716 = vadd.f32 %v3396, %v3715
    %v3717 = vpop.f32.mrb[0].mxu0
    %3718 = vdwg.mxu0
    %s3719 = scalar_lea.vmem [#allocation2], 320
    %v3720 = vld [vmem:[%s3719] sm:$0xff]
    %v3721 = vld [vmem:[%s3719 + $0x8] sm:$0xff]
    %v3722 = vld [vmem:[%s3719 + $0x10] sm:$0xff]
    %v3723 = vld [vmem:[%s3719 + $0x18] sm:$0xff]
    %s3724 = scalar_lea.vmem %s2, 10
    %v3725 = vld [vmem:[%s3724] sm:$0x1]
    %v3727 = vlaneseq
    %v3728 = vshrl.u32 %v3727, 7
    %v3729 = vsub.s32 0, %v3728
    %v3730 = vrot.slane %v3725, %v3729
    %v3733 = vsel %vm71, %v3561, 0
    %v3736 = vsel %vm71, %v3566, 0
    %v3739 = vsel %vm71, %v3571, 0
    %v3742 = vsel %vm71, %v3576, 0
    %v3745 = vsel %vm71, %v3581, 0
    %v3748 = vsel %vm71, %v3586, 0
    %v3751 = vsel %vm71, %v3591, 0
    %v3754 = vsel %vm71, %v3596, 0
    %v3757 = vsel %vm71, %v3601, 0
    %v3760 = vsel %vm71, %v3606, 0
    %v3763 = vsel %vm71, %v3611, 0
    %v3766 = vsel %vm71, %v3616, 0
    %v3769 = vsel %vm71, %v3621, 0
    %v3772 = vsel %vm71, %v3626, 0
    %v3775 = vsel %vm71, %v3631, 0
    %v3778 = vsel %vm71, %v3636, 0
    %v3781 = vsel %vm71, %v3641, 0
    %v3784 = vsel %vm71, %v3646, 0
    %v3787 = vsel %vm71, %v3651, 0
    %v3790 = vsel %vm71, %v3656, 0
    %v3793 = vsel %vm71, %v3661, 0
    %v3796 = vsel %vm71, %v3666, 0
    %v3799 = vsel %vm71, %v3671, 0
    %v3802 = vsel %vm71, %v3676, 0
    %v3805 = vsel %vm71, %v3681, 0
    %v3808 = vsel %vm71, %v3686, 0
    %v3811 = vsel %vm71, %v3691, 0
    %v3814 = vsel %vm71, %v3696, 0
    %v3817 = vsel %vm71, %v3701, 0
    %v3820 = vsel %vm71, %v3706, 0
    %v3823 = vsel %vm71, %v3711, 0
    %v3826 = vsel %vm71, %v3716, 0
    %3828 = vmatprep.subr.mxu0 0.0
    %3829 = vmatpush1.msra.mxu0 %v3720
    %3830 = vmatprep.subr.mxu0 0.0
    %3831 = vmatpush1.msra.mxu0 %v3721
    %3832 = vmatprep.subr.mxu0 0.0
    %3833 = vmatpush1.msra.mxu0 %v3722
    %3834 = vmatprep.subr.mxu0 0.0
    %3835 = vmatpush1.msra.mxu0 %v3723
    %3836 = vmatprep.subr.mxu0 0.0
    %3837 = vmatpush1.msra.mxu0 0.0
    %3838 = vmatprep.subr.mxu0 0.0
    %3839 = vmatpush1.msra.mxu0 0.0
    %3840 = vmatprep.subr.mxu0 0.0
    %3841 = vmatpush1.msra.mxu0 0.0
    %3842 = vmatprep.subr.mxu0 0.0
    %3843 = vmatpush1.msra.mxu0 0.0
    %3844 = vmatprep.subr.mxu0 0.0
    %3845 = vmatpush1.msra.mxu0 0.0
    %3846 = vmatprep.subr.mxu0 0.0
    %3847 = vmatpush1.msra.mxu0 0.0
    %3848 = vmatprep.subr.mxu0 0.0
    %3849 = vmatpush1.msra.mxu0 0.0
    %3850 = vmatprep.subr.mxu0 0.0
    %3851 = vmatpush1.msra.mxu0 0.0
    %3852 = vmatprep.subr.mxu0 0.0
    %3853 = vmatpush1.msra.mxu0 0.0
    %3854 = vmatprep.subr.mxu0 0.0
    %3855 = vmatpush1.msra.mxu0 0.0
    %3856 = vmatprep.subr.mxu0 0.0
    %3857 = vmatpush1.msra.mxu0 0.0
    %3858 = vmatprep.subr.mxu0 0.0
    %3859 = vmatpush1.msra.mxu0 0.0
    %3860 = vmatprep.subr.mxu0 0.0
    %3861 = vmatpush1.msra.mxu0 0.0
    %3862 = vmatprep.subr.mxu0 0.0
    %3863 = vmatpush1.msra.mxu0 0.0
    %3864 = vmatprep.subr.mxu0 0.0
    %3865 = vmatpush1.msra.mxu0 0.0
    %3866 = vmatprep.subr.mxu0 0.0
    %3867 = vmatpush1.msra.mxu0 0.0
    %3868 = vmatprep.subr.mxu0 0.0
    %3869 = vmatpush1.msra.mxu0 0.0
    %3870 = vmatprep.subr.mxu0 0.0
    %3871 = vmatpush1.msra.mxu0 0.0
    %3872 = vmatprep.subr.mxu0 0.0
    %3873 = vmatpush1.msra.mxu0 0.0
    %3874 = vmatprep.subr.mxu0 0.0
    %3875 = vmatpush1.msra.mxu0 0.0
    %3876 = vmatprep.subr.mxu0 0.0
    %3877 = vmatpush1.msra.mxu0 0.0
    %3878 = vmatprep.subr.mxu0 0.0
    %3879 = vmatpush1.msra.mxu0 0.0
    %3880 = vmatprep.subr.mxu0 0.0
    %3881 = vmatpush1.msra.mxu0 0.0
    %3882 = vmatprep.subr.mxu0 0.0
    %3883 = vmatpush1.msra.mxu0 0.0
    %3884 = vmatprep.subr.mxu0 0.0
    %3885 = vmatpush1.msra.mxu0 0.0
    %3886 = vmatprep.subr.mxu0 0.0
    %3887 = vmatpush1.msra.mxu0 0.0
    %3888 = vmatprep.subr.mxu0 0.0
    %3889 = vmatpush1.msra.mxu0 0.0
    %3890 = vmatprep.subr.mxu0 0.0
    %3891 = vmatpush1.msra.mxu0 0.0
    %3892 = vmatprep.mubr.f32.mxu0 0.0
    %3893 = vmatmul.mubr.f32.gmra.mrb[0].mxu0 %v3733
    %v3894 = vpop.f32.mrb[0].mxu0
    %v3895 = vadd.f32 %v3730, %v3894
    %v3896 = vpop.f32.mrb[0].mxu0
    %3897 = vmatprep.mubr.f32.mxu0 0.0
    %3898 = vmatmul.mubr.f32.gmra.mrb[0].mxu0 %v3736
    %v3899 = vpop.f32.mrb[0].mxu0
    %v3900 = vadd.f32 %v3730, %v3899
    %v3901 = vpop.f32.mrb[0].mxu0
    %3902 = vmatprep.mubr.f32.mxu0 0.0
    %3903 = vmatmul.mubr.f32.gmra.mrb[0].mxu0 %v3739
    %v3904 = vpop.f32.mrb[0].mxu0
    %v3905 = vadd.f32 %v3730, %v3904
    %v3906 = vpop.f32.mrb[0].mxu0
    %3907 = vmatprep.mubr.f32.mxu0 0.0
    %3908 = vmatmul.mubr.f32.gmra.mrb[0].mxu0 %v3742
    %v3909 = vpop.f32.mrb[0].mxu0
    %v3910 = vadd.f32 %v3730, %v3909
    %v3911 = vpop.f32.mrb[0].mxu0
    %3912 = vmatprep.mubr.f32.mxu0 0.0
    %3913 = vmatmul.mubr.f32.gmra.mrb[0].mxu0 %v3745
    %v3914 = vpop.f32.mrb[0].mxu0
    %v3915 = vadd.f32 %v3730, %v3914
    %v3916 = vpop.f32.mrb[0].mxu0
    %3917 = vmatprep.mubr.f32.mxu0 0.0
    %3918 = vmatmul.mubr.f32.gmra.mrb[0].mxu0 %v3748
    %v3919 = vpop.f32.mrb[0].mxu0
    %v3920 = vadd.f32 %v3730, %v3919
    %v3921 = vpop.f32.mrb[0].mxu0
    %3922 = vmatprep.mubr.f32.mxu0 0.0
    %3923 = vmatmul.mubr.f32.gmra.mrb[0].mxu0 %v3751
    %v3924 = vpop.f32.mrb[0].mxu0
    %v3925 = vadd.f32 %v3730, %v3924
    %v3926 = vpop.f32.mrb[0].mxu0
    %3927 = vmatprep.mubr.f32.mxu0 0.0
    %3928 = vmatmul.mubr.f32.gmra.mrb[0].mxu0 %v3754
    %v3929 = vpop.f32.mrb[0].mxu0
    %v3930 = vadd.f32 %v3730, %v3929
    %v3931 = vpop.f32.mrb[0].mxu0
    %3932 = vmatprep.mubr.f32.mxu0 0.0
    %3933 = vmatmul.mubr.f32.gmra.mrb[0].mxu0 %v3757
    %v3934 = vpop.f32.mrb[0].mxu0
    %v3935 = vadd.f32 %v3730, %v3934
    %v3936 = vpop.f32.mrb[0].mxu0
    %3937 = vmatprep.mubr.f32.mxu0 0.0
    %3938 = vmatmul.mubr.f32.gmra.mrb[0].mxu0 %v3760
    %v3939 = vpop.f32.mrb[0].mxu0
    %v3940 = vadd.f32 %v3730, %v3939
    %v3941 = vpop.f32.mrb[0].mxu0
    %3942 = vmatprep.mubr.f32.mxu0 0.0
    %3943 = vmatmul.mubr.f32.gmra.mrb[0].mxu0 %v3763
    %v3944 = vpop.f32.mrb[0].mxu0
    %v3945 = vadd.f32 %v3730, %v3944
    %v3946 = vpop.f32.mrb[0].mxu0
    %3947 = vmatprep.mubr.f32.mxu0 0.0
    %3948 = vmatmul.mubr.f32.gmra.mrb[0].mxu0 %v3766
    %v3949 = vpop.f32.mrb[0].mxu0
    %v3950 = vadd.f32 %v3730, %v3949
    %v3951 = vpop.f32.mrb[0].mxu0
    %3952 = vmatprep.mubr.f32.mxu0 0.0
    %3953 = vmatmul.mubr.f32.gmra.mrb[0].mxu0 %v3769
    %v3954 = vpop.f32.mrb[0].mxu0
    %v3955 = vadd.f32 %v3730, %v3954
    %v3956 = vpop.f32.mrb[0].mxu0
    %3957 = vmatprep.mubr.f32.mxu0 0.0
    %3958 = vmatmul.mubr.f32.gmra.mrb[0].mxu0 %v3772
    %v3959 = vpop.f32.mrb[0].mxu0
    %v3960 = vadd.f32 %v3730, %v3959
    %v3961 = vpop.f32.mrb[0].mxu0
    %3962 = vmatprep.mubr.f32.mxu0 0.0
    %3963 = vmatmul.mubr.f32.gmra.mrb[0].mxu0 %v3775
    %v3964 = vpop.f32.mrb[0].mxu0
    %v3965 = vadd.f32 %v3730, %v3964
    %v3966 = vpop.f32.mrb[0].mxu0
    %3967 = vmatprep.mubr.f32.mxu0 0.0
    %3968 = vmatmul.mubr.f32.gmra.mrb[0].mxu0 %v3778
    %v3969 = vpop.f32.mrb[0].mxu0
    %v3970 = vadd.f32 %v3730, %v3969
    %v3971 = vpop.f32.mrb[0].mxu0
    %3972 = vmatprep.mubr.f32.mxu0 0.0
    %3973 = vmatmul.mubr.f32.gmra.mrb[0].mxu0 %v3781
    %v3974 = vpop.f32.mrb[0].mxu0
    %v3975 = vadd.f32 %v3730, %v3974
    %v3976 = vpop.f32.mrb[0].mxu0
    %3977 = vmatprep.mubr.f32.mxu0 0.0
    %3978 = vmatmul.mubr.f32.gmra.mrb[0].mxu0 %v3784
    %v3979 = vpop.f32.mrb[0].mxu0
    %v3980 = vadd.f32 %v3730, %v3979
    %v3981 = vpop.f32.mrb[0].mxu0
    %3982 = vmatprep.mubr.f32.mxu0 0.0
    %3983 = vmatmul.mubr.f32.gmra.mrb[0].mxu0 %v3787
    %v3984 = vpop.f32.mrb[0].mxu0
    %v3985 = vadd.f32 %v3730, %v3984
    %v3986 = vpop.f32.mrb[0].mxu0
    %3987 = vmatprep.mubr.f32.mxu0 0.0
    %3988 = vmatmul.mubr.f32.gmra.mrb[0].mxu0 %v3790
    %v3989 = vpop.f32.mrb[0].mxu0
    %v3990 = vadd.f32 %v3730, %v3989
    %v3991 = vpop.f32.mrb[0].mxu0
    %3992 = vmatprep.mubr.f32.mxu0 0.0
    %3993 = vmatmul.mubr.f32.gmra.mrb[0].mxu0 %v3793
    %v3994 = vpop.f32.mrb[0].mxu0
    %v3995 = vadd.f32 %v3730, %v3994
    %v3996 = vpop.f32.mrb[0].mxu0
    %3997 = vmatprep.mubr.f32.mxu0 0.0
    %3998 = vmatmul.mubr.f32.gmra.mrb[0].mxu0 %v3796
    %v3999 = vpop.f32.mrb[0].mxu0
    %v4000 = vadd.f32 %v3730, %v3999
    %v4001 = vpop.f32.mrb[0].mxu0
    %4002 = vmatprep.mubr.f32.mxu0 0.0
    %4003 = vmatmul.mubr.f32.gmra.mrb[0].mxu0 %v3799
    %v4004 = vpop.f32.mrb[0].mxu0
    %v4005 = vadd.f32 %v3730, %v4004
    %v4006 = vpop.f32.mrb[0].mxu0
    %4007 = vmatprep.mubr.f32.mxu0 0.0
    %4008 = vmatmul.mubr.f32.gmra.mrb[0].mxu0 %v3802
    %v4009 = vpop.f32.mrb[0].mxu0
    %v4010 = vadd.f32 %v3730, %v4009
    %v4011 = vpop.f32.mrb[0].mxu0
    %4012 = vmatprep.mubr.f32.mxu0 0.0
    %4013 = vmatmul.mubr.f32.gmra.mrb[0].mxu0 %v3805
    %v4014 = vpop.f32.mrb[0].mxu0
    %v4015 = vadd.f32 %v3730, %v4014
    %v4016 = vpop.f32.mrb[0].mxu0
    %4017 = vmatprep.mubr.f32.mxu0 0.0
    %4018 = vmatmul.mubr.f32.gmra.mrb[0].mxu0 %v3808
    %v4019 = vpop.f32.mrb[0].mxu0
    %v4020 = vadd.f32 %v3730, %v4019
    %v4021 = vpop.f32.mrb[0].mxu0
    %4022 = vmatprep.mubr.f32.mxu0 0.0
    %4023 = vmatmul.mubr.f32.gmra.mrb[0].mxu0 %v3811
    %v4024 = vpop.f32.mrb[0].mxu0
    %v4025 = vadd.f32 %v3730, %v4024
    %v4026 = vpop.f32.mrb[0].mxu0
    %4027 = vmatprep.mubr.f32.mxu0 0.0
    %4028 = vmatmul.mubr.f32.gmra.mrb[0].mxu0 %v3814
    %v4029 = vpop.f32.mrb[0].mxu0
    %v4030 = vadd.f32 %v3730, %v4029
    %v4031 = vpop.f32.mrb[0].mxu0
    %4032 = vmatprep.mubr.f32.mxu0 0.0
    %4033 = vmatmul.mubr.f32.gmra.mrb[0].mxu0 %v3817
    %v4034 = vpop.f32.mrb[0].mxu0
    %v4035 = vadd.f32 %v3730, %v4034
    %v4036 = vpop.f32.mrb[0].mxu0
    %4037 = vmatprep.mubr.f32.mxu0 0.0
    %4038 = vmatmul.mubr.f32.gmra.mrb[0].mxu0 %v3820
    %v4039 = vpop.f32.mrb[0].mxu0
    %v4040 = vadd.f32 %v3730, %v4039
    %v4041 = vpop.f32.mrb[0].mxu0
    %4042 = vmatprep.mubr.f32.mxu0 0.0
    %4043 = vmatmul.mubr.f32.gmra.mrb[0].mxu0 %v3823
    %v4044 = vpop.f32.mrb[0].mxu0
    %v4045 = vadd.f32 %v3730, %v4044
    %v4046 = vpop.f32.mrb[0].mxu0
    %4047 = vmatprep.mubr.f32.mxu0 0.0
    %4048 = vmatmul.mubr.f32.gmra.mrb[0].mxu0 %v3826
    %v4049 = vpop.f32.mrb[0].mxu0
    %v4050 = vadd.f32 %v3730, %v4049
    %v4051 = vpop.f32.mrb[0].mxu0
    %4052 = vdwg.mxu0
    %v4053 = vmax.f32 %v3895, 0.0
    %v4054 = vmax.f32 %v3900, 0.0
    %v4055 = vmax.f32 %v3905, 0.0
    %v4056 = vmax.f32 %v3910, 0.0
    %v4057 = vmax.f32 %v3915, 0.0
    %v4058 = vmax.f32 %v3920, 0.0
    %v4059 = vmax.f32 %v3925, 0.0
    %v4060 = vmax.f32 %v3930, 0.0
    %v4061 = vmax.f32 %v3935, 0.0
    %v4062 = vmax.f32 %v3940, 0.0
    %v4063 = vmax.f32 %v3945, 0.0
    %v4064 = vmax.f32 %v3950, 0.0
    %v4065 = vmax.f32 %v3955, 0.0
    %v4066 = vmax.f32 %v3960, 0.0
    %v4067 = vmax.f32 %v3965, 0.0
    %v4068 = vmax.f32 %v3970, 0.0
    %v4069 = vmax.f32 %v3975, 0.0
    %v4070 = vmax.f32 %v3980, 0.0
    %v4071 = vmax.f32 %v3985, 0.0
    %v4072 = vmax.f32 %v3990, 0.0
    %v4073 = vmax.f32 %v3995, 0.0
    %v4074 = vmax.f32 %v4000, 0.0
    %v4075 = vmax.f32 %v4005, 0.0
    %v4076 = vmax.f32 %v4010, 0.0
    %v4077 = vmax.f32 %v4015, 0.0
    %v4078 = vmax.f32 %v4020, 0.0
    %v4079 = vmax.f32 %v4025, 0.0
    %v4080 = vmax.f32 %v4030, 0.0
    %v4081 = vmax.f32 %v4035, 0.0
    %v4082 = vmax.f32 %v4040, 0.0
    %v4083 = vmax.f32 %v4045, 0.0
    %v4084 = vmax.f32 %v4050, 0.0
    %s4085 = scalar_lea.vmem [#allocation2], 352
    %v4086 = vld [vmem:[%s4085] sm:$0xff]
    %v4087 = vld [vmem:[%s4085 + $0x8] sm:$0xff]
    %v4088 = vld [vmem:[%s4085 + $0x10] sm:$0xff]
    %v4089 = vld [vmem:[%s4085 + $0x18] sm:$0xff]
    %s4090 = scalar_lea.vmem %s2, 11
    %v4091 = vld [vmem:[%s4090] sm:$0x1]
    %v4093 = vlaneseq
    %v4094 = vshrl.u32 %v4093, 7
    %v4095 = vsub.s32 0, %v4094
    %v4096 = vrot.slane %v4091, %v4095
    %v4099 = vsel %vm71, %v4053, 0
    %v4102 = vsel %vm71, %v4054, 0
    %v4105 = vsel %vm71, %v4055, 0
    %v4108 = vsel %vm71, %v4056, 0
    %v4111 = vsel %vm71, %v4057, 0
    %v4114 = vsel %vm71, %v4058, 0
    %v4117 = vsel %vm71, %v4059, 0
    %v4120 = vsel %vm71, %v4060, 0
    %v4123 = vsel %vm71, %v4061, 0
    %v4126 = vsel %vm71, %v4062, 0
    %v4129 = vsel %vm71, %v4063, 0
    %v4132 = vsel %vm71, %v4064, 0
    %v4135 = vsel %vm71, %v4065, 0
    %v4138 = vsel %vm71, %v4066, 0
    %v4141 = vsel %vm71, %v4067, 0
    %v4144 = vsel %vm71, %v4068, 0
    %v4147 = vsel %vm71, %v4069, 0
    %v4150 = vsel %vm71, %v4070, 0
    %v4153 = vsel %vm71, %v4071, 0
    %v4156 = vsel %vm71, %v4072, 0
    %v4159 = vsel %vm71, %v4073, 0
    %v4162 = vsel %vm71, %v4074, 0
    %v4165 = vsel %vm71, %v4075, 0
    %v4168 = vsel %vm71, %v4076, 0
    %v4171 = vsel %vm71, %v4077, 0
    %v4174 = vsel %vm71, %v4078, 0
    %v4177 = vsel %vm71, %v4079, 0
    %v4180 = vsel %vm71, %v4080, 0
    %v4183 = vsel %vm71, %v4081, 0
    %v4186 = vsel %vm71, %v4082, 0
    %v4189 = vsel %vm71, %v4083, 0
    %v4192 = vsel %vm71, %v4084, 0
    %4194 = vmatprep.subr.mxu0 0.0
    %4195 = vmatpush1.msra.mxu0 %v4086
    %4196 = vmatprep.subr.mxu0 0.0
    %4197 = vmatpush1.msra.mxu0 %v4087
    %4198 = vmatprep.subr.mxu0 0.0
    %4199 = vmatpush1.msra.mxu0 %v4088
    %4200 = vmatprep.subr.mxu0 0.0
    %4201 = vmatpush1.msra.mxu0 %v4089
    %4202 = vmatprep.subr.mxu0 0.0
    %4203 = vmatpush1.msra.mxu0 0.0
    %4204 = vmatprep.subr.mxu0 0.0
    %4205 = vmatpush1.msra.mxu0 0.0
    %4206 = vmatprep.subr.mxu0 0.0
    %4207 = vmatpush1.msra.mxu0 0.0
    %4208 = vmatprep.subr.mxu0 0.0
    %4209 = vmatpush1.msra.mxu0 0.0
    %4210 = vmatprep.subr.mxu0 0.0
    %4211 = vmatpush1.msra.mxu0 0.0
    %4212 = vmatprep.subr.mxu0 0.0
    %4213 = vmatpush1.msra.mxu0 0.0
    %4214 = vmatprep.subr.mxu0 0.0
    %4215 = vmatpush1.msra.mxu0 0.0
    %4216 = vmatprep.subr.mxu0 0.0
    %4217 = vmatpush1.msra.mxu0 0.0
    %4218 = vmatprep.subr.mxu0 0.0
    %4219 = vmatpush1.msra.mxu0 0.0
    %4220 = vmatprep.subr.mxu0 0.0
    %4221 = vmatpush1.msra.mxu0 0.0
    %4222 = vmatprep.subr.mxu0 0.0
    %4223 = vmatpush1.msra.mxu0 0.0
    %4224 = vmatprep.subr.mxu0 0.0
    %4225 = vmatpush1.msra.mxu0 0.0
    %4226 = vmatprep.subr.mxu0 0.0
    %4227 = vmatpush1.msra.mxu0 0.0
    %4228 = vmatprep.subr.mxu0 0.0
    %4229 = vmatpush1.msra.mxu0 0.0
    %4230 = vmatprep.subr.mxu0 0.0
    %4231 = vmatpush1.msra.mxu0 0.0
    %4232 = vmatprep.subr.mxu0 0.0
    %4233 = vmatpush1.msra.mxu0 0.0
    %4234 = vmatprep.subr.mxu0 0.0
    %4235 = vmatpush1.msra.mxu0 0.0
    %4236 = vmatprep.subr.mxu0 0.0
    %4237 = vmatpush1.msra.mxu0 0.0
    %4238 = vmatprep.subr.mxu0 0.0
    %4239 = vmatpush1.msra.mxu0 0.0
    %4240 = vmatprep.subr.mxu0 0.0
    %4241 = vmatpush1.msra.mxu0 0.0
    %4242 = vmatprep.subr.mxu0 0.0
    %4243 = vmatpush1.msra.mxu0 0.0
    %4244 = vmatprep.subr.mxu0 0.0
    %4245 = vmatpush1.msra.mxu0 0.0
    %4246 = vmatprep.subr.mxu0 0.0
    %4247 = vmatpush1.msra.mxu0 0.0
    %4248 = vmatprep.subr.mxu0 0.0
    %4249 = vmatpush1.msra.mxu0 0.0
    %4250 = vmatprep.subr.mxu0 0.0
    %4251 = vmatpush1.msra.mxu0 0.0
    %4252 = vmatprep.subr.mxu0 0.0
    %4253 = vmatpush1.msra.mxu0 0.0
    %4254 = vmatprep.subr.mxu0 0.0
    %4255 = vmatpush1.msra.mxu0 0.0
    %4256 = vmatprep.subr.mxu0 0.0
    %4257 = vmatpush1.msra.mxu0 0.0
    %4258 = vmatprep.mubr.f32.mxu0 0.0
    %4259 = vmatmul.mubr.f32.gmra.mrb[0].mxu0 %v4099
    %v4260 = vpop.f32.mrb[0].mxu0
    %v4261 = vadd.f32 %v4096, %v4260
    %v4262 = vpop.f32.mrb[0].mxu0
    %4263 = vmatprep.mubr.f32.mxu0 0.0
    %4264 = vmatmul.mubr.f32.gmra.mrb[0].mxu0 %v4102
    %v4265 = vpop.f32.mrb[0].mxu0
    %v4266 = vadd.f32 %v4096, %v4265
    %v4267 = vpop.f32.mrb[0].mxu0
    %4268 = vmatprep.mubr.f32.mxu0 0.0
    %4269 = vmatmul.mubr.f32.gmra.mrb[0].mxu0 %v4105
    %v4270 = vpop.f32.mrb[0].mxu0
    %v4271 = vadd.f32 %v4096, %v4270
    %v4272 = vpop.f32.mrb[0].mxu0
    %4273 = vmatprep.mubr.f32.mxu0 0.0
    %4274 = vmatmul.mubr.f32.gmra.mrb[0].mxu0 %v4108
    %v4275 = vpop.f32.mrb[0].mxu0
    %v4276 = vadd.f32 %v4096, %v4275
    %v4277 = vpop.f32.mrb[0].mxu0
    %4278 = vmatprep.mubr.f32.mxu0 0.0
    %4279 = vmatmul.mubr.f32.gmra.mrb[0].mxu0 %v4111
    %v4280 = vpop.f32.mrb[0].mxu0
    %v4281 = vadd.f32 %v4096, %v4280
    %v4282 = vpop.f32.mrb[0].mxu0
    %4283 = vmatprep.mubr.f32.mxu0 0.0
    %4284 = vmatmul.mubr.f32.gmra.mrb[0].mxu0 %v4114
    %v4285 = vpop.f32.mrb[0].mxu0
    %v4286 = vadd.f32 %v4096, %v4285
    %v4287 = vpop.f32.mrb[0].mxu0
    %4288 = vmatprep.mubr.f32.mxu0 0.0
    %4289 = vmatmul.mubr.f32.gmra.mrb[0].mxu0 %v4117
    %v4290 = vpop.f32.mrb[0].mxu0
    %v4291 = vadd.f32 %v4096, %v4290
    %v4292 = vpop.f32.mrb[0].mxu0
    %4293 = vmatprep.mubr.f32.mxu0 0.0
    %4294 = vmatmul.mubr.f32.gmra.mrb[0].mxu0 %v4120
    %v4295 = vpop.f32.mrb[0].mxu0
    %v4296 = vadd.f32 %v4096, %v4295
    %v4297 = vpop.f32.mrb[0].mxu0
    %4298 = vmatprep.mubr.f32.mxu0 0.0
    %4299 = vmatmul.mubr.f32.gmra.mrb[0].mxu0 %v4123
    %v4300 = vpop.f32.mrb[0].mxu0
    %v4301 = vadd.f32 %v4096, %v4300
    %v4302 = vpop.f32.mrb[0].mxu0
    %4303 = vmatprep.mubr.f32.mxu0 0.0
    %4304 = vmatmul.mubr.f32.gmra.mrb[0].mxu0 %v4126
    %v4305 = vpop.f32.mrb[0].mxu0
    %v4306 = vadd.f32 %v4096, %v4305
    %v4307 = vpop.f32.mrb[0].mxu0
    %4308 = vmatprep.mubr.f32.mxu0 0.0
    %4309 = vmatmul.mubr.f32.gmra.mrb[0].mxu0 %v4129
    %v4310 = vpop.f32.mrb[0].mxu0
    %v4311 = vadd.f32 %v4096, %v4310
    %v4312 = vpop.f32.mrb[0].mxu0
    %4313 = vmatprep.mubr.f32.mxu0 0.0
    %4314 = vmatmul.mubr.f32.gmra.mrb[0].mxu0 %v4132
    %v4315 = vpop.f32.mrb[0].mxu0
    %v4316 = vadd.f32 %v4096, %v4315
    %v4317 = vpop.f32.mrb[0].mxu0
    %4318 = vmatprep.mubr.f32.mxu0 0.0
    %4319 = vmatmul.mubr.f32.gmra.mrb[0].mxu0 %v4135
    %v4320 = vpop.f32.mrb[0].mxu0
    %v4321 = vadd.f32 %v4096, %v4320
    %v4322 = vpop.f32.mrb[0].mxu0
    %4323 = vmatprep.mubr.f32.mxu0 0.0
    %4324 = vmatmul.mubr.f32.gmra.mrb[0].mxu0 %v4138
    %v4325 = vpop.f32.mrb[0].mxu0
    %v4326 = vadd.f32 %v4096, %v4325
    %v4327 = vpop.f32.mrb[0].mxu0
    %4328 = vmatprep.mubr.f32.mxu0 0.0
    %4329 = vmatmul.mubr.f32.gmra.mrb[0].mxu0 %v4141
    %v4330 = vpop.f32.mrb[0].mxu0
    %v4331 = vadd.f32 %v4096, %v4330
    %v4332 = vpop.f32.mrb[0].mxu0
    %4333 = vmatprep.mubr.f32.mxu0 0.0
    %4334 = vmatmul.mubr.f32.gmra.mrb[0].mxu0 %v4144
    %v4335 = vpop.f32.mrb[0].mxu0
    %v4336 = vadd.f32 %v4096, %v4335
    %v4337 = vpop.f32.mrb[0].mxu0
    %4338 = vmatprep.mubr.f32.mxu0 0.0
    %4339 = vmatmul.mubr.f32.gmra.mrb[0].mxu0 %v4147
    %v4340 = vpop.f32.mrb[0].mxu0
    %v4341 = vadd.f32 %v4096, %v4340
    %v4342 = vpop.f32.mrb[0].mxu0
    %4343 = vmatprep.mubr.f32.mxu0 0.0
    %4344 = vmatmul.mubr.f32.gmra.mrb[0].mxu0 %v4150
    %v4345 = vpop.f32.mrb[0].mxu0
    %v4346 = vadd.f32 %v4096, %v4345
    %v4347 = vpop.f32.mrb[0].mxu0
    %4348 = vmatprep.mubr.f32.mxu0 0.0
    %4349 = vmatmul.mubr.f32.gmra.mrb[0].mxu0 %v4153
    %v4350 = vpop.f32.mrb[0].mxu0
    %v4351 = vadd.f32 %v4096, %v4350
    %v4352 = vpop.f32.mrb[0].mxu0
    %4353 = vmatprep.mubr.f32.mxu0 0.0
    %4354 = vmatmul.mubr.f32.gmra.mrb[0].mxu0 %v4156
    %v4355 = vpop.f32.mrb[0].mxu0
    %v4356 = vadd.f32 %v4096, %v4355
    %v4357 = vpop.f32.mrb[0].mxu0
    %4358 = vmatprep.mubr.f32.mxu0 0.0
    %4359 = vmatmul.mubr.f32.gmra.mrb[0].mxu0 %v4159
    %v4360 = vpop.f32.mrb[0].mxu0
    %v4361 = vadd.f32 %v4096, %v4360
    %v4362 = vpop.f32.mrb[0].mxu0
    %4363 = vmatprep.mubr.f32.mxu0 0.0
    %4364 = vmatmul.mubr.f32.gmra.mrb[0].mxu0 %v4162
    %v4365 = vpop.f32.mrb[0].mxu0
    %v4366 = vadd.f32 %v4096, %v4365
    %v4367 = vpop.f32.mrb[0].mxu0
    %4368 = vmatprep.mubr.f32.mxu0 0.0
    %4369 = vmatmul.mubr.f32.gmra.mrb[0].mxu0 %v4165
    %v4370 = vpop.f32.mrb[0].mxu0
    %v4371 = vadd.f32 %v4096, %v4370
    %v4372 = vpop.f32.mrb[0].mxu0
    %4373 = vmatprep.mubr.f32.mxu0 0.0
    %4374 = vmatmul.mubr.f32.gmra.mrb[0].mxu0 %v4168
    %v4375 = vpop.f32.mrb[0].mxu0
    %v4376 = vadd.f32 %v4096, %v4375
    %v4377 = vpop.f32.mrb[0].mxu0
    %4378 = vmatprep.mubr.f32.mxu0 0.0
    %4379 = vmatmul.mubr.f32.gmra.mrb[0].mxu0 %v4171
    %v4380 = vpop.f32.mrb[0].mxu0
    %v4381 = vadd.f32 %v4096, %v4380
    %v4382 = vpop.f32.mrb[0].mxu0
    %4383 = vmatprep.mubr.f32.mxu0 0.0
    %4384 = vmatmul.mubr.f32.gmra.mrb[0].mxu0 %v4174
    %v4385 = vpop.f32.mrb[0].mxu0
    %v4386 = vadd.f32 %v4096, %v4385
    %v4387 = vpop.f32.mrb[0].mxu0
    %4388 = vmatprep.mubr.f32.mxu0 0.0
    %4389 = vmatmul.mubr.f32.gmra.mrb[0].mxu0 %v4177
    %v4390 = vpop.f32.mrb[0].mxu0
    %v4391 = vadd.f32 %v4096, %v4390
    %v4392 = vpop.f32.mrb[0].mxu0
    %4393 = vmatprep.mubr.f32.mxu0 0.0
    %4394 = vmatmul.mubr.f32.gmra.mrb[0].mxu0 %v4180
    %v4395 = vpop.f32.mrb[0].mxu0
    %v4396 = vadd.f32 %v4096, %v4395
    %v4397 = vpop.f32.mrb[0].mxu0
    %4398 = vmatprep.mubr.f32.mxu0 0.0
    %4399 = vmatmul.mubr.f32.gmra.mrb[0].mxu0 %v4183
    %v4400 = vpop.f32.mrb[0].mxu0
    %v4401 = vadd.f32 %v4096, %v4400
    %v4402 = vpop.f32.mrb[0].mxu0
    %4403 = vmatprep.mubr.f32.mxu0 0.0
    %4404 = vmatmul.mubr.f32.gmra.mrb[0].mxu0 %v4186
    %v4405 = vpop.f32.mrb[0].mxu0
    %v4406 = vadd.f32 %v4096, %v4405
    %v4407 = vpop.f32.mrb[0].mxu0
    %4408 = vmatprep.mubr.f32.mxu0 0.0
    %4409 = vmatmul.mubr.f32.gmra.mrb[0].mxu0 %v4189
    %v4410 = vpop.f32.mrb[0].mxu0
    %v4411 = vadd.f32 %v4096, %v4410
    %v4412 = vpop.f32.mrb[0].mxu0
    %4413 = vmatprep.mubr.f32.mxu0 0.0
    %4414 = vmatmul.mubr.f32.gmra.mrb[0].mxu0 %v4192
    %v4415 = vpop.f32.mrb[0].mxu0
    %v4416 = vadd.f32 %v4096, %v4415
    %v4417 = vpop.f32.mrb[0].mxu0
    %4418 = vdwg.mxu0
    %v4419 = vadd.f32 %v2955, %v4261
    %v4420 = vadd.f32 %v2956, %v4266
    %v4421 = vadd.f32 %v2957, %v4271
    %v4422 = vadd.f32 %v2958, %v4276
    %v4423 = vadd.f32 %v2959, %v4281
    %v4424 = vadd.f32 %v2960, %v4286
    %v4425 = vadd.f32 %v2961, %v4291
    %v4426 = vadd.f32 %v2962, %v4296
    %v4427 = vadd.f32 %v2963, %v4301
    %v4428 = vadd.f32 %v2964, %v4306
    %v4429 = vadd.f32 %v2965, %v4311
    %v4430 = vadd.f32 %v2966, %v4316
    %v4431 = vadd.f32 %v2967, %v4321
    %v4432 = vadd.f32 %v2968, %v4326
    %v4433 = vadd.f32 %v2969, %v4331
    %v4434 = vadd.f32 %v2970, %v4336
    %v4435 = vadd.f32 %v2971, %v4341
    %v4436 = vadd.f32 %v2972, %v4346
    %v4437 = vadd.f32 %v2973, %v4351
    %v4438 = vadd.f32 %v2974, %v4356
    %v4439 = vadd.f32 %v2975, %v4361
    %v4440 = vadd.f32 %v2976, %v4366
    %v4441 = vadd.f32 %v2977, %v4371
    %v4442 = vadd.f32 %v2978, %v4376
    %v4443 = vadd.f32 %v2979, %v4381
    %v4444 = vadd.f32 %v2980, %v4386
    %v4445 = vadd.f32 %v2981, %v4391
    %v4446 = vadd.f32 %v2982, %v4396
    %v4447 = vadd.f32 %v2983, %v4401
    %v4448 = vadd.f32 %v2984, %v4406
    %v4449 = vadd.f32 %v2985, %v4411
    %v4450 = vadd.f32 %v2986, %v4416
    %s4451 = scalar_lea.vmem [#allocation2], 384
    %v4452 = vld [vmem:[%s4451] sm:$0xff]
    %v4453 = vld [vmem:[%s4451 + $0x8] sm:$0xff]
    %v4454 = vld [vmem:[%s4451 + $0x10] sm:$0xff]
    %v4455 = vld [vmem:[%s4451 + $0x18] sm:$0xff]
    %s4456 = scalar_lea.vmem %s2, 12
    %v4457 = vld [vmem:[%s4456] sm:$0x1]
    %v4459 = vlaneseq
    %v4460 = vshrl.u32 %v4459, 7
    %v4461 = vsub.s32 0, %v4460
    %v4462 = vrot.slane %v4457, %v4461
    %v4465 = vsel %vm71, %v4419, 0
    %v4468 = vsel %vm71, %v4420, 0
    %v4471 = vsel %vm71, %v4421, 0
    %v4474 = vsel %vm71, %v4422, 0
    %v4477 = vsel %vm71, %v4423, 0
    %v4480 = vsel %vm71, %v4424, 0
    %v4483 = vsel %vm71, %v4425, 0
    %v4486 = vsel %vm71, %v4426, 0
    %v4489 = vsel %vm71, %v4427, 0
    %v4492 = vsel %vm71, %v4428, 0
    %v4495 = vsel %vm71, %v4429, 0
    %v4498 = vsel %vm71, %v4430, 0
    %v4501 = vsel %vm71, %v4431, 0
    %v4504 = vsel %vm71, %v4432, 0
    %v4507 = vsel %vm71, %v4433, 0
    %v4510 = vsel %vm71, %v4434, 0
    %v4513 = vsel %vm71, %v4435, 0
    %v4516 = vsel %vm71, %v4436, 0
    %v4519 = vsel %vm71, %v4437, 0
    %v4522 = vsel %vm71, %v4438, 0
    %v4525 = vsel %vm71, %v4439, 0
    %v4528 = vsel %vm71, %v4440, 0
    %v4531 = vsel %vm71, %v4441, 0
    %v4534 = vsel %vm71, %v4442, 0
    %v4537 = vsel %vm71, %v4443, 0
    %v4540 = vsel %vm71, %v4444, 0
    %v4543 = vsel %vm71, %v4445, 0
    %v4546 = vsel %vm71, %v4446, 0
    %v4549 = vsel %vm71, %v4447, 0
    %v4552 = vsel %vm71, %v4448, 0
    %v4555 = vsel %vm71, %v4449, 0
    %v4558 = vsel %vm71, %v4450, 0
    %4560 = vmatprep.subr.mxu0 0.0
    %4561 = vmatpush1.msra.mxu0 %v4452
    %4562 = vmatprep.subr.mxu0 0.0
    %4563 = vmatpush1.msra.mxu0 %v4453
    %4564 = vmatprep.subr.mxu0 0.0
    %4565 = vmatpush1.msra.mxu0 %v4454
    %4566 = vmatprep.subr.mxu0 0.0
    %4567 = vmatpush1.msra.mxu0 %v4455
    %4568 = vmatprep.subr.mxu0 0.0
    %4569 = vmatpush1.msra.mxu0 0.0
    %4570 = vmatprep.subr.mxu0 0.0
    %4571 = vmatpush1.msra.mxu0 0.0
    %4572 = vmatprep.subr.mxu0 0.0
    %4573 = vmatpush1.msra.mxu0 0.0
    %4574 = vmatprep.subr.mxu0 0.0
    %4575 = vmatpush1.msra.mxu0 0.0
    %4576 = vmatprep.subr.mxu0 0.0
    %4577 = vmatpush1.msra.mxu0 0.0
    %4578 = vmatprep.subr.mxu0 0.0
    %4579 = vmatpush1.msra.mxu0 0.0
    %4580 = vmatprep.subr.mxu0 0.0
    %4581 = vmatpush1.msra.mxu0 0.0
    %4582 = vmatprep.subr.mxu0 0.0
    %4583 = vmatpush1.msra.mxu0 0.0
    %4584 = vmatprep.subr.mxu0 0.0
    %4585 = vmatpush1.msra.mxu0 0.0
    %4586 = vmatprep.subr.mxu0 0.0
    %4587 = vmatpush1.msra.mxu0 0.0
    %4588 = vmatprep.subr.mxu0 0.0
    %4589 = vmatpush1.msra.mxu0 0.0
    %4590 = vmatprep.subr.mxu0 0.0
    %4591 = vmatpush1.msra.mxu0 0.0
    %4592 = vmatprep.subr.mxu0 0.0
    %4593 = vmatpush1.msra.mxu0 0.0
    %4594 = vmatprep.subr.mxu0 0.0
    %4595 = vmatpush1.msra.mxu0 0.0
    %4596 = vmatprep.subr.mxu0 0.0
    %4597 = vmatpush1.msra.mxu0 0.0
    %4598 = vmatprep.subr.mxu0 0.0
    %4599 = vmatpush1.msra.mxu0 0.0
    %4600 = vmatprep.subr.mxu0 0.0
    %4601 = vmatpush1.msra.mxu0 0.0
    %4602 = vmatprep.subr.mxu0 0.0
    %4603 = vmatpush1.msra.mxu0 0.0
    %4604 = vmatprep.subr.mxu0 0.0
    %4605 = vmatpush1.msra.mxu0 0.0
    %4606 = vmatprep.subr.mxu0 0.0
    %4607 = vmatpush1.msra.mxu0 0.0
    %4608 = vmatprep.subr.mxu0 0.0
    %4609 = vmatpush1.msra.mxu0 0.0
    %4610 = vmatprep.subr.mxu0 0.0
    %4611 = vmatpush1.msra.mxu0 0.0
    %4612 = vmatprep.subr.mxu0 0.0
    %4613 = vmatpush1.msra.mxu0 0.0
    %4614 = vmatprep.subr.mxu0 0.0
    %4615 = vmatpush1.msra.mxu0 0.0
    %4616 = vmatprep.subr.mxu0 0.0
    %4617 = vmatpush1.msra.mxu0 0.0
    %4618 = vmatprep.subr.mxu0 0.0
    %4619 = vmatpush1.msra.mxu0 0.0
    %4620 = vmatprep.subr.mxu0 0.0
    %4621 = vmatpush1.msra.mxu0 0.0
    %4622 = vmatprep.subr.mxu0 0.0
    %4623 = vmatpush1.msra.mxu0 0.0
    %4624 = vmatprep.mubr.f32.mxu0 0.0
    %4625 = vmatmul.mubr.f32.gmra.mrb[0].mxu0 %v4465
    %v4626 = vpop.f32.mrb[0].mxu0
    %v4627 = vadd.f32 %v4462, %v4626
    %v4628 = vpop.f32.mrb[0].mxu0
    %4629 = vmatprep.mubr.f32.mxu0 0.0
    %4630 = vmatmul.mubr.f32.gmra.mrb[0].mxu0 %v4468
    %v4631 = vpop.f32.mrb[0].mxu0
    %v4632 = vadd.f32 %v4462, %v4631
    %v4633 = vpop.f32.mrb[0].mxu0
    %4634 = vmatprep.mubr.f32.mxu0 0.0
    %4635 = vmatmul.mubr.f32.gmra.mrb[0].mxu0 %v4471
    %v4636 = vpop.f32.mrb[0].mxu0
    %v4637 = vadd.f32 %v4462, %v4636
    %v4638 = vpop.f32.mrb[0].mxu0
    %4639 = vmatprep.mubr.f32.mxu0 0.0
    %4640 = vmatmul.mubr.f32.gmra.mrb[0].mxu0 %v4474
    %v4641 = vpop.f32.mrb[0].mxu0
    %v4642 = vadd.f32 %v4462, %v4641
    %v4643 = vpop.f32.mrb[0].mxu0
    %4644 = vmatprep.mubr.f32.mxu0 0.0
    %4645 = vmatmul.mubr.f32.gmra.mrb[0].mxu0 %v4477
    %v4646 = vpop.f32.mrb[0].mxu0
    %v4647 = vadd.f32 %v4462, %v4646
    %v4648 = vpop.f32.mrb[0].mxu0
    %4649 = vmatprep.mubr.f32.mxu0 0.0
    %4650 = vmatmul.mubr.f32.gmra.mrb[0].mxu0 %v4480
    %v4651 = vpop.f32.mrb[0].mxu0
    %v4652 = vadd.f32 %v4462, %v4651
    %v4653 = vpop.f32.mrb[0].mxu0
    %4654 = vmatprep.mubr.f32.mxu0 0.0
    %4655 = vmatmul.mubr.f32.gmra.mrb[0].mxu0 %v4483
    %v4656 = vpop.f32.mrb[0].mxu0
    %v4657 = vadd.f32 %v4462, %v4656
    %v4658 = vpop.f32.mrb[0].mxu0
    %4659 = vmatprep.mubr.f32.mxu0 0.0
    %4660 = vmatmul.mubr.f32.gmra.mrb[0].mxu0 %v4486
    %v4661 = vpop.f32.mrb[0].mxu0
    %v4662 = vadd.f32 %v4462, %v4661
    %v4663 = vpop.f32.mrb[0].mxu0
    %4664 = vmatprep.mubr.f32.mxu0 0.0
    %4665 = vmatmul.mubr.f32.gmra.mrb[0].mxu0 %v4489
    %v4666 = vpop.f32.mrb[0].mxu0
    %v4667 = vadd.f32 %v4462, %v4666
    %v4668 = vpop.f32.mrb[0].mxu0
    %4669 = vmatprep.mubr.f32.mxu0 0.0
    %4670 = vmatmul.mubr.f32.gmra.mrb[0].mxu0 %v4492
    %v4671 = vpop.f32.mrb[0].mxu0
    %v4672 = vadd.f32 %v4462, %v4671
    %v4673 = vpop.f32.mrb[0].mxu0
    %4674 = vmatprep.mubr.f32.mxu0 0.0
    %4675 = vmatmul.mubr.f32.gmra.mrb[0].mxu0 %v4495
    %v4676 = vpop.f32.mrb[0].mxu0
    %v4677 = vadd.f32 %v4462, %v4676
    %v4678 = vpop.f32.mrb[0].mxu0
    %4679 = vmatprep.mubr.f32.mxu0 0.0
    %4680 = vmatmul.mubr.f32.gmra.mrb[0].mxu0 %v4498
    %v4681 = vpop.f32.mrb[0].mxu0
    %v4682 = vadd.f32 %v4462, %v4681
    %v4683 = vpop.f32.mrb[0].mxu0
    %4684 = vmatprep.mubr.f32.mxu0 0.0
    %4685 = vmatmul.mubr.f32.gmra.mrb[0].mxu0 %v4501
    %v4686 = vpop.f32.mrb[0].mxu0
    %v4687 = vadd.f32 %v4462, %v4686
    %v4688 = vpop.f32.mrb[0].mxu0
    %4689 = vmatprep.mubr.f32.mxu0 0.0
    %4690 = vmatmul.mubr.f32.gmra.mrb[0].mxu0 %v4504
    %v4691 = vpop.f32.mrb[0].mxu0
    %v4692 = vadd.f32 %v4462, %v4691
    %v4693 = vpop.f32.mrb[0].mxu0
    %4694 = vmatprep.mubr.f32.mxu0 0.0
    %4695 = vmatmul.mubr.f32.gmra.mrb[0].mxu0 %v4507
    %v4696 = vpop.f32.mrb[0].mxu0
    %v4697 = vadd.f32 %v4462, %v4696
    %v4698 = vpop.f32.mrb[0].mxu0
    %4699 = vmatprep.mubr.f32.mxu0 0.0
    %4700 = vmatmul.mubr.f32.gmra.mrb[0].mxu0 %v4510
    %v4701 = vpop.f32.mrb[0].mxu0
    %v4702 = vadd.f32 %v4462, %v4701
    %v4703 = vpop.f32.mrb[0].mxu0
    %4704 = vmatprep.mubr.f32.mxu0 0.0
    %4705 = vmatmul.mubr.f32.gmra.mrb[0].mxu0 %v4513
    %v4706 = vpop.f32.mrb[0].mxu0
    %v4707 = vadd.f32 %v4462, %v4706
    %v4708 = vpop.f32.mrb[0].mxu0
    %4709 = vmatprep.mubr.f32.mxu0 0.0
    %4710 = vmatmul.mubr.f32.gmra.mrb[0].mxu0 %v4516
    %v4711 = vpop.f32.mrb[0].mxu0
    %v4712 = vadd.f32 %v4462, %v4711
    %v4713 = vpop.f32.mrb[0].mxu0
    %4714 = vmatprep.mubr.f32.mxu0 0.0
    %4715 = vmatmul.mubr.f32.gmra.mrb[0].mxu0 %v4519
    %v4716 = vpop.f32.mrb[0].mxu0
    %v4717 = vadd.f32 %v4462, %v4716
    %v4718 = vpop.f32.mrb[0].mxu0
    %4719 = vmatprep.mubr.f32.mxu0 0.0
    %4720 = vmatmul.mubr.f32.gmra.mrb[0].mxu0 %v4522
    %v4721 = vpop.f32.mrb[0].mxu0
    %v4722 = vadd.f32 %v4462, %v4721
    %v4723 = vpop.f32.mrb[0].mxu0
    %4724 = vmatprep.mubr.f32.mxu0 0.0
    %4725 = vmatmul.mubr.f32.gmra.mrb[0].mxu0 %v4525
    %v4726 = vpop.f32.mrb[0].mxu0
    %v4727 = vadd.f32 %v4462, %v4726
    %v4728 = vpop.f32.mrb[0].mxu0
    %4729 = vmatprep.mubr.f32.mxu0 0.0
    %4730 = vmatmul.mubr.f32.gmra.mrb[0].mxu0 %v4528
    %v4731 = vpop.f32.mrb[0].mxu0
    %v4732 = vadd.f32 %v4462, %v4731
    %v4733 = vpop.f32.mrb[0].mxu0
    %4734 = vmatprep.mubr.f32.mxu0 0.0
    %4735 = vmatmul.mubr.f32.gmra.mrb[0].mxu0 %v4531
    %v4736 = vpop.f32.mrb[0].mxu0
    %v4737 = vadd.f32 %v4462, %v4736
    %v4738 = vpop.f32.mrb[0].mxu0
    %4739 = vmatprep.mubr.f32.mxu0 0.0
    %4740 = vmatmul.mubr.f32.gmra.mrb[0].mxu0 %v4534
    %v4741 = vpop.f32.mrb[0].mxu0
    %v4742 = vadd.f32 %v4462, %v4741
    %v4743 = vpop.f32.mrb[0].mxu0
    %4744 = vmatprep.mubr.f32.mxu0 0.0
    %4745 = vmatmul.mubr.f32.gmra.mrb[0].mxu0 %v4537
    %v4746 = vpop.f32.mrb[0].mxu0
    %v4747 = vadd.f32 %v4462, %v4746
    %v4748 = vpop.f32.mrb[0].mxu0
    %4749 = vmatprep.mubr.f32.mxu0 0.0
    %4750 = vmatmul.mubr.f32.gmra.mrb[0].mxu0 %v4540
    %v4751 = vpop.f32.mrb[0].mxu0
    %v4752 = vadd.f32 %v4462, %v4751
    %v4753 = vpop.f32.mrb[0].mxu0
    %4754 = vmatprep.mubr.f32.mxu0 0.0
    %4755 = vmatmul.mubr.f32.gmra.mrb[0].mxu0 %v4543
    %v4756 = vpop.f32.mrb[0].mxu0
    %v4757 = vadd.f32 %v4462, %v4756
    %v4758 = vpop.f32.mrb[0].mxu0
    %4759 = vmatprep.mubr.f32.mxu0 0.0
    %4760 = vmatmul.mubr.f32.gmra.mrb[0].mxu0 %v4546
    %v4761 = vpop.f32.mrb[0].mxu0
    %v4762 = vadd.f32 %v4462, %v4761
    %v4763 = vpop.f32.mrb[0].mxu0
    %4764 = vmatprep.mubr.f32.mxu0 0.0
    %4765 = vmatmul.mubr.f32.gmra.mrb[0].mxu0 %v4549
    %v4766 = vpop.f32.mrb[0].mxu0
    %v4767 = vadd.f32 %v4462, %v4766
    %v4768 = vpop.f32.mrb[0].mxu0
    %4769 = vmatprep.mubr.f32.mxu0 0.0
    %4770 = vmatmul.mubr.f32.gmra.mrb[0].mxu0 %v4552
    %v4771 = vpop.f32.mrb[0].mxu0
    %v4772 = vadd.f32 %v4462, %v4771
    %v4773 = vpop.f32.mrb[0].mxu0
    %4774 = vmatprep.mubr.f32.mxu0 0.0
    %4775 = vmatmul.mubr.f32.gmra.mrb[0].mxu0 %v4555
    %v4776 = vpop.f32.mrb[0].mxu0
    %v4777 = vadd.f32 %v4462, %v4776
    %v4778 = vpop.f32.mrb[0].mxu0
    %4779 = vmatprep.mubr.f32.mxu0 0.0
    %4780 = vmatmul.mubr.f32.gmra.mrb[0].mxu0 %v4558
    %v4781 = vpop.f32.mrb[0].mxu0
    %v4782 = vadd.f32 %v4462, %v4781
    %v4783 = vpop.f32.mrb[0].mxu0
    %4784 = vdwg.mxu0
    %v4785 = vmax.f32 %v4627, 0.0
    %v4786 = vmax.f32 %v4632, 0.0
    %v4787 = vmax.f32 %v4637, 0.0
    %v4788 = vmax.f32 %v4642, 0.0
    %v4789 = vmax.f32 %v4647, 0.0
    %v4790 = vmax.f32 %v4652, 0.0
    %v4791 = vmax.f32 %v4657, 0.0
    %v4792 = vmax.f32 %v4662, 0.0
    %v4793 = vmax.f32 %v4667, 0.0
    %v4794 = vmax.f32 %v4672, 0.0
    %v4795 = vmax.f32 %v4677, 0.0
    %v4796 = vmax.f32 %v4682, 0.0
    %v4797 = vmax.f32 %v4687, 0.0
    %v4798 = vmax.f32 %v4692, 0.0
    %v4799 = vmax.f32 %v4697, 0.0
    %v4800 = vmax.f32 %v4702, 0.0
    %v4801 = vmax.f32 %v4707, 0.0
    %v4802 = vmax.f32 %v4712, 0.0
    %v4803 = vmax.f32 %v4717, 0.0
    %v4804 = vmax.f32 %v4722, 0.0
    %v4805 = vmax.f32 %v4727, 0.0
    %v4806 = vmax.f32 %v4732, 0.0
    %v4807 = vmax.f32 %v4737, 0.0
    %v4808 = vmax.f32 %v4742, 0.0
    %v4809 = vmax.f32 %v4747, 0.0
    %v4810 = vmax.f32 %v4752, 0.0
    %v4811 = vmax.f32 %v4757, 0.0
    %v4812 = vmax.f32 %v4762, 0.0
    %v4813 = vmax.f32 %v4767, 0.0
    %v4814 = vmax.f32 %v4772, 0.0
    %v4815 = vmax.f32 %v4777, 0.0
    %v4816 = vmax.f32 %v4782, 0.0
    %s4817 = scalar_lea.vmem [#allocation2], 416
    %v4818 = vld [vmem:[%s4817] sm:$0xff]
    %v4819 = vld [vmem:[%s4817 + $0x8] sm:$0xff]
    %v4820 = vld [vmem:[%s4817 + $0x10] sm:$0xff]
    %v4821 = vld [vmem:[%s4817 + $0x18] sm:$0xff]
    %s4822 = scalar_lea.vmem %s2, 13
    %v4823 = vld [vmem:[%s4822] sm:$0x1]
    %v4825 = vlaneseq
    %v4826 = vshrl.u32 %v4825, 7
    %v4827 = vsub.s32 0, %v4826
    %v4828 = vrot.slane %v4823, %v4827
    %v4831 = vsel %vm71, %v4785, 0
    %v4834 = vsel %vm71, %v4786, 0
    %v4837 = vsel %vm71, %v4787, 0
    %v4840 = vsel %vm71, %v4788, 0
    %v4843 = vsel %vm71, %v4789, 0
    %v4846 = vsel %vm71, %v4790, 0
    %v4849 = vsel %vm71, %v4791, 0
    %v4852 = vsel %vm71, %v4792, 0
    %v4855 = vsel %vm71, %v4793, 0
    %v4858 = vsel %vm71, %v4794, 0
    %v4861 = vsel %vm71, %v4795, 0
    %v4864 = vsel %vm71, %v4796, 0
    %v4867 = vsel %vm71, %v4797, 0
    %v4870 = vsel %vm71, %v4798, 0
    %v4873 = vsel %vm71, %v4799, 0
    %v4876 = vsel %vm71, %v4800, 0
    %v4879 = vsel %vm71, %v4801, 0
    %v4882 = vsel %vm71, %v4802, 0
    %v4885 = vsel %vm71, %v4803, 0
    %v4888 = vsel %vm71, %v4804, 0
    %v4891 = vsel %vm71, %v4805, 0
    %v4894 = vsel %vm71, %v4806, 0
    %v4897 = vsel %vm71, %v4807, 0
    %v4900 = vsel %vm71, %v4808, 0
    %v4903 = vsel %vm71, %v4809, 0
    %v4906 = vsel %vm71, %v4810, 0
    %v4909 = vsel %vm71, %v4811, 0
    %v4912 = vsel %vm71, %v4812, 0
    %v4915 = vsel %vm71, %v4813, 0
    %v4918 = vsel %vm71, %v4814, 0
    %v4921 = vsel %vm71, %v4815, 0
    %v4924 = vsel %vm71, %v4816, 0
    %4926 = vmatprep.subr.mxu0 0.0
    %4927 = vmatpush1.msra.mxu0 %v4818
    %4928 = vmatprep.subr.mxu0 0.0
    %4929 = vmatpush1.msra.mxu0 %v4819
    %4930 = vmatprep.subr.mxu0 0.0
    %4931 = vmatpush1.msra.mxu0 %v4820
    %4932 = vmatprep.subr.mxu0 0.0
    %4933 = vmatpush1.msra.mxu0 %v4821
    %4934 = vmatprep.subr.mxu0 0.0
    %4935 = vmatpush1.msra.mxu0 0.0
    %4936 = vmatprep.subr.mxu0 0.0
    %4937 = vmatpush1.msra.mxu0 0.0
    %4938 = vmatprep.subr.mxu0 0.0
    %4939 = vmatpush1.msra.mxu0 0.0
    %4940 = vmatprep.subr.mxu0 0.0
    %4941 = vmatpush1.msra.mxu0 0.0
    %4942 = vmatprep.subr.mxu0 0.0
    %4943 = vmatpush1.msra.mxu0 0.0
    %4944 = vmatprep.subr.mxu0 0.0
    %4945 = vmatpush1.msra.mxu0 0.0
    %4946 = vmatprep.subr.mxu0 0.0
    %4947 = vmatpush1.msra.mxu0 0.0
    %4948 = vmatprep.subr.mxu0 0.0
    %4949 = vmatpush1.msra.mxu0 0.0
    %4950 = vmatprep.subr.mxu0 0.0
    %4951 = vmatpush1.msra.mxu0 0.0
    %4952 = vmatprep.subr.mxu0 0.0
    %4953 = vmatpush1.msra.mxu0 0.0
    %4954 = vmatprep.subr.mxu0 0.0
    %4955 = vmatpush1.msra.mxu0 0.0
    %4956 = vmatprep.subr.mxu0 0.0
    %4957 = vmatpush1.msra.mxu0 0.0
    %4958 = vmatprep.subr.mxu0 0.0
    %4959 = vmatpush1.msra.mxu0 0.0
    %4960 = vmatprep.subr.mxu0 0.0
    %4961 = vmatpush1.msra.mxu0 0.0
    %4962 = vmatprep.subr.mxu0 0.0
    %4963 = vmatpush1.msra.mxu0 0.0
    %4964 = vmatprep.subr.mxu0 0.0
    %4965 = vmatpush1.msra.mxu0 0.0
    %4966 = vmatprep.subr.mxu0 0.0
    %4967 = vmatpush1.msra.mxu0 0.0
    %4968 = vmatprep.subr.mxu0 0.0
    %4969 = vmatpush1.msra.mxu0 0.0
    %4970 = vmatprep.subr.mxu0 0.0
    %4971 = vmatpush1.msra.mxu0 0.0
    %4972 = vmatprep.subr.mxu0 0.0
    %4973 = vmatpush1.msra.mxu0 0.0
    %4974 = vmatprep.subr.mxu0 0.0
    %4975 = vmatpush1.msra.mxu0 0.0
    %4976 = vmatprep.subr.mxu0 0.0
    %4977 = vmatpush1.msra.mxu0 0.0
    %4978 = vmatprep.subr.mxu0 0.0
    %4979 = vmatpush1.msra.mxu0 0.0
    %4980 = vmatprep.subr.mxu0 0.0
    %4981 = vmatpush1.msra.mxu0 0.0
    %4982 = vmatprep.subr.mxu0 0.0
    %4983 = vmatpush1.msra.mxu0 0.0
    %4984 = vmatprep.subr.mxu0 0.0
    %4985 = vmatpush1.msra.mxu0 0.0
    %4986 = vmatprep.subr.mxu0 0.0
    %4987 = vmatpush1.msra.mxu0 0.0
    %4988 = vmatprep.subr.mxu0 0.0
    %4989 = vmatpush1.msra.mxu0 0.0
    %4990 = vmatprep.mubr.f32.mxu0 0.0
    %4991 = vmatmul.mubr.f32.gmra.mrb[0].mxu0 %v4831
    %v4992 = vpop.f32.mrb[0].mxu0
    %v4993 = vadd.f32 %v4828, %v4992
    %v4994 = vpop.f32.mrb[0].mxu0
    %4995 = vmatprep.mubr.f32.mxu0 0.0
    %4996 = vmatmul.mubr.f32.gmra.mrb[0].mxu0 %v4834
    %v4997 = vpop.f32.mrb[0].mxu0
    %v4998 = vadd.f32 %v4828, %v4997
    %v4999 = vpop.f32.mrb[0].mxu0
    %5000 = vmatprep.mubr.f32.mxu0 0.0
    %5001 = vmatmul.mubr.f32.gmra.mrb[0].mxu0 %v4837
    %v5002 = vpop.f32.mrb[0].mxu0
    %v5003 = vadd.f32 %v4828, %v5002
    %v5004 = vpop.f32.mrb[0].mxu0
    %5005 = vmatprep.mubr.f32.mxu0 0.0
    %5006 = vmatmul.mubr.f32.gmra.mrb[0].mxu0 %v4840
    %v5007 = vpop.f32.mrb[0].mxu0
    %v5008 = vadd.f32 %v4828, %v5007
    %v5009 = vpop.f32.mrb[0].mxu0
    %5010 = vmatprep.mubr.f32.mxu0 0.0
    %5011 = vmatmul.mubr.f32.gmra.mrb[0].mxu0 %v4843
    %v5012 = vpop.f32.mrb[0].mxu0
    %v5013 = vadd.f32 %v4828, %v5012
    %v5014 = vpop.f32.mrb[0].mxu0
    %5015 = vmatprep.mubr.f32.mxu0 0.0
    %5016 = vmatmul.mubr.f32.gmra.mrb[0].mxu0 %v4846
    %v5017 = vpop.f32.mrb[0].mxu0
    %v5018 = vadd.f32 %v4828, %v5017
    %v5019 = vpop.f32.mrb[0].mxu0
    %5020 = vmatprep.mubr.f32.mxu0 0.0
    %5021 = vmatmul.mubr.f32.gmra.mrb[0].mxu0 %v4849
    %v5022 = vpop.f32.mrb[0].mxu0
    %v5023 = vadd.f32 %v4828, %v5022
    %v5024 = vpop.f32.mrb[0].mxu0
    %5025 = vmatprep.mubr.f32.mxu0 0.0
    %5026 = vmatmul.mubr.f32.gmra.mrb[0].mxu0 %v4852
    %v5027 = vpop.f32.mrb[0].mxu0
    %v5028 = vadd.f32 %v4828, %v5027
    %v5029 = vpop.f32.mrb[0].mxu0
    %5030 = vmatprep.mubr.f32.mxu0 0.0
    %5031 = vmatmul.mubr.f32.gmra.mrb[0].mxu0 %v4855
    %v5032 = vpop.f32.mrb[0].mxu0
    %v5033 = vadd.f32 %v4828, %v5032
    %v5034 = vpop.f32.mrb[0].mxu0
    %5035 = vmatprep.mubr.f32.mxu0 0.0
    %5036 = vmatmul.mubr.f32.gmra.mrb[0].mxu0 %v4858
    %v5037 = vpop.f32.mrb[0].mxu0
    %v5038 = vadd.f32 %v4828, %v5037
    %v5039 = vpop.f32.mrb[0].mxu0
    %5040 = vmatprep.mubr.f32.mxu0 0.0
    %5041 = vmatmul.mubr.f32.gmra.mrb[0].mxu0 %v4861
    %v5042 = vpop.f32.mrb[0].mxu0
    %v5043 = vadd.f32 %v4828, %v5042
    %v5044 = vpop.f32.mrb[0].mxu0
    %5045 = vmatprep.mubr.f32.mxu0 0.0
    %5046 = vmatmul.mubr.f32.gmra.mrb[0].mxu0 %v4864
    %v5047 = vpop.f32.mrb[0].mxu0
    %v5048 = vadd.f32 %v4828, %v5047
    %v5049 = vpop.f32.mrb[0].mxu0
    %5050 = vmatprep.mubr.f32.mxu0 0.0
    %5051 = vmatmul.mubr.f32.gmra.mrb[0].mxu0 %v4867
    %v5052 = vpop.f32.mrb[0].mxu0
    %v5053 = vadd.f32 %v4828, %v5052
    %v5054 = vpop.f32.mrb[0].mxu0
    %5055 = vmatprep.mubr.f32.mxu0 0.0
    %5056 = vmatmul.mubr.f32.gmra.mrb[0].mxu0 %v4870
    %v5057 = vpop.f32.mrb[0].mxu0
    %v5058 = vadd.f32 %v4828, %v5057
    %v5059 = vpop.f32.mrb[0].mxu0
    %5060 = vmatprep.mubr.f32.mxu0 0.0
    %5061 = vmatmul.mubr.f32.gmra.mrb[0].mxu0 %v4873
    %v5062 = vpop.f32.mrb[0].mxu0
    %v5063 = vadd.f32 %v4828, %v5062
    %v5064 = vpop.f32.mrb[0].mxu0
    %5065 = vmatprep.mubr.f32.mxu0 0.0
    %5066 = vmatmul.mubr.f32.gmra.mrb[0].mxu0 %v4876
    %v5067 = vpop.f32.mrb[0].mxu0
    %v5068 = vadd.f32 %v4828, %v5067
    %v5069 = vpop.f32.mrb[0].mxu0
    %5070 = vmatprep.mubr.f32.mxu0 0.0
    %5071 = vmatmul.mubr.f32.gmra.mrb[0].mxu0 %v4879
    %v5072 = vpop.f32.mrb[0].mxu0
    %v5073 = vadd.f32 %v4828, %v5072
    %v5074 = vpop.f32.mrb[0].mxu0
    %5075 = vmatprep.mubr.f32.mxu0 0.0
    %5076 = vmatmul.mubr.f32.gmra.mrb[0].mxu0 %v4882
    %v5077 = vpop.f32.mrb[0].mxu0
    %v5078 = vadd.f32 %v4828, %v5077
    %v5079 = vpop.f32.mrb[0].mxu0
    %5080 = vmatprep.mubr.f32.mxu0 0.0
    %5081 = vmatmul.mubr.f32.gmra.mrb[0].mxu0 %v4885
    %v5082 = vpop.f32.mrb[0].mxu0
    %v5083 = vadd.f32 %v4828, %v5082
    %v5084 = vpop.f32.mrb[0].mxu0
    %5085 = vmatprep.mubr.f32.mxu0 0.0
    %5086 = vmatmul.mubr.f32.gmra.mrb[0].mxu0 %v4888
    %v5087 = vpop.f32.mrb[0].mxu0
    %v5088 = vadd.f32 %v4828, %v5087
    %v5089 = vpop.f32.mrb[0].mxu0
    %5090 = vmatprep.mubr.f32.mxu0 0.0
    %5091 = vmatmul.mubr.f32.gmra.mrb[0].mxu0 %v4891
    %v5092 = vpop.f32.mrb[0].mxu0
    %v5093 = vadd.f32 %v4828, %v5092
    %v5094 = vpop.f32.mrb[0].mxu0
    %5095 = vmatprep.mubr.f32.mxu0 0.0
    %5096 = vmatmul.mubr.f32.gmra.mrb[0].mxu0 %v4894
    %v5097 = vpop.f32.mrb[0].mxu0
    %v5098 = vadd.f32 %v4828, %v5097
    %v5099 = vpop.f32.mrb[0].mxu0
    %5100 = vmatprep.mubr.f32.mxu0 0.0
    %5101 = vmatmul.mubr.f32.gmra.mrb[0].mxu0 %v4897
    %v5102 = vpop.f32.mrb[0].mxu0
    %v5103 = vadd.f32 %v4828, %v5102
    %v5104 = vpop.f32.mrb[0].mxu0
    %5105 = vmatprep.mubr.f32.mxu0 0.0
    %5106 = vmatmul.mubr.f32.gmra.mrb[0].mxu0 %v4900
    %v5107 = vpop.f32.mrb[0].mxu0
    %v5108 = vadd.f32 %v4828, %v5107
    %v5109 = vpop.f32.mrb[0].mxu0
    %5110 = vmatprep.mubr.f32.mxu0 0.0
    %5111 = vmatmul.mubr.f32.gmra.mrb[0].mxu0 %v4903
    %v5112 = vpop.f32.mrb[0].mxu0
    %v5113 = vadd.f32 %v4828, %v5112
    %v5114 = vpop.f32.mrb[0].mxu0
    %5115 = vmatprep.mubr.f32.mxu0 0.0
    %5116 = vmatmul.mubr.f32.gmra.mrb[0].mxu0 %v4906
    %v5117 = vpop.f32.mrb[0].mxu0
    %v5118 = vadd.f32 %v4828, %v5117
    %v5119 = vpop.f32.mrb[0].mxu0
    %5120 = vmatprep.mubr.f32.mxu0 0.0
    %5121 = vmatmul.mubr.f32.gmra.mrb[0].mxu0 %v4909
    %v5122 = vpop.f32.mrb[0].mxu0
    %v5123 = vadd.f32 %v4828, %v5122
    %v5124 = vpop.f32.mrb[0].mxu0
    %5125 = vmatprep.mubr.f32.mxu0 0.0
    %5126 = vmatmul.mubr.f32.gmra.mrb[0].mxu0 %v4912
    %v5127 = vpop.f32.mrb[0].mxu0
    %v5128 = vadd.f32 %v4828, %v5127
    %v5129 = vpop.f32.mrb[0].mxu0
    %5130 = vmatprep.mubr.f32.mxu0 0.0
    %5131 = vmatmul.mubr.f32.gmra.mrb[0].mxu0 %v4915
    %v5132 = vpop.f32.mrb[0].mxu0
    %v5133 = vadd.f32 %v4828, %v5132
    %v5134 = vpop.f32.mrb[0].mxu0
    %5135 = vmatprep.mubr.f32.mxu0 0.0
    %5136 = vmatmul.mubr.f32.gmra.mrb[0].mxu0 %v4918
    %v5137 = vpop.f32.mrb[0].mxu0
    %v5138 = vadd.f32 %v4828, %v5137
    %v5139 = vpop.f32.mrb[0].mxu0
    %5140 = vmatprep.mubr.f32.mxu0 0.0
    %5141 = vmatmul.mubr.f32.gmra.mrb[0].mxu0 %v4921
    %v5142 = vpop.f32.mrb[0].mxu0
    %v5143 = vadd.f32 %v4828, %v5142
    %v5144 = vpop.f32.mrb[0].mxu0
    %5145 = vmatprep.mubr.f32.mxu0 0.0
    %5146 = vmatmul.mubr.f32.gmra.mrb[0].mxu0 %v4924
    %v5147 = vpop.f32.mrb[0].mxu0
    %v5148 = vadd.f32 %v4828, %v5147
    %v5149 = vpop.f32.mrb[0].mxu0
    %5150 = vdwg.mxu0
    %5151 = vrot.lane.b32.xlu0 %v633, 32
    %v5152 = vpop.permute.xlu0 %5151
    %5153 = vrot.lane.b32.xlu0 %v638, 32
    %v5154 = vpop.permute.xlu0 %5153
    %5155 = vrot.lane.b32.xlu0 %v643, 32
    %v5156 = vpop.permute.xlu0 %5155
    %5157 = vrot.lane.b32.xlu0 %v648, 32
    %v5158 = vpop.permute.xlu0 %5157
    %5159 = vrot.lane.b32.xlu0 %v653, 32
    %v5160 = vpop.permute.xlu0 %5159
    %5161 = vrot.lane.b32.xlu0 %v658, 32
    %v5162 = vpop.permute.xlu0 %5161
    %5163 = vrot.lane.b32.xlu0 %v663, 32
    %v5164 = vpop.permute.xlu0 %5163
    %5165 = vrot.lane.b32.xlu0 %v668, 32
    %v5166 = vpop.permute.xlu0 %5165
    %5167 = vrot.lane.b32.xlu0 %v673, 32
    %v5168 = vpop.permute.xlu0 %5167
    %5169 = vrot.lane.b32.xlu0 %v678, 32
    %v5170 = vpop.permute.xlu0 %5169
    %5171 = vrot.lane.b32.xlu0 %v683, 32
    %v5172 = vpop.permute.xlu0 %5171
    %5173 = vrot.lane.b32.xlu0 %v688, 32
    %v5174 = vpop.permute.xlu0 %5173
    %5175 = vrot.lane.b32.xlu0 %v693, 32
    %v5176 = vpop.permute.xlu0 %5175
    %5177 = vrot.lane.b32.xlu0 %v698, 32
    %v5178 = vpop.permute.xlu0 %5177
    %5179 = vrot.lane.b32.xlu0 %v703, 32
    %v5180 = vpop.permute.xlu0 %5179
    %5181 = vrot.lane.b32.xlu0 %v708, 32
    %v5182 = vpop.permute.xlu0 %5181
    %5183 = vrot.lane.b32.xlu0 %v713, 32
    %v5184 = vpop.permute.xlu0 %5183
    %5185 = vrot.lane.b32.xlu0 %v718, 32
    %v5186 = vpop.permute.xlu0 %5185
    %5187 = vrot.lane.b32.xlu0 %v723, 32
    %v5188 = vpop.permute.xlu0 %5187
    %5189 = vrot.lane.b32.xlu0 %v728, 32
    %v5190 = vpop.permute.xlu0 %5189
    %5191 = vrot.lane.b32.xlu0 %v733, 32
    %v5192 = vpop.permute.xlu0 %5191
    %5193 = vrot.lane.b32.xlu0 %v738, 32
    %v5194 = vpop.permute.xlu0 %5193
    %5195 = vrot.lane.b32.xlu0 %v743, 32
    %v5196 = vpop.permute.xlu0 %5195
    %5197 = vrot.lane.b32.xlu0 %v748, 32
    %v5198 = vpop.permute.xlu0 %5197
    %5199 = vrot.lane.b32.xlu0 %v753, 32
    %v5200 = vpop.permute.xlu0 %5199
    %5201 = vrot.lane.b32.xlu0 %v758, 32
    %v5202 = vpop.permute.xlu0 %5201
    %5203 = vrot.lane.b32.xlu0 %v763, 32
    %v5204 = vpop.permute.xlu0 %5203
    %5205 = vrot.lane.b32.xlu0 %v768, 32
    %v5206 = vpop.permute.xlu0 %5205
    %5207 = vrot.lane.b32.xlu0 %v773, 32
    %v5208 = vpop.permute.xlu0 %5207
    %5209 = vrot.lane.b32.xlu0 %v778, 32
    %v5210 = vpop.permute.xlu0 %5209
    %5211 = vrot.lane.b32.xlu0 %v783, 32
    %v5212 = vpop.permute.xlu0 %5211
    %5213 = vrot.lane.b32.xlu0 %v788, 32
    %v5214 = vpop.permute.xlu0 %5213
    %5247 = vrot.lane.b32.xlu0 %v2097, 48
    %v5248 = vpop.permute.xlu0 %5247
    %5249 = vrot.lane.b32.xlu0 %v2102, 48
    %v5250 = vpop.permute.xlu0 %5249
    %5251 = vrot.lane.b32.xlu0 %v2107, 48
    %v5252 = vpop.permute.xlu0 %5251
    %5253 = vrot.lane.b32.xlu0 %v2112, 48
    %v5254 = vpop.permute.xlu0 %5253
    %5255 = vrot.lane.b32.xlu0 %v2117, 48
    %v5256 = vpop.permute.xlu0 %5255
    %5257 = vrot.lane.b32.xlu0 %v2122, 48
    %v5258 = vpop.permute.xlu0 %5257
    %5259 = vrot.lane.b32.xlu0 %v2127, 48
    %v5260 = vpop.permute.xlu0 %5259
    %5261 = vrot.lane.b32.xlu0 %v2132, 48
    %v5262 = vpop.permute.xlu0 %5261
    %5263 = vrot.lane.b32.xlu0 %v2137, 48
    %v5264 = vpop.permute.xlu0 %5263
    %5265 = vrot.lane.b32.xlu0 %v2142, 48
    %v5266 = vpop.permute.xlu0 %5265
    %5267 = vrot.lane.b32.xlu0 %v2147, 48
    %v5268 = vpop.permute.xlu0 %5267
    %5269 = vrot.lane.b32.xlu0 %v2152, 48
    %v5270 = vpop.permute.xlu0 %5269
    %5271 = vrot.lane.b32.xlu0 %v2157, 48
    %v5272 = vpop.permute.xlu0 %5271
    %5273 = vrot.lane.b32.xlu0 %v2162, 48
    %v5274 = vpop.permute.xlu0 %5273
    %5275 = vrot.lane.b32.xlu0 %v2167, 48
    %v5276 = vpop.permute.xlu0 %5275
    %5277 = vrot.lane.b32.xlu0 %v2172, 48
    %v5278 = vpop.permute.xlu0 %5277
    %5279 = vrot.lane.b32.xlu0 %v2177, 48
    %v5280 = vpop.permute.xlu0 %5279
    %5281 = vrot.lane.b32.xlu0 %v2182, 48
    %v5282 = vpop.permute.xlu0 %5281
    %5283 = vrot.lane.b32.xlu0 %v2187, 48
    %v5284 = vpop.permute.xlu0 %5283
    %5285 = vrot.lane.b32.xlu0 %v2192, 48
    %v5286 = vpop.permute.xlu0 %5285
    %5287 = vrot.lane.b32.xlu0 %v2197, 48
    %v5288 = vpop.permute.xlu0 %5287
    %5289 = vrot.lane.b32.xlu0 %v2202, 48
    %v5290 = vpop.permute.xlu0 %5289
    %5291 = vrot.lane.b32.xlu0 %v2207, 48
    %v5292 = vpop.permute.xlu0 %5291
    %5293 = vrot.lane.b32.xlu0 %v2212, 48
    %v5294 = vpop.permute.xlu0 %5293
    %5295 = vrot.lane.b32.xlu0 %v2217, 48
    %v5296 = vpop.permute.xlu0 %5295
    %5297 = vrot.lane.b32.xlu0 %v2222, 48
    %v5298 = vpop.permute.xlu0 %5297
    %5299 = vrot.lane.b32.xlu0 %v2227, 48
    %v5300 = vpop.permute.xlu0 %5299
    %5301 = vrot.lane.b32.xlu0 %v2232, 48
    %v5302 = vpop.permute.xlu0 %5301
    %5303 = vrot.lane.b32.xlu0 %v2237, 48
    %v5304 = vpop.permute.xlu0 %5303
    %5305 = vrot.lane.b32.xlu0 %v2242, 48
    %v5306 = vpop.permute.xlu0 %5305
    %5307 = vrot.lane.b32.xlu0 %v2247, 48
    %v5308 = vpop.permute.xlu0 %5307
    %5309 = vrot.lane.b32.xlu0 %v2252, 48
    %v5310 = vpop.permute.xlu0 %5309
    %5343 = vrot.lane.b32.xlu0 %v3561, 64
    %v5344 = vpop.permute.xlu0 %5343
    %5345 = vrot.lane.b32.xlu0 %v3566, 64
    %v5346 = vpop.permute.xlu0 %5345
    %5347 = vrot.lane.b32.xlu0 %v3571, 64
    %v5348 = vpop.permute.xlu0 %5347
    %5349 = vrot.lane.b32.xlu0 %v3576, 64
    %v5350 = vpop.permute.xlu0 %5349
    %5351 = vrot.lane.b32.xlu0 %v3581, 64
    %v5352 = vpop.permute.xlu0 %5351
    %5353 = vrot.lane.b32.xlu0 %v3586, 64
    %v5354 = vpop.permute.xlu0 %5353
    %5355 = vrot.lane.b32.xlu0 %v3591, 64
    %v5356 = vpop.permute.xlu0 %5355
    %5357 = vrot.lane.b32.xlu0 %v3596, 64
    %v5358 = vpop.permute.xlu0 %5357
    %5359 = vrot.lane.b32.xlu0 %v3601, 64
    %v5360 = vpop.permute.xlu0 %5359
    %5361 = vrot.lane.b32.xlu0 %v3606, 64
    %v5362 = vpop.permute.xlu0 %5361
    %5363 = vrot.lane.b32.xlu0 %v3611, 64
    %v5364 = vpop.permute.xlu0 %5363
    %5365 = vrot.lane.b32.xlu0 %v3616, 64
    %v5366 = vpop.permute.xlu0 %5365
    %5367 = vrot.lane.b32.xlu0 %v3621, 64
    %v5368 = vpop.permute.xlu0 %5367
    %5369 = vrot.lane.b32.xlu0 %v3626, 64
    %v5370 = vpop.permute.xlu0 %5369
    %5371 = vrot.lane.b32.xlu0 %v3631, 64
    %v5372 = vpop.permute.xlu0 %5371
    %5373 = vrot.lane.b32.xlu0 %v3636, 64
    %v5374 = vpop.permute.xlu0 %5373
    %5375 = vrot.lane.b32.xlu0 %v3641, 64
    %v5376 = vpop.permute.xlu0 %5375
    %5377 = vrot.lane.b32.xlu0 %v3646, 64
    %v5378 = vpop.permute.xlu0 %5377
    %5379 = vrot.lane.b32.xlu0 %v3651, 64
    %v5380 = vpop.permute.xlu0 %5379
    %5381 = vrot.lane.b32.xlu0 %v3656, 64
    %v5382 = vpop.permute.xlu0 %5381
    %5383 = vrot.lane.b32.xlu0 %v3661, 64
    %v5384 = vpop.permute.xlu0 %5383
    %5385 = vrot.lane.b32.xlu0 %v3666, 64
    %v5386 = vpop.permute.xlu0 %5385
    %5387 = vrot.lane.b32.xlu0 %v3671, 64
    %v5388 = vpop.permute.xlu0 %5387
    %5389 = vrot.lane.b32.xlu0 %v3676, 64
    %v5390 = vpop.permute.xlu0 %5389
    %5391 = vrot.lane.b32.xlu0 %v3681, 64
    %v5392 = vpop.permute.xlu0 %5391
    %5393 = vrot.lane.b32.xlu0 %v3686, 64
    %v5394 = vpop.permute.xlu0 %5393
    %5395 = vrot.lane.b32.xlu0 %v3691, 64
    %v5396 = vpop.permute.xlu0 %5395
    %5397 = vrot.lane.b32.xlu0 %v3696, 64
    %v5398 = vpop.permute.xlu0 %5397
    %5399 = vrot.lane.b32.xlu0 %v3701, 64
    %v5400 = vpop.permute.xlu0 %5399
    %5401 = vrot.lane.b32.xlu0 %v3706, 64
    %v5402 = vpop.permute.xlu0 %5401
    %5403 = vrot.lane.b32.xlu0 %v3711, 64
    %v5404 = vpop.permute.xlu0 %5403
    %5405 = vrot.lane.b32.xlu0 %v3716, 64
    %v5406 = vpop.permute.xlu0 %5405
    %v5439 = vsel %vm71, %v4993, %v5152
    %v5440 = vsel %vm71, %v4998, %v5154
    %v5441 = vsel %vm71, %v5003, %v5156
    %v5442 = vsel %vm71, %v5008, %v5158
    %v5443 = vsel %vm71, %v5013, %v5160
    %v5444 = vsel %vm71, %v5018, %v5162
    %v5445 = vsel %vm71, %v5023, %v5164
    %v5446 = vsel %vm71, %v5028, %v5166
    %v5447 = vsel %vm71, %v5033, %v5168
    %v5448 = vsel %vm71, %v5038, %v5170
    %v5449 = vsel %vm71, %v5043, %v5172
    %v5450 = vsel %vm71, %v5048, %v5174
    %v5451 = vsel %vm71, %v5053, %v5176
    %v5452 = vsel %vm71, %v5058, %v5178
    %v5453 = vsel %vm71, %v5063, %v5180
    %v5454 = vsel %vm71, %v5068, %v5182
    %v5455 = vsel %vm71, %v5073, %v5184
    %v5456 = vsel %vm71, %v5078, %v5186
    %v5457 = vsel %vm71, %v5083, %v5188
    %v5458 = vsel %vm71, %v5088, %v5190
    %v5459 = vsel %vm71, %v5093, %v5192
    %v5460 = vsel %vm71, %v5098, %v5194
    %v5461 = vsel %vm71, %v5103, %v5196
    %v5462 = vsel %vm71, %v5108, %v5198
    %v5463 = vsel %vm71, %v5113, %v5200
    %v5464 = vsel %vm71, %v5118, %v5202
    %v5465 = vsel %vm71, %v5123, %v5204
    %v5466 = vsel %vm71, %v5128, %v5206
    %v5467 = vsel %vm71, %v5133, %v5208
    %v5468 = vsel %vm71, %v5138, %v5210
    %v5469 = vsel %vm71, %v5143, %v5212
    %v5470 = vsel %vm71, %v5148, %v5214
    %vm5471 = vcmask 392192
    %v5472 = vsel %vm5471, %v5439, %v5248
    %v5473 = vsel %vm5471, %v5440, %v5250
    %v5474 = vsel %vm5471, %v5441, %v5252
    %v5475 = vsel %vm5471, %v5442, %v5254
    %v5476 = vsel %vm5471, %v5443, %v5256
    %v5477 = vsel %vm5471, %v5444, %v5258
    %v5478 = vsel %vm5471, %v5445, %v5260
    %v5479 = vsel %vm5471, %v5446, %v5262
    %v5480 = vsel %vm5471, %v5447, %v5264
    %v5481 = vsel %vm5471, %v5448, %v5266
    %v5482 = vsel %vm5471, %v5449, %v5268
    %v5483 = vsel %vm5471, %v5450, %v5270
    %v5484 = vsel %vm5471, %v5451, %v5272
    %v5485 = vsel %vm5471, %v5452, %v5274
    %v5486 = vsel %vm5471, %v5453, %v5276
    %v5487 = vsel %vm5471, %v5454, %v5278
    %v5488 = vsel %vm5471, %v5455, %v5280
    %v5489 = vsel %vm5471, %v5456, %v5282
    %v5490 = vsel %vm5471, %v5457, %v5284
    %v5491 = vsel %vm5471, %v5458, %v5286
    %v5492 = vsel %vm5471, %v5459, %v5288
    %v5493 = vsel %vm5471, %v5460, %v5290
    %v5494 = vsel %vm5471, %v5461, %v5292
    %v5495 = vsel %vm5471, %v5462, %v5294
    %v5496 = vsel %vm5471, %v5463, %v5296
    %v5497 = vsel %vm5471, %v5464, %v5298
    %v5498 = vsel %vm5471, %v5465, %v5300
    %v5499 = vsel %vm5471, %v5466, %v5302
    %v5500 = vsel %vm5471, %v5467, %v5304
    %v5501 = vsel %vm5471, %v5468, %v5306
    %v5502 = vsel %vm5471, %v5469, %v5308
    %v5503 = vsel %vm5471, %v5470, %v5310
    %vm5504 = vcmask 523264
    %v5505 = vsel %vm5504, %v5472, %v5344
    %v5506 = vsel %vm5504, %v5473, %v5346
    %v5507 = vsel %vm5504, %v5474, %v5348
    %v5508 = vsel %vm5504, %v5475, %v5350
    %v5509 = vsel %vm5504, %v5476, %v5352
    %v5510 = vsel %vm5504, %v5477, %v5354
    %v5511 = vsel %vm5504, %v5478, %v5356
    %v5512 = vsel %vm5504, %v5479, %v5358
    %v5513 = vsel %vm5504, %v5480, %v5360
    %v5514 = vsel %vm5504, %v5481, %v5362
    %v5515 = vsel %vm5504, %v5482, %v5364
    %v5516 = vsel %vm5504, %v5483, %v5366
    %v5517 = vsel %vm5504, %v5484, %v5368
    %v5518 = vsel %vm5504, %v5485, %v5370
    %v5519 = vsel %vm5504, %v5486, %v5372
    %v5520 = vsel %vm5504, %v5487, %v5374
    %v5521 = vsel %vm5504, %v5488, %v5376
    %v5522 = vsel %vm5504, %v5489, %v5378
    %v5523 = vsel %vm5504, %v5490, %v5380
    %v5524 = vsel %vm5504, %v5491, %v5382
    %v5525 = vsel %vm5504, %v5492, %v5384
    %v5526 = vsel %vm5504, %v5493, %v5386
    %v5527 = vsel %vm5504, %v5494, %v5388
    %v5528 = vsel %vm5504, %v5495, %v5390
    %v5529 = vsel %vm5504, %v5496, %v5392
    %v5530 = vsel %vm5504, %v5497, %v5394
    %v5531 = vsel %vm5504, %v5498, %v5396
    %v5532 = vsel %vm5504, %v5499, %v5398
    %v5533 = vsel %vm5504, %v5500, %v5400
    %v5534 = vsel %vm5504, %v5501, %v5402
    %v5535 = vsel %vm5504, %v5502, %v5404
    %v5536 = vsel %vm5504, %v5503, %v5406
    %vm5537 = vcmask 654336
    %v5538 = vsel %vm5537, %v5505, 0.0
    %v5539 = vsel %vm5537, %v5506, 0.0
    %v5540 = vsel %vm5537, %v5507, 0.0
    %v5541 = vsel %vm5537, %v5508, 0.0
    %v5542 = vsel %vm5537, %v5509, 0.0
    %v5543 = vsel %vm5537, %v5510, 0.0
    %v5544 = vsel %vm5537, %v5511, 0.0
    %v5545 = vsel %vm5537, %v5512, 0.0
    %v5546 = vsel %vm5537, %v5513, 0.0
    %v5547 = vsel %vm5537, %v5514, 0.0
    %v5548 = vsel %vm5537, %v5515, 0.0
    %v5549 = vsel %vm5537, %v5516, 0.0
    %v5550 = vsel %vm5537, %v5517, 0.0
    %v5551 = vsel %vm5537, %v5518, 0.0
    %v5552 = vsel %vm5537, %v5519, 0.0
    %v5553 = vsel %vm5537, %v5520, 0.0
    %v5554 = vsel %vm5537, %v5521, 0.0
    %v5555 = vsel %vm5537, %v5522, 0.0
    %v5556 = vsel %vm5537, %v5523, 0.0
    %v5557 = vsel %vm5537, %v5524, 0.0
    %v5558 = vsel %vm5537, %v5525, 0.0
    %v5559 = vsel %vm5537, %v5526, 0.0
    %v5560 = vsel %vm5537, %v5527, 0.0
    %v5561 = vsel %vm5537, %v5528, 0.0
    %v5562 = vsel %vm5537, %v5529, 0.0
    %v5563 = vsel %vm5537, %v5530, 0.0
    %v5564 = vsel %vm5537, %v5531, 0.0
    %v5565 = vsel %vm5537, %v5532, 0.0
    %v5566 = vsel %vm5537, %v5533, 0.0
    %v5567 = vsel %vm5537, %v5534, 0.0
    %v5568 = vsel %vm5537, %v5535, 0.0
    %v5569 = vsel %vm5537, %v5536, 0.0
    %5570 = vst [vmem:[%s3] sm:$0xff] %v5538
    %5571 = vst [vmem:[%s3 + $0x8] sm:$0xff] %v5539
    %5572 = vst [vmem:[%s3 + $0x10] sm:$0xff] %v5540
    %5573 = vst [vmem:[%s3 + $0x18] sm:$0xff] %v5541
    %5574 = vst [vmem:[%s3 + $0x20] sm:$0xff] %v5542
    %5575 = vst [vmem:[%s3 + $0x28] sm:$0xff] %v5543
    %5576 = vst [vmem:[%s3 + $0x30] sm:$0xff] %v5544
    %5577 = vst [vmem:[%s3 + $0x38] sm:$0xff] %v5545
    %5578 = vst [vmem:[%s3 + $0x40] sm:$0xff] %v5546
    %5579 = vst [vmem:[%s3 + $0x48] sm:$0xff] %v5547
    %5580 = vst [vmem:[%s3 + $0x50] sm:$0xff] %v5548
    %5581 = vst [vmem:[%s3 + $0x58] sm:$0xff] %v5549
    %5582 = vst [vmem:[%s3 + $0x60] sm:$0xff] %v5550
    %5583 = vst [vmem:[%s3 + $0x68] sm:$0xff] %v5551
    %5584 = vst [vmem:[%s3 + $0x70] sm:$0xff] %v5552
    %5585 = vst [vmem:[%s3 + $0x78] sm:$0xff] %v5553
    %5586 = vst [vmem:[%s3 + $0x80] sm:$0xff] %v5554
    %5587 = vst [vmem:[%s3 + $0x88] sm:$0xff] %v5555
    %5588 = vst [vmem:[%s3 + $0x90] sm:$0xff] %v5556
    %5589 = vst [vmem:[%s3 + $0x98] sm:$0xff] %v5557
    %5590 = vst [vmem:[%s3 + $0xa0] sm:$0xff] %v5558
    %5591 = vst [vmem:[%s3 + $0xa8] sm:$0xff] %v5559
    %5592 = vst [vmem:[%s3 + $0xb0] sm:$0xff] %v5560
    %5593 = vst [vmem:[%s3 + $0xb8] sm:$0xff] %v5561
    %5594 = vst [vmem:[%s3 + $0xc0] sm:$0xff] %v5562
    %5595 = vst [vmem:[%s3 + $0xc8] sm:$0xff] %v5563
    %5596 = vst [vmem:[%s3 + $0xd0] sm:$0xff] %v5564
    %5597 = vst [vmem:[%s3 + $0xd8] sm:$0xff] %v5565
    %5598 = vst [vmem:[%s3 + $0xe0] sm:$0xff] %v5566
    %5599 = vst [vmem:[%s3 + $0xe8] sm:$0xff] %v5567
    %5600 = vst [vmem:[%s3 + $0xf0] sm:$0xff] %v5568
    %5601 = vst [vmem:[%s3 + $0xf8] sm:$0xff] %v5569
    // Predicated region
    $region18: #{residual_ae_forward.1} parent=1 // pred_check
      _
    $region19: #{residual_ae_forward.1} parent=1 // pred_check_branch
      %5603 = sbr.rel (0) target = $region21
    $region20: #{residual_ae_forward.1} parent=1 // pred_region
      _
    $region21: #{residual_ae_forward.1} parent=1 // pred_fallthru
      _
    // Predicated region
    $region22: #{residual_ae_forward.1} parent=1 // pred_check
      _
    $region23: #{residual_ae_forward.1} parent=1 // pred_check_branch
      %5605 = sbr.rel (0) target = $region25
    $region24: #{residual_ae_forward.1} parent=1 // pred_region
      _
    $region25: #{residual_ae_forward.1} parent=1 // pred_fallthru
      _
    %5606 = vsyncpa [#allocation3], 1

</llo_original>
